<compile_context>
chip_gen: v7x
topology: tpu7x:2x2x1
jax: 0.10.0
libtpu: 0.0.40
codegen_flags: <defaults>
</compile_context>

<pallas_src>
import numpy as np
import jax
import jax.numpy as jnp
from jax import lax
from jax.experimental import pallas as pl
from jax.experimental.pallas import tpu as pltpu

# (H, W, Cin, Cout) for each conv layer's input
_CONV_SHAPES = ((24, 8, 1, 16), (12, 4, 16, 32), (6, 2, 32, 64))


# ---------------------------------------------------------------------------
# Fused Pallas kernel (BT images per grid step, batch packed along sublanes)
# ---------------------------------------------------------------------------

def _dqn_kernel(img_ref, sc_ref,
                B1, cb1, M1, Sc1, Ae1,
                B2, cb2, M2, Sc2, Ae2,
                B3, cb3, M3, Sc3,
                S3, fiw, fib, fsw, fsb, fmw1, fmw2, fmb, fow, fob,
                q_ref):
    f32 = jnp.float32

    def dot(a, b):
        return jnp.dot(a, b, preferred_element_type=f32)

    def conv_relu_hpool(x, B, cb, M, Sc, cout):
        # x: (R, W*Cin) slab, rows = b*H + h.  Vertical taps via XLU sublane
        # roll + VPU boundary mask (mask zeroes row h=0 / h=H-1 of each image,
        # so rolled data never leaks across packed images or wraps).
        rows = x.shape[0]
        x_prev = pltpu.roll(x, 1, axis=0) * M[0]           # row r -> x[r-1]
        x_next = pltpu.roll(x, rows - 1, axis=0) * M[1]    # row r -> x[r+1]
        acc = dot(x_prev, B[0]) + dot(x, B[1]) + dot(x_next, B[2])
        y = jnp.maximum(acc + cb[...], 0.0)                # (R, 128) lane-dense
        # horizontal 2-max: lane roll (XLU) + max (VPU) + one compaction matmul
        y = jnp.maximum(y, pltpu.roll(y, y.shape[1] - cout, axis=1))
        return dot(y, Sc[...])                             # (R, W/2*Cout) = (R, 64)

    def vpool_rows(m):
        # vertical 2-max over adjacent rows; even rows hold the pooled result
        return jnp.maximum(m, pltpu.roll(m, m.shape[0] - 1, axis=0))

    x = img_ref[...]                                                          # (BT*24, 8)
    x = dot(Ae1[...], vpool_rows(conv_relu_hpool(x, B1, cb1, M1, Sc1, 16)))   # (BT*12, 64)
    x = dot(Ae2[...], vpool_rows(conv_relu_hpool(x, B2, cb2, M2, Sc2, 32)))   # (BT*6, 64)
    mv3 = vpool_rows(conv_relu_hpool(x, B3, cb3, M3, Sc3, 64))                # (BT*6, 64)

    # fc_image head: S3[h] selects row 6b+2h (layer-3 pooled spatial row h) for
    # every image b; fiw[h] holds the fc_image columns for torch-NCHW flat
    # index c*3+h.  All dots run at M=BT.
    xi = (dot(dot(S3[0], mv3), fiw[0]) +
          dot(dot(S3[1], mv3), fiw[1]) +
          dot(dot(S3[2], mv3), fiw[2]))
    xi = jnp.maximum(xi + fib[...], 0.0)                                      # (BT, 128)

    # fc_scalar -> ReLU
    s = jnp.maximum(dot(sc_ref[...], fsw[...]) + fsb[...], 0.0)               # (BT, 32)

    # concat + fc_merge -> ReLU (concat realised as split-weight matmul sum)
    mrg = jnp.maximum(dot(xi, fmw1[...]) + dot(s, fmw2[...]) + fmb[...], 0.0)  # (BT, 256)

    # fc_out, padded to a lane-dense (BT, 128) store (first 9 lanes = Q-values)
    q_ref[...] = dot(mrg, fow[...]) + fob[...]


# ---------------------------------------------------------------------------
# One-time weight / selector / mask re-layout (outside the per-call path)
# ---------------------------------------------------------------------------

def _conv_layer_arrays(Kw, bias, H, W, bt, last):
    Kw = np.asarray(Kw, np.float32)        # (Cout, Cin, 3, 3) torch layout
    bias = np.asarray(bias, np.float32)
    Cout, Cin = Kw.shape[0], Kw.shape[1]
    Kt = np.transpose(Kw, (2, 3, 1, 0))    # (ky, kx, Cin, Cout)

    # Block-banded tap matrices: horizontal taps + horizontal zero pad folded in.
    B = np.zeros((3, W * Cin, W * Cout), np.float32)
    for ky in range(3):
        for kx in range(3):
            for w in range(W):
                ws = w + kx - 1
                if 0 <= ws < W:
                    B[ky, ws * Cin:(ws + 1) * Cin,
                      w * Cout:(w + 1) * Cout] = Kt[ky, kx]
    cb = np.tile(bias, W).reshape(1, W * Cout)

    # Per-image vertical boundary masks for the rolled taps (rows = b*H + h).
    R = bt * H
    M = np.ones((2, R, W * Cin), np.float32)
    M[0, ::H, :] = 0.0            # h == 0     -> ky=0 tap reads zero padding
    M[1, H - 1::H, :] = 0.0       # h == H-1   -> ky=2 tap reads zero padding

    # Horizontal pool compaction: picks even width blocks of the rolled max.
    W2 = W // 2
    Sc = np.zeros((W * Cout, W2 * Cout), np.float32)
    for j in range(W2):
        for c in range(Cout):
            Sc[(2 * j) * Cout + c, j * Cout + c] = 1.0

    out = [B, cb, M, Sc]
    if not last:
        # Even-row selector for the vertical pool (rows 2i, 2i+1 never cross
        # an image boundary because H is even).
        Ae = np.zeros((bt * (H // 2), R), np.float32)
        for i in range(bt * (H // 2)):
            Ae[i, 2 * i] = 1.0
        out.append(Ae)
    return out


def prepare_params(p, bt):
    arrs = []
    for li, (H, W, Cin, Cout) in enumerate(_CONV_SHAPES):
        arrs.extend(_conv_layer_arrays(p[f"conv{li + 1}_w"], p[f"conv{li + 1}_b"],
                                       H, W, bt, last=(li == 2)))

    # Head selectors: fold layer-3 vertical-pool extraction + per-h split.
    S3 = np.zeros((3, bt, bt * 6), np.float32)
    for h in range(3):
        for b in range(bt):
            S3[h, b, 6 * b + 2 * h] = 1.0

    WiT = np.asarray(p["fc_image_w"], np.float32).T          # (192, 128); row = c*3+h
    fiw = np.stack([WiT[h::3] for h in range(3)])            # (3, 64, 128)
    fib = np.asarray(p["fc_image_b"], np.float32).reshape(1, 128)
    fsw = np.asarray(p["fc_scalar_w"], np.float32).T         # (3, 32)
    fsb = np.asarray(p["fc_scalar_b"], np.float32).reshape(1, 32)
    Wm = np.asarray(p["fc_merge_w"], np.float32)              # (256, 160)
    fmw1 = Wm[:, :128].T.copy()                               # (128, 256)
    fmw2 = Wm[:, 128:].T.copy()                               # (32, 256)
    fmb = np.asarray(p["fc_merge_b"], np.float32).reshape(1, 256)
    fow = np.zeros((256, 128), np.float32)                    # pad 9 -> 128 lanes
    fow[:, :9] = np.asarray(p["fc_out_w"], np.float32).T
    fob = np.zeros((1, 128), np.float32)
    fob[0, :9] = np.asarray(p["fc_out_b"], np.float32)
    arrs.extend([S3, fiw, fib, fsw, fsb, fmw1, fmw2, fmb, fow, fob])
    return tuple(jnp.asarray(a) for a in arrs)


# ---------------------------------------------------------------------------
# Forward wrapper (trivial glue: reshape, batch pad, final slice/split)
# ---------------------------------------------------------------------------

def dqn_forward(image_nchw, scalar, kparams, bt):
    N = image_nchw.shape[0]
    n_pad = int(pl.cdiv(N, bt)) * bt
    img = image_nchw.reshape(N, 24, 8)                 # Cin = 1
    sc = scalar
    if n_pad != N:
        img = jnp.pad(img, ((0, n_pad - N), (0, 0), (0, 0)))
        sc = jnp.pad(sc, ((0, n_pad - N), (0, 0)))
    img = img.reshape(n_pad * 24, 8)                   # batch packed along sublanes

    def const_spec(a):
        nd = a.ndim
        return pl.BlockSpec(a.shape, lambda b, nd=nd: (0,) * nd)

    in_specs = [pl.BlockSpec((bt * 24, 8), lambda b: (b, 0)),
                pl.BlockSpec((bt, 3), lambda b: (b, 0))]
    in_specs += [const_spec(a) for a in kparams]

    q = pl.pallas_call(
        _dqn_kernel,
        out_shape=jax.ShapeDtypeStruct((n_pad, 128), jnp.float32),
        grid=(n_pad // bt,),
        in_specs=in_specs,
        out_specs=pl.BlockSpec((bt, 128), lambda b: (b, 0)),
        compiler_params=pltpu.CompilerParams(
            dimension_semantics=("parallel",)),
    )(img, sc, *kparams)

    q = q[:N, :9]
    # torch.split(q, [3, 2, 2, 2], dim=1)
    return q[:, 0:3], q[:, 3:5], q[:, 5:7], q[:, 7:9]


# ---------------------------------------------------------------------------
# Pure-JAX reference (mirrors the PyTorch module exactly)
# ---------------------------------------------------------------------------

def dqn_reference(image_nchw, scalar, p):
    N = image_nchw.shape[0]
    x = jnp.transpose(image_nchw, (0, 2, 3, 1))
    for wk, bk in (("conv1_w", "conv1_b"), ("conv2_w", "conv2_b"),
                   ("conv3_w", "conv3_b")):
        w = jnp.transpose(p[wk], (2, 3, 1, 0))            # HWIO
        x = lax.conv_general_dilated(
            x, w, (1, 1), "SAME",
            dimension_numbers=("NHWC", "HWIO", "NHWC")) + p[bk]
        x = jnp.maximum(x, 0.0)
        x = lax.reduce_window(x, -jnp.inf, lax.max,
                              (1, 2, 2, 1), (1, 2, 2, 1), "VALID")
    xflat = jnp.transpose(x, (0, 3, 1, 2)).reshape(N, -1)
    xi = jnp.maximum(xflat @ p["fc_image_w"].T + p["fc_image_b"], 0.0)
    s = jnp.maximum(scalar @ p["fc_scalar_w"].T + p["fc_scalar_b"], 0.0)
    merged = jnp.concatenate([xi, s], axis=1)
    m = jnp.maximum(merged @ p["fc_merge_w"].T + p["fc_merge_b"], 0.0)
    q = m @ p["fc_out_w"].T + p["fc_out_b"]
    return q[:, 0:3], q[:, 3:5], q[:, 5:7], q[:, 7:9]


# ---------------------------------------------------------------------------
# Deterministic parameter init (synthetic; shapes from DQN.__init__)
# ---------------------------------------------------------------------------

def init_params(key):
    ks = jax.random.split(key, 14)

    def w(k, shape, fan_in):
        return jax.random.normal(k, shape, jnp.float32) / jnp.sqrt(float(fan_in))

    def b(k, shape):
        return 0.01 * jax.random.normal(k, shape, jnp.float32)

    return {
        "conv1_w": w(ks[0], (16, 1, 3, 3), 1 * 9),   "conv1_b": b(ks[1], (16,)),
        "conv2_w": w(ks[2], (32, 16, 3, 3), 16 * 9), "conv2_b": b(ks[3], (32,)),
        "conv3_w": w(ks[4], (64, 32, 3, 3), 32 * 9), "conv3_b": b(ks[5], (64,)),
        "fc_image_w": w(ks[6], (128, 192), 192),     "fc_image_b": b(ks[7], (128,)),
        "fc_scalar_w": w(ks[8], (32, 3), 3),         "fc_scalar_b": b(ks[9], (32,)),
        "fc_merge_w": w(ks[10], (256, 160), 160),    "fc_merge_b": b(ks[11], (256,)),
        "fc_out_w": w(ks[12], (9, 256), 256),        "fc_out_b": b(ks[13], (9,)),
    }


if __name__ == "__main__":
    key = jax.random.PRNGKey(0)
    k_img, k_sc, k_par = jax.random.split(key, 3)

    # image must be (N, 1, 24, 8) so that 3x (conv same + pool/2) -> (64, 3, 1)
    N, BT = 16, 8                         # grid = 2 steps -> both v7x TCs busy
    image = jax.random.normal(k_img, (N, 1, 24, 8), jnp.float32)
    scalar = jax.random.normal(k_sc, (N, 3), jnp.float32)
    params = init_params(k_par)

    kparams = prepare_params(params, BT)          # one-time weight re-layout
    fwd = jax.jit(dqn_forward, static_argnums=(3,))
    outs = jax.block_until_ready(fwd(image, scalar, kparams, BT))

    refs = dqn_reference(image, scalar, params)
    for o, r in zip(outs, refs):
        assert o.shape == r.shape, (o.shape, r.shape)
        assert jnp.allclose(o, r, atol=1e-3, rtol=1e-3), "mismatch vs reference"

    print("KERNEL_OK")
</pallas_src>

<mosaic_0001>
module attributes {stable_mosaic.version = 11 : i64} {
  func.func @_dqn_kernel(%arg0: i32, %arg1: memref<192x8xf32, #tpu.memory_space<vmem>>, %arg2: memref<8x3xf32, #tpu.memory_space<vmem>>, %arg3: memref<3x8x128xf32, #tpu.memory_space<vmem>>, %arg4: memref<1x128xf32, #tpu.memory_space<vmem>>, %arg5: memref<2x192x8xf32, #tpu.memory_space<vmem>>, %arg6: memref<128x64xf32, #tpu.memory_space<vmem>>, %arg7: memref<96x192xf32, #tpu.memory_space<vmem>>, %arg8: memref<3x64x128xf32, #tpu.memory_space<vmem>>, %arg9: memref<1x128xf32, #tpu.memory_space<vmem>>, %arg10: memref<2x96x64xf32, #tpu.memory_space<vmem>>, %arg11: memref<128x64xf32, #tpu.memory_space<vmem>>, %arg12: memref<48x96xf32, #tpu.memory_space<vmem>>, %arg13: memref<3x64x128xf32, #tpu.memory_space<vmem>>, %arg14: memref<1x128xf32, #tpu.memory_space<vmem>>, %arg15: memref<2x48x64xf32, #tpu.memory_space<vmem>>, %arg16: memref<128x64xf32, #tpu.memory_space<vmem>>, %arg17: memref<3x8x48xf32, #tpu.memory_space<vmem>>, %arg18: memref<3x64x128xf32, #tpu.memory_space<vmem>>, %arg19: memref<1x128xf32, #tpu.memory_space<vmem>>, %arg20: memref<3x32xf32, #tpu.memory_space<vmem>>, %arg21: memref<1x32xf32, #tpu.memory_space<vmem>>, %arg22: memref<128x256xf32, #tpu.memory_space<vmem>>, %arg23: memref<32x256xf32, #tpu.memory_space<vmem>>, %arg24: memref<1x256xf32, #tpu.memory_space<vmem>>, %arg25: memref<256x128xf32, #tpu.memory_space<vmem>>, %arg26: memref<1x128xf32, #tpu.memory_space<vmem>>, %arg27: memref<8x128xf32, #tpu.memory_space<vmem>>) attributes {dimension_semantics = [#tpu.dimension_semantics<parallel>], iteration_bounds = array<i64: 2>, scalar_prefetch = 0 : i64, scratch_operands = 0 : i64, tpu.core_type = #tpu.core_type<tc>, window_params = [{transform_indices = @transform_0, window_bounds = array<i64: 192, 8>}, {transform_indices = @transform_1, window_bounds = array<i64: 8, 3>}, {pipeline_mode = #tpu.pipeline_mode<synchronous>, transform_indices = @transform_2, window_bounds = array<i64: 3, 8, 128>}, {pipeline_mode = #tpu.pipeline_mode<synchronous>, transform_indices = @transform_3, window_bounds = array<i64: 1, 128>}, {pipeline_mode = #tpu.pipeline_mode<synchronous>, transform_indices = @transform_4, window_bounds = array<i64: 2, 192, 8>}, {pipeline_mode = #tpu.pipeline_mode<synchronous>, transform_indices = @transform_5, window_bounds = array<i64: 128, 64>}, {pipeline_mode = #tpu.pipeline_mode<synchronous>, transform_indices = @transform_6, window_bounds = array<i64: 96, 192>}, {pipeline_mode = #tpu.pipeline_mode<synchronous>, transform_indices = @transform_7, window_bounds = array<i64: 3, 64, 128>}, {pipeline_mode = #tpu.pipeline_mode<synchronous>, transform_indices = @transform_8, window_bounds = array<i64: 1, 128>}, {pipeline_mode = #tpu.pipeline_mode<synchronous>, transform_indices = @transform_9, window_bounds = array<i64: 2, 96, 64>}, {pipeline_mode = #tpu.pipeline_mode<synchronous>, transform_indices = @transform_10, window_bounds = array<i64: 128, 64>}, {pipeline_mode = #tpu.pipeline_mode<synchronous>, transform_indices = @transform_11, window_bounds = array<i64: 48, 96>}, {pipeline_mode = #tpu.pipeline_mode<synchronous>, transform_indices = @transform_12, window_bounds = array<i64: 3, 64, 128>}, {pipeline_mode = #tpu.pipeline_mode<synchronous>, transform_indices = @transform_13, window_bounds = array<i64: 1, 128>}, {pipeline_mode = #tpu.pipeline_mode<synchronous>, transform_indices = @transform_14, window_bounds = array<i64: 2, 48, 64>}, {pipeline_mode = #tpu.pipeline_mode<synchronous>, transform_indices = @transform_15, window_bounds = array<i64: 128, 64>}, {pipeline_mode = #tpu.pipeline_mode<synchronous>, transform_indices = @transform_16, window_bounds = array<i64: 3, 8, 48>}, {pipeline_mode = #tpu.pipeline_mode<synchronous>, transform_indices = @transform_17, window_bounds = array<i64: 3, 64, 128>}, {pipeline_mode = #tpu.pipeline_mode<synchronous>, transform_indices = @transform_18, window_bounds = array<i64: 1, 128>}, {pipeline_mode = #tpu.pipeline_mode<synchronous>, transform_indices = @transform_19, window_bounds = array<i64: 3, 32>}, {pipeline_mode = #tpu.pipeline_mode<synchronous>, transform_indices = @transform_20, window_bounds = array<i64: 1, 32>}, {pipeline_mode = #tpu.pipeline_mode<synchronous>, transform_indices = @transform_21, window_bounds = array<i64: 128, 256>}, {pipeline_mode = #tpu.pipeline_mode<synchronous>, transform_indices = @transform_22, window_bounds = array<i64: 32, 256>}, {pipeline_mode = #tpu.pipeline_mode<synchronous>, transform_indices = @transform_23, window_bounds = array<i64: 1, 256>}, {pipeline_mode = #tpu.pipeline_mode<synchronous>, transform_indices = @transform_24, window_bounds = array<i64: 256, 128>}, {pipeline_mode = #tpu.pipeline_mode<synchronous>, transform_indices = @transform_25, window_bounds = array<i64: 1, 128>}, {transform_indices = @transform_26, window_bounds = array<i64: 8, 128>}]} {
    %c0 = arith.constant 0 : index
    %c0_0 = arith.constant 0 : index
    %0 = vector.load %arg1[%c0, %c0_0] : memref<192x8xf32, #tpu.memory_space<vmem>>, vector<192x8xf32>
    %c0_1 = arith.constant 0 : index
    %c0_2 = arith.constant 0 : index
    %1 = vector.load %arg7[%c0_1, %c0_2] : memref<96x192xf32, #tpu.memory_space<vmem>>, vector<96x192xf32>
    %c1_i32 = arith.constant 1 : i32
    %2 = tpu.dynamic_rotate %0 by %c1_i32 dim 0 : vector<192x8xf32>, i32 -> vector<192x8xf32>
    %c0_3 = arith.constant 0 : index
    %c0_4 = arith.constant 0 : index
    %c0_5 = arith.constant 0 : index
    %3 = vector.load %arg5[%c0_3, %c0_4, %c0_5] : memref<2x192x8xf32, #tpu.memory_space<vmem>>, vector<1x192x8xf32>
    %4 = vector.shape_cast %3 : vector<1x192x8xf32> to vector<192x8xf32>
    %5 = arith.mulf %2, %4 : vector<192x8xf32>
    %c191_i32 = arith.constant 191 : i32
    %6 = tpu.dynamic_rotate %0 by %c191_i32 dim 0 : vector<192x8xf32>, i32 -> vector<192x8xf32>
    %c1 = arith.constant 1 : index
    %c0_6 = arith.constant 0 : index
    %c0_7 = arith.constant 0 : index
    %7 = vector.load %arg5[%c1, %c0_6, %c0_7] : memref<2x192x8xf32, #tpu.memory_space<vmem>>, vector<1x192x8xf32>
    %8 = vector.shape_cast %7 : vector<1x192x8xf32> to vector<192x8xf32>
    %9 = arith.mulf %6, %8 : vector<192x8xf32>
    %c0_8 = arith.constant 0 : index
    %c0_9 = arith.constant 0 : index
    %c0_10 = arith.constant 0 : index
    %10 = vector.load %arg3[%c0_8, %c0_9, %c0_10] : memref<3x8x128xf32, #tpu.memory_space<vmem>>, vector<1x8x128xf32>
    %11 = vector.shape_cast %10 : vector<1x8x128xf32> to vector<8x128xf32>
    %cst = arith.constant dense<0.000000e+00> : vector<192x128xf32>
    %12 = tpu.matmul %5, %11, %cst {dimension_numbers = #tpu.dot_dimension_numbers<[1], [0], [0], [1], [0, 0, 1, 1], [], []>} : vector<192x8xf32>, vector<8x128xf32>, vector<192x128xf32> -> vector<192x128xf32>
    %c1_11 = arith.constant 1 : index
    %c0_12 = arith.constant 0 : index
    %c0_13 = arith.constant 0 : index
    %13 = vector.load %arg3[%c1_11, %c0_12, %c0_13] : memref<3x8x128xf32, #tpu.memory_space<vmem>>, vector<1x8x128xf32>
    %14 = vector.shape_cast %13 : vector<1x8x128xf32> to vector<8x128xf32>
    %cst_14 = arith.constant dense<0.000000e+00> : vector<192x128xf32>
    %15 = tpu.matmul %0, %14, %cst_14 {dimension_numbers = #tpu.dot_dimension_numbers<[1], [0], [0], [1], [0, 0, 1, 1], [], []>} : vector<192x8xf32>, vector<8x128xf32>, vector<192x128xf32> -> vector<192x128xf32>
    %16 = arith.addf %12, %15 : vector<192x128xf32>
    %c2 = arith.constant 2 : index
    %c0_15 = arith.constant 0 : index
    %c0_16 = arith.constant 0 : index
    %17 = vector.load %arg3[%c2, %c0_15, %c0_16] : memref<3x8x128xf32, #tpu.memory_space<vmem>>, vector<1x8x128xf32>
    %18 = vector.shape_cast %17 : vector<1x8x128xf32> to vector<8x128xf32>
    %cst_17 = arith.constant dense<0.000000e+00> : vector<192x128xf32>
    %19 = tpu.matmul %9, %18, %cst_17 {dimension_numbers = #tpu.dot_dimension_numbers<[1], [0], [0], [1], [0, 0, 1, 1], [], []>} : vector<192x8xf32>, vector<8x128xf32>, vector<192x128xf32> -> vector<192x128xf32>
    %20 = arith.addf %16, %19 : vector<192x128xf32>
    %c0_18 = arith.constant 0 : index
    %c0_19 = arith.constant 0 : index
    %21 = vector.load %arg4[%c0_18, %c0_19] : memref<1x128xf32, #tpu.memory_space<vmem>>, vector<1x128xf32>
    %22 = vector.broadcast %21 : vector<1x128xf32> to vector<192x128xf32>
    %23 = arith.addf %20, %22 : vector<192x128xf32>
    %cst_20 = arith.constant 0.000000e+00 : f32
    %24 = vector.broadcast %cst_20 : f32 to vector<192x128xf32>
    %25 = arith.maximumf %23, %24 : vector<192x128xf32>
    %c112_i32 = arith.constant 112 : i32
    %26 = tpu.dynamic_rotate %25 by %c112_i32 dim 1 : vector<192x128xf32>, i32 -> vector<192x128xf32>
    %27 = arith.maximumf %25, %26 : vector<192x128xf32>
    %c0_21 = arith.constant 0 : index
    %c0_22 = arith.constant 0 : index
    %28 = vector.load %arg6[%c0_21, %c0_22] : memref<128x64xf32, #tpu.memory_space<vmem>>, vector<128x64xf32>
    %cst_23 = arith.constant dense<0.000000e+00> : vector<192x64xf32>
    %29 = tpu.matmul %27, %28, %cst_23 {dimension_numbers = #tpu.dot_dimension_numbers<[1], [0], [0], [1], [0, 0, 1, 1], [], []>} : vector<192x128xf32>, vector<128x64xf32>, vector<192x64xf32> -> vector<192x64xf32>
    %c191_i32_24 = arith.constant 191 : i32
    %30 = tpu.dynamic_rotate %29 by %c191_i32_24 dim 0 : vector<192x64xf32>, i32 -> vector<192x64xf32>
    %31 = arith.maximumf %29, %30 : vector<192x64xf32>
    %cst_25 = arith.constant dense<0.000000e+00> : vector<96x64xf32>
    %32 = tpu.matmul %1, %31, %cst_25 {dimension_numbers = #tpu.dot_dimension_numbers<[1], [0], [0], [1], [0, 0, 1, 1], [], []>} : vector<96x192xf32>, vector<192x64xf32>, vector<96x64xf32> -> vector<96x64xf32>
    %c0_26 = arith.constant 0 : index
    %c0_27 = arith.constant 0 : index
    %33 = vector.load %arg12[%c0_26, %c0_27] : memref<48x96xf32, #tpu.memory_space<vmem>>, vector<48x96xf32>
    %c1_i32_28 = arith.constant 1 : i32
    %34 = tpu.dynamic_rotate %32 by %c1_i32_28 dim 0 : vector<96x64xf32>, i32 -> vector<96x64xf32>
    %c0_29 = arith.constant 0 : index
    %c0_30 = arith.constant 0 : index
    %c0_31 = arith.constant 0 : index
    %35 = vector.load %arg10[%c0_29, %c0_30, %c0_31] : memref<2x96x64xf32, #tpu.memory_space<vmem>>, vector<1x96x64xf32>
    %36 = vector.shape_cast %35 : vector<1x96x64xf32> to vector<96x64xf32>
    %37 = arith.mulf %34, %36 : vector<96x64xf32>
    %c95_i32 = arith.constant 95 : i32
    %38 = tpu.dynamic_rotate %32 by %c95_i32 dim 0 : vector<96x64xf32>, i32 -> vector<96x64xf32>
    %c1_32 = arith.constant 1 : index
    %c0_33 = arith.constant 0 : index
    %c0_34 = arith.constant 0 : index
    %39 = vector.load %arg10[%c1_32, %c0_33, %c0_34] : memref<2x96x64xf32, #tpu.memory_space<vmem>>, vector<1x96x64xf32>
    %40 = vector.shape_cast %39 : vector<1x96x64xf32> to vector<96x64xf32>
    %41 = arith.mulf %38, %40 : vector<96x64xf32>
    %c0_35 = arith.constant 0 : index
    %c0_36 = arith.constant 0 : index
    %c0_37 = arith.constant 0 : index
    %42 = vector.load %arg8[%c0_35, %c0_36, %c0_37] : memref<3x64x128xf32, #tpu.memory_space<vmem>>, vector<1x64x128xf32>
    %43 = vector.shape_cast %42 : vector<1x64x128xf32> to vector<64x128xf32>
    %cst_38 = arith.constant dense<0.000000e+00> : vector<96x128xf32>
    %44 = tpu.matmul %37, %43, %cst_38 {dimension_numbers = #tpu.dot_dimension_numbers<[1], [0], [0], [1], [0, 0, 1, 1], [], []>} : vector<96x64xf32>, vector<64x128xf32>, vector<96x128xf32> -> vector<96x128xf32>
    %c1_39 = arith.constant 1 : index
    %c0_40 = arith.constant 0 : index
    %c0_41 = arith.constant 0 : index
    %45 = vector.load %arg8[%c1_39, %c0_40, %c0_41] : memref<3x64x128xf32, #tpu.memory_space<vmem>>, vector<1x64x128xf32>
    %46 = vector.shape_cast %45 : vector<1x64x128xf32> to vector<64x128xf32>
    %cst_42 = arith.constant dense<0.000000e+00> : vector<96x128xf32>
    %47 = tpu.matmul %32, %46, %cst_42 {dimension_numbers = #tpu.dot_dimension_numbers<[1], [0], [0], [1], [0, 0, 1, 1], [], []>} : vector<96x64xf32>, vector<64x128xf32>, vector<96x128xf32> -> vector<96x128xf32>
    %48 = arith.addf %44, %47 : vector<96x128xf32>
    %c2_43 = arith.constant 2 : index
    %c0_44 = arith.constant 0 : index
    %c0_45 = arith.constant 0 : index
    %49 = vector.load %arg8[%c2_43, %c0_44, %c0_45] : memref<3x64x128xf32, #tpu.memory_space<vmem>>, vector<1x64x128xf32>
    %50 = vector.shape_cast %49 : vector<1x64x128xf32> to vector<64x128xf32>
    %cst_46 = arith.constant dense<0.000000e+00> : vector<96x128xf32>
    %51 = tpu.matmul %41, %50, %cst_46 {dimension_numbers = #tpu.dot_dimension_numbers<[1], [0], [0], [1], [0, 0, 1, 1], [], []>} : vector<96x64xf32>, vector<64x128xf32>, vector<96x128xf32> -> vector<96x128xf32>
    %52 = arith.addf %48, %51 : vector<96x128xf32>
    %c0_47 = arith.constant 0 : index
    %c0_48 = arith.constant 0 : index
    %53 = vector.load %arg9[%c0_47, %c0_48] : memref<1x128xf32, #tpu.memory_space<vmem>>, vector<1x128xf32>
    %54 = vector.broadcast %53 : vector<1x128xf32> to vector<96x128xf32>
    %55 = arith.addf %52, %54 : vector<96x128xf32>
    %cst_49 = arith.constant 0.000000e+00 : f32
    %56 = vector.broadcast %cst_49 : f32 to vector<96x128xf32>
    %57 = arith.maximumf %55, %56 : vector<96x128xf32>
    %c96_i32 = arith.constant 96 : i32
    %58 = tpu.dynamic_rotate %57 by %c96_i32 dim 1 : vector<96x128xf32>, i32 -> vector<96x128xf32>
    %59 = arith.maximumf %57, %58 : vector<96x128xf32>
    %c0_50 = arith.constant 0 : index
    %c0_51 = arith.constant 0 : index
    %60 = vector.load %arg11[%c0_50, %c0_51] : memref<128x64xf32, #tpu.memory_space<vmem>>, vector<128x64xf32>
    %cst_52 = arith.constant dense<0.000000e+00> : vector<96x64xf32>
    %61 = tpu.matmul %59, %60, %cst_52 {dimension_numbers = #tpu.dot_dimension_numbers<[1], [0], [0], [1], [0, 0, 1, 1], [], []>} : vector<96x128xf32>, vector<128x64xf32>, vector<96x64xf32> -> vector<96x64xf32>
    %c95_i32_53 = arith.constant 95 : i32
    %62 = tpu.dynamic_rotate %61 by %c95_i32_53 dim 0 : vector<96x64xf32>, i32 -> vector<96x64xf32>
    %63 = arith.maximumf %61, %62 : vector<96x64xf32>
    %cst_54 = arith.constant dense<0.000000e+00> : vector<48x64xf32>
    %64 = tpu.matmul %33, %63, %cst_54 {dimension_numbers = #tpu.dot_dimension_numbers<[1], [0], [0], [1], [0, 0, 1, 1], [], []>} : vector<48x96xf32>, vector<96x64xf32>, vector<48x64xf32> -> vector<48x64xf32>
    %c1_i32_55 = arith.constant 1 : i32
    %65 = tpu.dynamic_rotate %64 by %c1_i32_55 dim 0 : vector<48x64xf32>, i32 -> vector<48x64xf32>
    %c0_56 = arith.constant 0 : index
    %c0_57 = arith.constant 0 : index
    %c0_58 = arith.constant 0 : index
    %66 = vector.load %arg15[%c0_56, %c0_57, %c0_58] : memref<2x48x64xf32, #tpu.memory_space<vmem>>, vector<1x48x64xf32>
    %67 = vector.shape_cast %66 : vector<1x48x64xf32> to vector<48x64xf32>
    %68 = arith.mulf %65, %67 : vector<48x64xf32>
    %c47_i32 = arith.constant 47 : i32
    %69 = tpu.dynamic_rotate %64 by %c47_i32 dim 0 : vector<48x64xf32>, i32 -> vector<48x64xf32>
    %c1_59 = arith.constant 1 : index
    %c0_60 = arith.constant 0 : index
    %c0_61 = arith.constant 0 : index
    %70 = vector.load %arg15[%c1_59, %c0_60, %c0_61] : memref<2x48x64xf32, #tpu.memory_space<vmem>>, vector<1x48x64xf32>
    %71 = vector.shape_cast %70 : vector<1x48x64xf32> to vector<48x64xf32>
    %72 = arith.mulf %69, %71 : vector<48x64xf32>
    %c0_62 = arith.constant 0 : index
    %c0_63 = arith.constant 0 : index
    %c0_64 = arith.constant 0 : index
    %73 = vector.load %arg13[%c0_62, %c0_63, %c0_64] : memref<3x64x128xf32, #tpu.memory_space<vmem>>, vector<1x64x128xf32>
    %74 = vector.shape_cast %73 : vector<1x64x128xf32> to vector<64x128xf32>
    %cst_65 = arith.constant dense<0.000000e+00> : vector<48x128xf32>
    %75 = tpu.matmul %68, %74, %cst_65 {dimension_numbers = #tpu.dot_dimension_numbers<[1], [0], [0], [1], [0, 0, 1, 1], [], []>} : vector<48x64xf32>, vector<64x128xf32>, vector<48x128xf32> -> vector<48x128xf32>
    %c1_66 = arith.constant 1 : index
    %c0_67 = arith.constant 0 : index
    %c0_68 = arith.constant 0 : index
    %76 = vector.load %arg13[%c1_66, %c0_67, %c0_68] : memref<3x64x128xf32, #tpu.memory_space<vmem>>, vector<1x64x128xf32>
    %77 = vector.shape_cast %76 : vector<1x64x128xf32> to vector<64x128xf32>
    %cst_69 = arith.constant dense<0.000000e+00> : vector<48x128xf32>
    %78 = tpu.matmul %64, %77, %cst_69 {dimension_numbers = #tpu.dot_dimension_numbers<[1], [0], [0], [1], [0, 0, 1, 1], [], []>} : vector<48x64xf32>, vector<64x128xf32>, vector<48x128xf32> -> vector<48x128xf32>
    %79 = arith.addf %75, %78 : vector<48x128xf32>
    %c2_70 = arith.constant 2 : index
    %c0_71 = arith.constant 0 : index
    %c0_72 = arith.constant 0 : index
    %80 = vector.load %arg13[%c2_70, %c0_71, %c0_72] : memref<3x64x128xf32, #tpu.memory_space<vmem>>, vector<1x64x128xf32>
    %81 = vector.shape_cast %80 : vector<1x64x128xf32> to vector<64x128xf32>
    %cst_73 = arith.constant dense<0.000000e+00> : vector<48x128xf32>
    %82 = tpu.matmul %72, %81, %cst_73 {dimension_numbers = #tpu.dot_dimension_numbers<[1], [0], [0], [1], [0, 0, 1, 1], [], []>} : vector<48x64xf32>, vector<64x128xf32>, vector<48x128xf32> -> vector<48x128xf32>
    %83 = arith.addf %79, %82 : vector<48x128xf32>
    %c0_74 = arith.constant 0 : index
    %c0_75 = arith.constant 0 : index
    %84 = vector.load %arg14[%c0_74, %c0_75] : memref<1x128xf32, #tpu.memory_space<vmem>>, vector<1x128xf32>
    %85 = vector.broadcast %84 : vector<1x128xf32> to vector<48x128xf32>
    %86 = arith.addf %83, %85 : vector<48x128xf32>
    %cst_76 = arith.constant 0.000000e+00 : f32
    %87 = vector.broadcast %cst_76 : f32 to vector<48x128xf32>
    %88 = arith.maximumf %86, %87 : vector<48x128xf32>
    %c64_i32 = arith.constant 64 : i32
    %89 = tpu.dynamic_rotate %88 by %c64_i32 dim 1 : vector<48x128xf32>, i32 -> vector<48x128xf32>
    %90 = arith.maximumf %88, %89 : vector<48x128xf32>
    %c0_77 = arith.constant 0 : index
    %c0_78 = arith.constant 0 : index
    %91 = vector.load %arg16[%c0_77, %c0_78] : memref<128x64xf32, #tpu.memory_space<vmem>>, vector<128x64xf32>
    %cst_79 = arith.constant dense<0.000000e+00> : vector<48x64xf32>
    %92 = tpu.matmul %90, %91, %cst_79 {dimension_numbers = #tpu.dot_dimension_numbers<[1], [0], [0], [1], [0, 0, 1, 1], [], []>} : vector<48x128xf32>, vector<128x64xf32>, vector<48x64xf32> -> vector<48x64xf32>
    %c47_i32_80 = arith.constant 47 : i32
    %93 = tpu.dynamic_rotate %92 by %c47_i32_80 dim 0 : vector<48x64xf32>, i32 -> vector<48x64xf32>
    %94 = arith.maximumf %92, %93 : vector<48x64xf32>
    %c0_81 = arith.constant 0 : index
    %c0_82 = arith.constant 0 : index
    %c0_83 = arith.constant 0 : index
    %95 = vector.load %arg17[%c0_81, %c0_82, %c0_83] : memref<3x8x48xf32, #tpu.memory_space<vmem>>, vector<1x8x48xf32>
    %96 = vector.shape_cast %95 : vector<1x8x48xf32> to vector<8x48xf32>
    %cst_84 = arith.constant dense<0.000000e+00> : vector<8x64xf32>
    %97 = tpu.matmul %96, %94, %cst_84 {dimension_numbers = #tpu.dot_dimension_numbers<[1], [0], [0], [1], [0, 0, 1, 1], [], []>} : vector<8x48xf32>, vector<48x64xf32>, vector<8x64xf32> -> vector<8x64xf32>
    %c0_85 = arith.constant 0 : index
    %c0_86 = arith.constant 0 : index
    %c0_87 = arith.constant 0 : index
    %98 = vector.load %arg18[%c0_85, %c0_86, %c0_87] : memref<3x64x128xf32, #tpu.memory_space<vmem>>, vector<1x64x128xf32>
    %99 = vector.shape_cast %98 : vector<1x64x128xf32> to vector<64x128xf32>
    %cst_88 = arith.constant dense<0.000000e+00> : vector<8x128xf32>
    %100 = tpu.matmul %97, %99, %cst_88 {dimension_numbers = #tpu.dot_dimension_numbers<[1], [0], [0], [1], [0, 0, 1, 1], [], []>} : vector<8x64xf32>, vector<64x128xf32>, vector<8x128xf32> -> vector<8x128xf32>
    %c1_89 = arith.constant 1 : index
    %c0_90 = arith.constant 0 : index
    %c0_91 = arith.constant 0 : index
    %101 = vector.load %arg17[%c1_89, %c0_90, %c0_91] : memref<3x8x48xf32, #tpu.memory_space<vmem>>, vector<1x8x48xf32>
    %102 = vector.shape_cast %101 : vector<1x8x48xf32> to vector<8x48xf32>
    %cst_92 = arith.constant dense<0.000000e+00> : vector<8x64xf32>
    %103 = tpu.matmul %102, %94, %cst_92 {dimension_numbers = #tpu.dot_dimension_numbers<[1], [0], [0], [1], [0, 0, 1, 1], [], []>} : vector<8x48xf32>, vector<48x64xf32>, vector<8x64xf32> -> vector<8x64xf32>
    %c1_93 = arith.constant 1 : index
    %c0_94 = arith.constant 0 : index
    %c0_95 = arith.constant 0 : index
    %104 = vector.load %arg18[%c1_93, %c0_94, %c0_95] : memref<3x64x128xf32, #tpu.memory_space<vmem>>, vector<1x64x128xf32>
    %105 = vector.shape_cast %104 : vector<1x64x128xf32> to vector<64x128xf32>
    %cst_96 = arith.constant dense<0.000000e+00> : vector<8x128xf32>
    %106 = tpu.matmul %103, %105, %cst_96 {dimension_numbers = #tpu.dot_dimension_numbers<[1], [0], [0], [1], [0, 0, 1, 1], [], []>} : vector<8x64xf32>, vector<64x128xf32>, vector<8x128xf32> -> vector<8x128xf32>
    %107 = arith.addf %100, %106 : vector<8x128xf32>
    %c2_97 = arith.constant 2 : index
    %c0_98 = arith.constant 0 : index
    %c0_99 = arith.constant 0 : index
    %108 = vector.load %arg17[%c2_97, %c0_98, %c0_99] : memref<3x8x48xf32, #tpu.memory_space<vmem>>, vector<1x8x48xf32>
    %109 = vector.shape_cast %108 : vector<1x8x48xf32> to vector<8x48xf32>
    %cst_100 = arith.constant dense<0.000000e+00> : vector<8x64xf32>
    %110 = tpu.matmul %109, %94, %cst_100 {dimension_numbers = #tpu.dot_dimension_numbers<[1], [0], [0], [1], [0, 0, 1, 1], [], []>} : vector<8x48xf32>, vector<48x64xf32>, vector<8x64xf32> -> vector<8x64xf32>
    %c2_101 = arith.constant 2 : index
    %c0_102 = arith.constant 0 : index
    %c0_103 = arith.constant 0 : index
    %111 = vector.load %arg18[%c2_101, %c0_102, %c0_103] : memref<3x64x128xf32, #tpu.memory_space<vmem>>, vector<1x64x128xf32>
    %112 = vector.shape_cast %111 : vector<1x64x128xf32> to vector<64x128xf32>
    %cst_104 = arith.constant dense<0.000000e+00> : vector<8x128xf32>
    %113 = tpu.matmul %110, %112, %cst_104 {dimension_numbers = #tpu.dot_dimension_numbers<[1], [0], [0], [1], [0, 0, 1, 1], [], []>} : vector<8x64xf32>, vector<64x128xf32>, vector<8x128xf32> -> vector<8x128xf32>
    %114 = arith.addf %107, %113 : vector<8x128xf32>
    %c0_105 = arith.constant 0 : index
    %c0_106 = arith.constant 0 : index
    %115 = vector.load %arg19[%c0_105, %c0_106] : memref<1x128xf32, #tpu.memory_space<vmem>>, vector<1x128xf32>
    %116 = vector.broadcast %115 : vector<1x128xf32> to vector<8x128xf32>
    %117 = arith.addf %114, %116 : vector<8x128xf32>
    %cst_107 = arith.constant 0.000000e+00 : f32
    %118 = vector.broadcast %cst_107 : f32 to vector<8x128xf32>
    %119 = arith.maximumf %117, %118 : vector<8x128xf32>
    %c0_108 = arith.constant 0 : index
    %c0_109 = arith.constant 0 : index
    %120 = vector.load %arg2[%c0_108, %c0_109] : memref<8x3xf32, #tpu.memory_space<vmem>>, vector<8x3xf32>
    %c0_110 = arith.constant 0 : index
    %c0_111 = arith.constant 0 : index
    %121 = vector.load %arg20[%c0_110, %c0_111] : memref<3x32xf32, #tpu.memory_space<vmem>>, vector<3x32xf32>
    %cst_112 = arith.constant dense<0.000000e+00> : vector<8x32xf32>
    %122 = tpu.matmul %120, %121, %cst_112 {dimension_numbers = #tpu.dot_dimension_numbers<[1], [0], [0], [1], [0, 0, 1, 1], [], []>} : vector<8x3xf32>, vector<3x32xf32>, vector<8x32xf32> -> vector<8x32xf32>
    %c0_113 = arith.constant 0 : index
    %c0_114 = arith.constant 0 : index
    %123 = vector.load %arg21[%c0_113, %c0_114] : memref<1x32xf32, #tpu.memory_space<vmem>>, vector<1x32xf32>
    %124 = vector.broadcast %123 : vector<1x32xf32> to vector<8x32xf32>
    %125 = arith.addf %122, %124 : vector<8x32xf32>
    %cst_115 = arith.constant 0.000000e+00 : f32
    %126 = vector.broadcast %cst_115 : f32 to vector<8x32xf32>
    %127 = arith.maximumf %125, %126 : vector<8x32xf32>
    %c0_116 = arith.constant 0 : index
    %c0_117 = arith.constant 0 : index
    %128 = vector.load %arg22[%c0_116, %c0_117] : memref<128x256xf32, #tpu.memory_space<vmem>>, vector<128x256xf32>
    %cst_118 = arith.constant dense<0.000000e+00> : vector<8x256xf32>
    %129 = tpu.matmul %119, %128, %cst_118 {dimension_numbers = #tpu.dot_dimension_numbers<[1], [0], [0], [1], [0, 0, 1, 1], [], []>} : vector<8x128xf32>, vector<128x256xf32>, vector<8x256xf32> -> vector<8x256xf32>
    %c0_119 = arith.constant 0 : index
    %c0_120 = arith.constant 0 : index
    %130 = vector.load %arg23[%c0_119, %c0_120] : memref<32x256xf32, #tpu.memory_space<vmem>>, vector<32x256xf32>
    %cst_121 = arith.constant dense<0.000000e+00> : vector<8x256xf32>
    %131 = tpu.matmul %127, %130, %cst_121 {dimension_numbers = #tpu.dot_dimension_numbers<[1], [0], [0], [1], [0, 0, 1, 1], [], []>} : vector<8x32xf32>, vector<32x256xf32>, vector<8x256xf32> -> vector<8x256xf32>
    %132 = arith.addf %129, %131 : vector<8x256xf32>
    %c0_122 = arith.constant 0 : index
    %c0_123 = arith.constant 0 : index
    %133 = vector.load %arg24[%c0_122, %c0_123] : memref<1x256xf32, #tpu.memory_space<vmem>>, vector<1x256xf32>
    %134 = vector.broadcast %133 : vector<1x256xf32> to vector<8x256xf32>
    %135 = arith.addf %132, %134 : vector<8x256xf32>
    %cst_124 = arith.constant 0.000000e+00 : f32
    %136 = vector.broadcast %cst_124 : f32 to vector<8x256xf32>
    %137 = arith.maximumf %135, %136 : vector<8x256xf32>
    %c0_125 = arith.constant 0 : index
    %c0_126 = arith.constant 0 : index
    %138 = vector.load %arg25[%c0_125, %c0_126] : memref<256x128xf32, #tpu.memory_space<vmem>>, vector<256x128xf32>
    %cst_127 = arith.constant dense<0.000000e+00> : vector<8x128xf32>
    %139 = tpu.matmul %137, %138, %cst_127 {dimension_numbers = #tpu.dot_dimension_numbers<[1], [0], [0], [1], [0, 0, 1, 1], [], []>} : vector<8x256xf32>, vector<256x128xf32>, vector<8x128xf32> -> vector<8x128xf32>
    %c0_128 = arith.constant 0 : index
    %c0_129 = arith.constant 0 : index
    %140 = vector.load %arg26[%c0_128, %c0_129] : memref<1x128xf32, #tpu.memory_space<vmem>>, vector<1x128xf32>
    %141 = vector.broadcast %140 : vector<1x128xf32> to vector<8x128xf32>
    %142 = arith.addf %139, %141 : vector<8x128xf32>
    %c0_130 = arith.constant 0 : index
    %c0_131 = arith.constant 0 : index
    %143 = vector.load %arg27[%c0_130, %c0_131] : memref<8x128xf32, #tpu.memory_space<vmem>>, vector<8x128xf32>
    tpu.vector_store %arg27[%c0_130, %c0_131], %142 {strides = array<i32>} : memref<8x128xf32, #tpu.memory_space<vmem>>, vector<8x128xf32>,
    return
  }
  func.func @transform_0(%arg0: i32) -> (i32, i32) {
    %c0_i32 = arith.constant 0 : i32
    %c0_i32_0 = arith.constant 0 : i32
    return %arg0, %c0_i32 : i32, i32
  }
  func.func @transform_1(%arg0: i32) -> (i32, i32) {
    %c0_i32 = arith.constant 0 : i32
    %c0_i32_0 = arith.constant 0 : i32
    return %arg0, %c0_i32 : i32, i32
  }
  func.func @transform_2(%arg0: i32) -> (i32, i32, i32) {
    %c0_i32 = arith.constant 0 : i32
    %c0_i32_0 = arith.constant 0 : i32
    %c0_i32_1 = arith.constant 0 : i32
    %c0_i32_2 = arith.constant 0 : i32
    return %c0_i32, %c0_i32_0, %c0_i32_1 : i32, i32, i32
  }
  func.func @transform_3(%arg0: i32) -> (i32, i32) {
    %c0_i32 = arith.constant 0 : i32
    %c0_i32_0 = arith.constant 0 : i32
    %c0_i32_1 = arith.constant 0 : i32
    return %c0_i32, %c0_i32_0 : i32, i32
  }
  func.func @transform_4(%arg0: i32) -> (i32, i32, i32) {
    %c0_i32 = arith.constant 0 : i32
    %c0_i32_0 = arith.constant 0 : i32
    %c0_i32_1 = arith.constant 0 : i32
    %c0_i32_2 = arith.constant 0 : i32
    return %c0_i32, %c0_i32_0, %c0_i32_1 : i32, i32, i32
  }
  func.func @transform_5(%arg0: i32) -> (i32, i32) {
    %c0_i32 = arith.constant 0 : i32
    %c0_i32_0 = arith.constant 0 : i32
    %c0_i32_1 = arith.constant 0 : i32
    return %c0_i32, %c0_i32_0 : i32, i32
  }
  func.func @transform_6(%arg0: i32) -> (i32, i32) {
    %c0_i32 = arith.constant 0 : i32
    %c0_i32_0 = arith.constant 0 : i32
    %c0_i32_1 = arith.constant 0 : i32
    return %c0_i32, %c0_i32_0 : i32, i32
  }
  func.func @transform_7(%arg0: i32) -> (i32, i32, i32) {
    %c0_i32 = arith.constant 0 : i32
    %c0_i32_0 = arith.constant 0 : i32
    %c0_i32_1 = arith.constant 0 : i32
    %c0_i32_2 = arith.constant 0 : i32
    return %c0_i32, %c0_i32_0, %c0_i32_1 : i32, i32, i32
  }
  func.func @transform_8(%arg0: i32) -> (i32, i32) {
    %c0_i32 = arith.constant 0 : i32
    %c0_i32_0 = arith.constant 0 : i32
    %c0_i32_1 = arith.constant 0 : i32
    return %c0_i32, %c0_i32_0 : i32, i32
  }
  func.func @transform_9(%arg0: i32) -> (i32, i32, i32) {
    %c0_i32 = arith.constant 0 : i32
    %c0_i32_0 = arith.constant 0 : i32
    %c0_i32_1 = arith.constant 0 : i32
    %c0_i32_2 = arith.constant 0 : i32
    return %c0_i32, %c0_i32_0, %c0_i32_1 : i32, i32, i32
  }
  func.func @transform_10(%arg0: i32) -> (i32, i32) {
    %c0_i32 = arith.constant 0 : i32
    %c0_i32_0 = arith.constant 0 : i32
    %c0_i32_1 = arith.constant 0 : i32
    return %c0_i32, %c0_i32_0 : i32, i32
  }
  func.func @transform_11(%arg0: i32) -> (i32, i32) {
    %c0_i32 = arith.constant 0 : i32
    %c0_i32_0 = arith.constant 0 : i32
    %c0_i32_1 = arith.constant 0 : i32
    return %c0_i32, %c0_i32_0 : i32, i32
  }
  func.func @transform_12(%arg0: i32) -> (i32, i32, i32) {
    %c0_i32 = arith.constant 0 : i32
    %c0_i32_0 = arith.constant 0 : i32
    %c0_i32_1 = arith.constant 0 : i32
    %c0_i32_2 = arith.constant 0 : i32
    return %c0_i32, %c0_i32_0, %c0_i32_1 : i32, i32, i32
  }
  func.func @transform_13(%arg0: i32) -> (i32, i32) {
    %c0_i32 = arith.constant 0 : i32
    %c0_i32_0 = arith.constant 0 : i32
    %c0_i32_1 = arith.constant 0 : i32
    return %c0_i32, %c0_i32_0 : i32, i32
  }
  func.func @transform_14(%arg0: i32) -> (i32, i32, i32) {
    %c0_i32 = arith.constant 0 : i32
    %c0_i32_0 = arith.constant 0 : i32
    %c0_i32_1 = arith.constant 0 : i32
    %c0_i32_2 = arith.constant 0 : i32
    return %c0_i32, %c0_i32_0, %c0_i32_1 : i32, i32, i32
  }
  func.func @transform_15(%arg0: i32) -> (i32, i32) {
    %c0_i32 = arith.constant 0 : i32
    %c0_i32_0 = arith.constant 0 : i32
    %c0_i32_1 = arith.constant 0 : i32
    return %c0_i32, %c0_i32_0 : i32, i32
  }
  func.func @transform_16(%arg0: i32) -> (i32, i32, i32) {
    %c0_i32 = arith.constant 0 : i32
    %c0_i32_0 = arith.constant 0 : i32
    %c0_i32_1 = arith.constant 0 : i32
    %c0_i32_2 = arith.constant 0 : i32
    return %c0_i32, %c0_i32_0, %c0_i32_1 : i32, i32, i32
  }
  func.func @transform_17(%arg0: i32) -> (i32, i32, i32) {
    %c0_i32 = arith.constant 0 : i32
    %c0_i32_0 = arith.constant 0 : i32
    %c0_i32_1 = arith.constant 0 : i32
    %c0_i32_2 = arith.constant 0 : i32
    return %c0_i32, %c0_i32_0, %c0_i32_1 : i32, i32, i32
  }
  func.func @transform_18(%arg0: i32) -> (i32, i32) {
    %c0_i32 = arith.constant 0 : i32
    %c0_i32_0 = arith.constant 0 : i32
    %c0_i32_1 = arith.constant 0 : i32
    return %c0_i32, %c0_i32_0 : i32, i32
  }
  func.func @transform_19(%arg0: i32) -> (i32, i32) {
    %c0_i32 = arith.constant 0 : i32
    %c0_i32_0 = arith.constant 0 : i32
    %c0_i32_1 = arith.constant 0 : i32
    return %c0_i32, %c0_i32_0 : i32, i32
  }
  func.func @transform_20(%arg0: i32) -> (i32, i32) {
    %c0_i32 = arith.constant 0 : i32
    %c0_i32_0 = arith.constant 0 : i32
    %c0_i32_1 = arith.constant 0 : i32
    return %c0_i32, %c0_i32_0 : i32, i32
  }
  func.func @transform_21(%arg0: i32) -> (i32, i32) {
    %c0_i32 = arith.constant 0 : i32
    %c0_i32_0 = arith.constant 0 : i32
    %c0_i32_1 = arith.constant 0 : i32
    return %c0_i32, %c0_i32_0 : i32, i32
  }
  func.func @transform_22(%arg0: i32) -> (i32, i32) {
    %c0_i32 = arith.constant 0 : i32
    %c0_i32_0 = arith.constant 0 : i32
    %c0_i32_1 = arith.constant 0 : i32
    return %c0_i32, %c0_i32_0 : i32, i32
  }
  func.func @transform_23(%arg0: i32) -> (i32, i32) {
    %c0_i32 = arith.constant 0 : i32
    %c0_i32_0 = arith.constant 0 : i32
    %c0_i32_1 = arith.constant 0 : i32
    return %c0_i32, %c0_i32_0 : i32, i32
  }
  func.func @transform_24(%arg0: i32) -> (i32, i32) {
    %c0_i32 = arith.constant 0 : i32
    %c0_i32_0 = arith.constant 0 : i32
    %c0_i32_1 = arith.constant 0 : i32
    return %c0_i32, %c0_i32_0 : i32, i32
  }
  func.func @transform_25(%arg0: i32) -> (i32, i32) {
    %c0_i32 = arith.constant 0 : i32
    %c0_i32_0 = arith.constant 0 : i32
    %c0_i32_1 = arith.constant 0 : i32
    return %c0_i32, %c0_i32_0 : i32, i32
  }
  func.func @transform_26(%arg0: i32) -> (i32, i32) {
    %c0_i32 = arith.constant 0 : i32
    %c0_i32_0 = arith.constant 0 : i32
    return %arg0, %c0_i32 : i32, i32
  }
}

</mosaic_0001>

<llo_original>
// kernel: dqn_forward.1
$region0: #{dqn_forward.1}
  #allocation0 [shape = 'u32[]', space=smem, size = 0x4, offset = 0x4, fixed_abs, tag = 'smem constant byte address 0x4 - core index']
  #allocation1 [shape = 'u32[144,128]{1,0:T(1,128)}', space=vmem, size = 0x12000, scoped, tag = 'internal scratch']
  %s0 = inlined_call_operand.vmem [shape: f32[384,8], index: 0, kind: input, shape index: {}]
  %s1 = inlined_call_operand.vmem [shape: f32[16,3], index: 1, kind: input, shape index: {}]
  %s2 = inlined_call_operand.hbm [shape: f32[3,8,128], index: 2, kind: input, shape index: {}]
  %s3 = inlined_call_operand.vmem [shape: f32[1,128], index: 3, kind: input, shape index: {}]
  %s4 = inlined_call_operand.vmem [shape: f32[2,192,8], index: 4, kind: input, shape index: {}]
  %s5 = inlined_call_operand.vmem [shape: f32[128,64], index: 5, kind: input, shape index: {}]
  %s6 = inlined_call_operand.vmem [shape: f32[96,192], index: 6, kind: input, shape index: {}]
  %s7 = inlined_call_operand.vmem [shape: f32[3,64,128], index: 7, kind: input, shape index: {}]
  %s8 = inlined_call_operand.vmem [shape: f32[1,128], index: 8, kind: input, shape index: {}]
  %s9 = inlined_call_operand.vmem [shape: f32[2,96,64], index: 9, kind: input, shape index: {}]
  %s10 = inlined_call_operand.vmem [shape: f32[128,64], index: 10, kind: input, shape index: {}]
  %s11 = inlined_call_operand.hbm [shape: f32[48,96], index: 11, kind: input, shape index: {}]
  %s12 = inlined_call_operand.vmem [shape: f32[3,64,128], index: 12, kind: input, shape index: {}]
  %s13 = inlined_call_operand.vmem [shape: f32[1,128], index: 13, kind: input, shape index: {}]
  %s14 = inlined_call_operand.vmem [shape: f32[2,48,64], index: 14, kind: input, shape index: {}]
  %s15 = inlined_call_operand.vmem [shape: f32[128,64], index: 15, kind: input, shape index: {}]
  %s16 = inlined_call_operand.vmem [shape: f32[3,8,48], index: 16, kind: input, shape index: {}]
  %s17 = inlined_call_operand.vmem [shape: f32[3,64,128], index: 17, kind: input, shape index: {}]
  %s18 = inlined_call_operand.vmem [shape: f32[1,128], index: 18, kind: input, shape index: {}]
  %s19 = inlined_call_operand.vmem [shape: f32[3,32], index: 19, kind: input, shape index: {}]
  %s20 = inlined_call_operand.vmem [shape: f32[1,32], index: 20, kind: input, shape index: {}]
  %s21 = inlined_call_operand.vmem [shape: f32[128,256], index: 21, kind: input, shape index: {}]
  %s22 = inlined_call_operand.vmem [shape: f32[32,256], index: 22, kind: input, shape index: {}]
  %s23 = inlined_call_operand.vmem [shape: f32[1,256], index: 23, kind: input, shape index: {}]
  %s24 = inlined_call_operand.vmem [shape: f32[256,128], index: 24, kind: input, shape index: {}]
  %s25 = inlined_call_operand.vmem [shape: f32[1,128], index: 25, kind: input, shape index: {}]
  %s26 = inlined_call_operand.vmem [shape: f32[16,128], index: 26, kind: output, shape index: {}]
  %s27 = sld [smem:[#allocation0]]
  $region145: #{dqn_forward.1} parent=0
    _
  %s29 = ssub.s32 1, %s27
  %s30 = scalar_select 0, %s29, %s27
  $region1: #{dqn_forward.1} parent=0
    #allocation2 [shape = 'u8[12288]{0}', space=vmem, size = 0x3000, scoped, tag = 'input window, operand 2, single buffered']
    #allocation3 [shape = 's32[2]{0}', space=sflag, size = 0x8, scoped, tag = 'scoped memory for dqn_forward.1']
    #allocation4 [shape = 'u8[24576]{0}', space=vmem, size = 0x6000, scoped, tag = 'input window, operand 11, single buffered']
    #allocation5 [shape = 's32[1]{0}', space=sflag, size = 0x4, scoped, tag = 'scoped memory for dqn_forward.1']
    %31 = vsyncpa [#allocation3], 0
    %32 = vsyncpa [#allocation5], 0
    loop: start=0, step=1, limit=4
    $region2: #{dqn_forward.1} parent=1 // loop_pre_header
      _
    $region3: #{dqn_forward.1} parent=1 // loop_header
      %s34 = sphi 0, %s38
      %p35 = scmp.ge.s32.totalorder %s34, 4
      %s44 = sphi 0, %s46
      %s47 = sphi 0, %s44
      %s48 = sphi 0, %s47
      %s64 = sphi 0, %s48
      %s70 = sphi 0, %s72
      %s73 = sphi 0, %s70
      %s74 = sphi 0, %s73
      %s90 = sphi 0, %s74
      %s94 = sphi 0, %s94
      %s96 = sphi 0, %s94
      %s97 = sphi 0, %s96
      %s111 = sphi 0, %s97
      %s115 = sphi 0, %s115
      %s117 = sphi 0, %s115
      %s118 = sphi 0, %s117
      %s132 = sphi 0, %s118
      %s136 = sphi 0, %s136
      %s138 = sphi 0, %s136
      %s139 = sphi 0, %s138
      %s153 = sphi 0, %s139
      %s157 = sphi 0, %s157
      %s159 = sphi 0, %s157
      %s160 = sphi 0, %s159
      %s174 = sphi 0, %s160
      %s178 = sphi 0, %s178
      %s180 = sphi 0, %s178
      %s181 = sphi 0, %s180
      %s195 = sphi 0, %s181
      %s199 = sphi 0, %s199
      %s201 = sphi 0, %s199
      %s202 = sphi 0, %s201
      %s216 = sphi 0, %s202
      %s220 = sphi 0, %s220
      %s222 = sphi 0, %s220
      %s223 = sphi 0, %s222
      %s237 = sphi 0, %s223
      %s241 = sphi 0, %s241
      %s243 = sphi 0, %s241
      %s244 = sphi 0, %s243
      %s258 = sphi 0, %s244
      %s262 = sphi 0, %s262
      %s264 = sphi 0, %s262
      %s265 = sphi 0, %s264
      %s279 = sphi 0, %s265
      %s283 = sphi 0, %s283
      %s285 = sphi 0, %s283
      %s286 = sphi 0, %s285
      %s300 = sphi 0, %s286
      %s304 = sphi 0, %s304
      %s306 = sphi 0, %s304
      %s307 = sphi 0, %s306
      %s321 = sphi 0, %s307
      %s325 = sphi 0, %s325
      %s327 = sphi 0, %s325
      %s328 = sphi 0, %s327
      %s342 = sphi 0, %s328
      %s346 = sphi 0, %s346
      %s348 = sphi 0, %s346
      %s349 = sphi 0, %s348
      %s363 = sphi 0, %s349
      %s367 = sphi 0, %s367
      %s369 = sphi 0, %s367
      %s370 = sphi 0, %s369
      %s384 = sphi 0, %s370
      %s388 = sphi 0, %s388
      %s390 = sphi 0, %s388
      %s391 = sphi 0, %s390
      %s405 = sphi 0, %s391
      %s409 = sphi 0, %s409
      %s411 = sphi 0, %s409
      %s412 = sphi 0, %s411
      %s426 = sphi 0, %s412
      %s430 = sphi 0, %s430
      %s432 = sphi 0, %s430
      %s433 = sphi 0, %s432
      %s447 = sphi 0, %s433
      %s451 = sphi 0, %s451
      %s453 = sphi 0, %s451
      %s454 = sphi 0, %s453
      %s468 = sphi 0, %s454
      %s472 = sphi 0, %s472
      %s474 = sphi 0, %s472
      %s475 = sphi 0, %s474
      %s489 = sphi 0, %s475
      %s493 = sphi 0, %s493
      %s495 = sphi 0, %s493
      %s496 = sphi 0, %s495
      %s510 = sphi 0, %s496
      %s514 = sphi 0, %s514
      %s516 = sphi 0, %s514
      %s517 = sphi 0, %s516
      %s531 = sphi 0, %s517
      %s535 = sphi 0, %s535
      %s537 = sphi 0, %s535
      %s538 = sphi 0, %s537
      %s552 = sphi 0, %s538
      %s556 = sphi 0, %s556
      %s558 = sphi 0, %s556
      %s559 = sphi 0, %s558
      %s573 = sphi 0, %s559
      %s577 = sphi 0, %s577
      %s579 = sphi 0, %s577
      %s580 = sphi 0, %s579
      %s594 = sphi 0, %s580
      %s600 = sphi 0, %s602
      %s603 = sphi 0, %s600
      %s604 = sphi 0, %s603
      %s620 = sphi 0, %s604
    $region4: #{dqn_forward.1} parent=1 // loop_header_branch
      %37 = sbr.rel (%p35) target = $region8
    $region5: #{dqn_forward.1} parent=1 // loop_body
      %s39 = ssub.s32 %s34, 1
      %s40 = ssub.s32 %s34, 2
      %s41 = sadd.s32 %s34, 1
      %s42 = ssub.s32 %s34, %s41
      %p43 = scmp.eq.s32.totalorder %s42, 0
      %s45 = sadd.s32 %s44, 1
      %s46 = scalar_select %p43, %s44, %s45
      %p49 = pneg %p43
      %p50 = scmp.eq.s32.totalorder %s34, 1
      %p51 = por %p49, %p50
      %p52 = scmp.ne.s32.totalorder %s44, %s47
      %p53 = scmp.eq.s32.totalorder %s34, 0
      %p54 = por %p52, %p53
      %p55 = scmp.ne.s32.totalorder %s44, %s47
      %p56 = scmp.eq.s32.totalorder %s39, 1
      %p57 = por %p55, %p56
      %p58 = scmp.ne.s32.totalorder %s47, %s48
      %p59 = scmp.eq.s32.totalorder %s39, 0
      %p60 = por %p58, %p59
      %p61 = scmp.ne.s32.totalorder %s47, %s48
      %p62 = scmp.eq.s32.totalorder %s40, 1
      %p63 = por %p61, %p62
      %p65 = scmp.ne.s32.totalorder %s48, %s64
      %p66 = scmp.eq.s32.totalorder %s40, 0
      %p67 = por %p65, %p66
      %s68 = ssub.s32 %s34, %s41
      %p69 = scmp.eq.s32.totalorder %s68, 0
      %s71 = sadd.s32 %s70, 1
      %s72 = scalar_select %p69, %s70, %s71
      %p75 = pneg %p69
      %p76 = scmp.eq.s32.totalorder %s34, 1
      %p77 = por %p75, %p76
      %p78 = scmp.ne.s32.totalorder %s70, %s73
      %p79 = scmp.eq.s32.totalorder %s34, 0
      %p80 = por %p78, %p79
      %p81 = scmp.ne.s32.totalorder %s70, %s73
      %p82 = scmp.eq.s32.totalorder %s39, 1
      %p83 = por %p81, %p82
      %p84 = scmp.ne.s32.totalorder %s73, %s74
      %p85 = scmp.eq.s32.totalorder %s39, 0
      %p86 = por %p84, %p85
      %p87 = scmp.ne.s32.totalorder %s73, %s74
      %p88 = scmp.eq.s32.totalorder %s40, 1
      %p89 = por %p87, %p88
      %p91 = scmp.ne.s32.totalorder %s74, %s90
      %p92 = scmp.eq.s32.totalorder %s40, 0
      %p93 = por %p91, %p92
      %s95 = sadd.s32 %s94, 1
      %p98 = scmp.eq.s32.totalorder %s34, 1
      %p99 = scmp.ne.s32.totalorder %s94, %s96
      %p100 = scmp.eq.s32.totalorder %s34, 0
      %p101 = por %p99, %p100
      %p102 = scmp.ne.s32.totalorder %s94, %s96
      %p103 = scmp.eq.s32.totalorder %s39, 1
      %p104 = por %p102, %p103
      %p105 = scmp.ne.s32.totalorder %s96, %s97
      %p106 = scmp.eq.s32.totalorder %s39, 0
      %p107 = por %p105, %p106
      %p108 = scmp.ne.s32.totalorder %s96, %s97
      %p109 = scmp.eq.s32.totalorder %s40, 1
      %p110 = por %p108, %p109
      %p112 = scmp.ne.s32.totalorder %s97, %s111
      %p113 = scmp.eq.s32.totalorder %s40, 0
      %p114 = por %p112, %p113
      %s116 = sadd.s32 %s115, 1
      %p119 = scmp.eq.s32.totalorder %s34, 1
      %p120 = scmp.ne.s32.totalorder %s115, %s117
      %p121 = scmp.eq.s32.totalorder %s34, 0
      %p122 = por %p120, %p121
      %p123 = scmp.ne.s32.totalorder %s115, %s117
      %p124 = scmp.eq.s32.totalorder %s39, 1
      %p125 = por %p123, %p124
      %p126 = scmp.ne.s32.totalorder %s117, %s118
      %p127 = scmp.eq.s32.totalorder %s39, 0
      %p128 = por %p126, %p127
      %p129 = scmp.ne.s32.totalorder %s117, %s118
      %p130 = scmp.eq.s32.totalorder %s40, 1
      %p131 = por %p129, %p130
      %p133 = scmp.ne.s32.totalorder %s118, %s132
      %p134 = scmp.eq.s32.totalorder %s40, 0
      %p135 = por %p133, %p134
      %s137 = sadd.s32 %s136, 1
      %p140 = scmp.eq.s32.totalorder %s34, 1
      %p141 = scmp.ne.s32.totalorder %s136, %s138
      %p142 = scmp.eq.s32.totalorder %s34, 0
      %p143 = por %p141, %p142
      %p144 = scmp.ne.s32.totalorder %s136, %s138
      %p145 = scmp.eq.s32.totalorder %s39, 1
      %p146 = por %p144, %p145
      %p147 = scmp.ne.s32.totalorder %s138, %s139
      %p148 = scmp.eq.s32.totalorder %s39, 0
      %p149 = por %p147, %p148
      %p150 = scmp.ne.s32.totalorder %s138, %s139
      %p151 = scmp.eq.s32.totalorder %s40, 1
      %p152 = por %p150, %p151
      %p154 = scmp.ne.s32.totalorder %s139, %s153
      %p155 = scmp.eq.s32.totalorder %s40, 0
      %p156 = por %p154, %p155
      %s158 = sadd.s32 %s157, 1
      %p161 = scmp.eq.s32.totalorder %s34, 1
      %p162 = scmp.ne.s32.totalorder %s157, %s159
      %p163 = scmp.eq.s32.totalorder %s34, 0
      %p164 = por %p162, %p163
      %p165 = scmp.ne.s32.totalorder %s157, %s159
      %p166 = scmp.eq.s32.totalorder %s39, 1
      %p167 = por %p165, %p166
      %p168 = scmp.ne.s32.totalorder %s159, %s160
      %p169 = scmp.eq.s32.totalorder %s39, 0
      %p170 = por %p168, %p169
      %p171 = scmp.ne.s32.totalorder %s159, %s160
      %p172 = scmp.eq.s32.totalorder %s40, 1
      %p173 = por %p171, %p172
      %p175 = scmp.ne.s32.totalorder %s160, %s174
      %p176 = scmp.eq.s32.totalorder %s40, 0
      %p177 = por %p175, %p176
      %s179 = sadd.s32 %s178, 1
      %p182 = scmp.eq.s32.totalorder %s34, 1
      %p183 = scmp.ne.s32.totalorder %s178, %s180
      %p184 = scmp.eq.s32.totalorder %s34, 0
      %p185 = por %p183, %p184
      %p186 = scmp.ne.s32.totalorder %s178, %s180
      %p187 = scmp.eq.s32.totalorder %s39, 1
      %p188 = por %p186, %p187
      %p189 = scmp.ne.s32.totalorder %s180, %s181
      %p190 = scmp.eq.s32.totalorder %s39, 0
      %p191 = por %p189, %p190
      %p192 = scmp.ne.s32.totalorder %s180, %s181
      %p193 = scmp.eq.s32.totalorder %s40, 1
      %p194 = por %p192, %p193
      %p196 = scmp.ne.s32.totalorder %s181, %s195
      %p197 = scmp.eq.s32.totalorder %s40, 0
      %p198 = por %p196, %p197
      %s200 = sadd.s32 %s199, 1
      %p203 = scmp.eq.s32.totalorder %s34, 1
      %p204 = scmp.ne.s32.totalorder %s199, %s201
      %p205 = scmp.eq.s32.totalorder %s34, 0
      %p206 = por %p204, %p205
      %p207 = scmp.ne.s32.totalorder %s199, %s201
      %p208 = scmp.eq.s32.totalorder %s39, 1
      %p209 = por %p207, %p208
      %p210 = scmp.ne.s32.totalorder %s201, %s202
      %p211 = scmp.eq.s32.totalorder %s39, 0
      %p212 = por %p210, %p211
      %p213 = scmp.ne.s32.totalorder %s201, %s202
      %p214 = scmp.eq.s32.totalorder %s40, 1
      %p215 = por %p213, %p214
      %p217 = scmp.ne.s32.totalorder %s202, %s216
      %p218 = scmp.eq.s32.totalorder %s40, 0
      %p219 = por %p217, %p218
      %s221 = sadd.s32 %s220, 1
      %p224 = scmp.eq.s32.totalorder %s34, 1
      %p225 = scmp.ne.s32.totalorder %s220, %s222
      %p226 = scmp.eq.s32.totalorder %s34, 0
      %p227 = por %p225, %p226
      %p228 = scmp.ne.s32.totalorder %s220, %s222
      %p229 = scmp.eq.s32.totalorder %s39, 1
      %p230 = por %p228, %p229
      %p231 = scmp.ne.s32.totalorder %s222, %s223
      %p232 = scmp.eq.s32.totalorder %s39, 0
      %p233 = por %p231, %p232
      %p234 = scmp.ne.s32.totalorder %s222, %s223
      %p235 = scmp.eq.s32.totalorder %s40, 1
      %p236 = por %p234, %p235
      %p238 = scmp.ne.s32.totalorder %s223, %s237
      %p239 = scmp.eq.s32.totalorder %s40, 0
      %p240 = por %p238, %p239
      %s242 = sadd.s32 %s241, 1
      %p245 = scmp.eq.s32.totalorder %s34, 1
      %p246 = scmp.ne.s32.totalorder %s241, %s243
      %p247 = scmp.eq.s32.totalorder %s34, 0
      %p248 = por %p246, %p247
      %p249 = scmp.ne.s32.totalorder %s241, %s243
      %p250 = scmp.eq.s32.totalorder %s39, 1
      %p251 = por %p249, %p250
      %p252 = scmp.ne.s32.totalorder %s243, %s244
      %p253 = scmp.eq.s32.totalorder %s39, 0
      %p254 = por %p252, %p253
      %p255 = scmp.ne.s32.totalorder %s243, %s244
      %p256 = scmp.eq.s32.totalorder %s40, 1
      %p257 = por %p255, %p256
      %p259 = scmp.ne.s32.totalorder %s244, %s258
      %p260 = scmp.eq.s32.totalorder %s40, 0
      %p261 = por %p259, %p260
      %s263 = sadd.s32 %s262, 1
      %p266 = scmp.eq.s32.totalorder %s34, 1
      %p267 = scmp.ne.s32.totalorder %s262, %s264
      %p268 = scmp.eq.s32.totalorder %s34, 0
      %p269 = por %p267, %p268
      %p270 = scmp.ne.s32.totalorder %s262, %s264
      %p271 = scmp.eq.s32.totalorder %s39, 1
      %p272 = por %p270, %p271
      %p273 = scmp.ne.s32.totalorder %s264, %s265
      %p274 = scmp.eq.s32.totalorder %s39, 0
      %p275 = por %p273, %p274
      %p276 = scmp.ne.s32.totalorder %s264, %s265
      %p277 = scmp.eq.s32.totalorder %s40, 1
      %p278 = por %p276, %p277
      %p280 = scmp.ne.s32.totalorder %s265, %s279
      %p281 = scmp.eq.s32.totalorder %s40, 0
      %p282 = por %p280, %p281
      %s284 = sadd.s32 %s283, 1
      %p287 = scmp.eq.s32.totalorder %s34, 1
      %p288 = scmp.ne.s32.totalorder %s283, %s285
      %p289 = scmp.eq.s32.totalorder %s34, 0
      %p290 = por %p288, %p289
      %p291 = scmp.ne.s32.totalorder %s283, %s285
      %p292 = scmp.eq.s32.totalorder %s39, 1
      %p293 = por %p291, %p292
      %p294 = scmp.ne.s32.totalorder %s285, %s286
      %p295 = scmp.eq.s32.totalorder %s39, 0
      %p296 = por %p294, %p295
      %p297 = scmp.ne.s32.totalorder %s285, %s286
      %p298 = scmp.eq.s32.totalorder %s40, 1
      %p299 = por %p297, %p298
      %p301 = scmp.ne.s32.totalorder %s286, %s300
      %p302 = scmp.eq.s32.totalorder %s40, 0
      %p303 = por %p301, %p302
      %s305 = sadd.s32 %s304, 1
      %p308 = scmp.eq.s32.totalorder %s34, 1
      %p309 = scmp.ne.s32.totalorder %s304, %s306
      %p310 = scmp.eq.s32.totalorder %s34, 0
      %p311 = por %p309, %p310
      %p312 = scmp.ne.s32.totalorder %s304, %s306
      %p313 = scmp.eq.s32.totalorder %s39, 1
      %p314 = por %p312, %p313
      %p315 = scmp.ne.s32.totalorder %s306, %s307
      %p316 = scmp.eq.s32.totalorder %s39, 0
      %p317 = por %p315, %p316
      %p318 = scmp.ne.s32.totalorder %s306, %s307
      %p319 = scmp.eq.s32.totalorder %s40, 1
      %p320 = por %p318, %p319
      %p322 = scmp.ne.s32.totalorder %s307, %s321
      %p323 = scmp.eq.s32.totalorder %s40, 0
      %p324 = por %p322, %p323
      %s326 = sadd.s32 %s325, 1
      %p329 = scmp.eq.s32.totalorder %s34, 1
      %p330 = scmp.ne.s32.totalorder %s325, %s327
      %p331 = scmp.eq.s32.totalorder %s34, 0
      %p332 = por %p330, %p331
      %p333 = scmp.ne.s32.totalorder %s325, %s327
      %p334 = scmp.eq.s32.totalorder %s39, 1
      %p335 = por %p333, %p334
      %p336 = scmp.ne.s32.totalorder %s327, %s328
      %p337 = scmp.eq.s32.totalorder %s39, 0
      %p338 = por %p336, %p337
      %p339 = scmp.ne.s32.totalorder %s327, %s328
      %p340 = scmp.eq.s32.totalorder %s40, 1
      %p341 = por %p339, %p340
      %p343 = scmp.ne.s32.totalorder %s328, %s342
      %p344 = scmp.eq.s32.totalorder %s40, 0
      %p345 = por %p343, %p344
      %s347 = sadd.s32 %s346, 1
      %p350 = scmp.eq.s32.totalorder %s34, 1
      %p351 = scmp.ne.s32.totalorder %s346, %s348
      %p352 = scmp.eq.s32.totalorder %s34, 0
      %p353 = por %p351, %p352
      %p354 = scmp.ne.s32.totalorder %s346, %s348
      %p355 = scmp.eq.s32.totalorder %s39, 1
      %p356 = por %p354, %p355
      %p357 = scmp.ne.s32.totalorder %s348, %s349
      %p358 = scmp.eq.s32.totalorder %s39, 0
      %p359 = por %p357, %p358
      %p360 = scmp.ne.s32.totalorder %s348, %s349
      %p361 = scmp.eq.s32.totalorder %s40, 1
      %p362 = por %p360, %p361
      %p364 = scmp.ne.s32.totalorder %s349, %s363
      %p365 = scmp.eq.s32.totalorder %s40, 0
      %p366 = por %p364, %p365
      %s368 = sadd.s32 %s367, 1
      %p371 = scmp.eq.s32.totalorder %s34, 1
      %p372 = scmp.ne.s32.totalorder %s367, %s369
      %p373 = scmp.eq.s32.totalorder %s34, 0
      %p374 = por %p372, %p373
      %p375 = scmp.ne.s32.totalorder %s367, %s369
      %p376 = scmp.eq.s32.totalorder %s39, 1
      %p377 = por %p375, %p376
      %p378 = scmp.ne.s32.totalorder %s369, %s370
      %p379 = scmp.eq.s32.totalorder %s39, 0
      %p380 = por %p378, %p379
      %p381 = scmp.ne.s32.totalorder %s369, %s370
      %p382 = scmp.eq.s32.totalorder %s40, 1
      %p383 = por %p381, %p382
      %p385 = scmp.ne.s32.totalorder %s370, %s384
      %p386 = scmp.eq.s32.totalorder %s40, 0
      %p387 = por %p385, %p386
      %s389 = sadd.s32 %s388, 1
      %p392 = scmp.eq.s32.totalorder %s34, 1
      %p393 = scmp.ne.s32.totalorder %s388, %s390
      %p394 = scmp.eq.s32.totalorder %s34, 0
      %p395 = por %p393, %p394
      %p396 = scmp.ne.s32.totalorder %s388, %s390
      %p397 = scmp.eq.s32.totalorder %s39, 1
      %p398 = por %p396, %p397
      %p399 = scmp.ne.s32.totalorder %s390, %s391
      %p400 = scmp.eq.s32.totalorder %s39, 0
      %p401 = por %p399, %p400
      %p402 = scmp.ne.s32.totalorder %s390, %s391
      %p403 = scmp.eq.s32.totalorder %s40, 1
      %p404 = por %p402, %p403
      %p406 = scmp.ne.s32.totalorder %s391, %s405
      %p407 = scmp.eq.s32.totalorder %s40, 0
      %p408 = por %p406, %p407
      %s410 = sadd.s32 %s409, 1
      %p413 = scmp.eq.s32.totalorder %s34, 1
      %p414 = scmp.ne.s32.totalorder %s409, %s411
      %p415 = scmp.eq.s32.totalorder %s34, 0
      %p416 = por %p414, %p415
      %p417 = scmp.ne.s32.totalorder %s409, %s411
      %p418 = scmp.eq.s32.totalorder %s39, 1
      %p419 = por %p417, %p418
      %p420 = scmp.ne.s32.totalorder %s411, %s412
      %p421 = scmp.eq.s32.totalorder %s39, 0
      %p422 = por %p420, %p421
      %p423 = scmp.ne.s32.totalorder %s411, %s412
      %p424 = scmp.eq.s32.totalorder %s40, 1
      %p425 = por %p423, %p424
      %p427 = scmp.ne.s32.totalorder %s412, %s426
      %p428 = scmp.eq.s32.totalorder %s40, 0
      %p429 = por %p427, %p428
      %s431 = sadd.s32 %s430, 1
      %p434 = scmp.eq.s32.totalorder %s34, 1
      %p435 = scmp.ne.s32.totalorder %s430, %s432
      %p436 = scmp.eq.s32.totalorder %s34, 0
      %p437 = por %p435, %p436
      %p438 = scmp.ne.s32.totalorder %s430, %s432
      %p439 = scmp.eq.s32.totalorder %s39, 1
      %p440 = por %p438, %p439
      %p441 = scmp.ne.s32.totalorder %s432, %s433
      %p442 = scmp.eq.s32.totalorder %s39, 0
      %p443 = por %p441, %p442
      %p444 = scmp.ne.s32.totalorder %s432, %s433
      %p445 = scmp.eq.s32.totalorder %s40, 1
      %p446 = por %p444, %p445
      %p448 = scmp.ne.s32.totalorder %s433, %s447
      %p449 = scmp.eq.s32.totalorder %s40, 0
      %p450 = por %p448, %p449
      %s452 = sadd.s32 %s451, 1
      %p455 = scmp.eq.s32.totalorder %s34, 1
      %p456 = scmp.ne.s32.totalorder %s451, %s453
      %p457 = scmp.eq.s32.totalorder %s34, 0
      %p458 = por %p456, %p457
      %p459 = scmp.ne.s32.totalorder %s451, %s453
      %p460 = scmp.eq.s32.totalorder %s39, 1
      %p461 = por %p459, %p460
      %p462 = scmp.ne.s32.totalorder %s453, %s454
      %p463 = scmp.eq.s32.totalorder %s39, 0
      %p464 = por %p462, %p463
      %p465 = scmp.ne.s32.totalorder %s453, %s454
      %p466 = scmp.eq.s32.totalorder %s40, 1
      %p467 = por %p465, %p466
      %p469 = scmp.ne.s32.totalorder %s454, %s468
      %p470 = scmp.eq.s32.totalorder %s40, 0
      %p471 = por %p469, %p470
      %s473 = sadd.s32 %s472, 1
      %p476 = scmp.eq.s32.totalorder %s34, 1
      %p477 = scmp.ne.s32.totalorder %s472, %s474
      %p478 = scmp.eq.s32.totalorder %s34, 0
      %p479 = por %p477, %p478
      %p480 = scmp.ne.s32.totalorder %s472, %s474
      %p481 = scmp.eq.s32.totalorder %s39, 1
      %p482 = por %p480, %p481
      %p483 = scmp.ne.s32.totalorder %s474, %s475
      %p484 = scmp.eq.s32.totalorder %s39, 0
      %p485 = por %p483, %p484
      %p486 = scmp.ne.s32.totalorder %s474, %s475
      %p487 = scmp.eq.s32.totalorder %s40, 1
      %p488 = por %p486, %p487
      %p490 = scmp.ne.s32.totalorder %s475, %s489
      %p491 = scmp.eq.s32.totalorder %s40, 0
      %p492 = por %p490, %p491
      %s494 = sadd.s32 %s493, 1
      %p497 = scmp.eq.s32.totalorder %s34, 1
      %p498 = scmp.ne.s32.totalorder %s493, %s495
      %p499 = scmp.eq.s32.totalorder %s34, 0
      %p500 = por %p498, %p499
      %p501 = scmp.ne.s32.totalorder %s493, %s495
      %p502 = scmp.eq.s32.totalorder %s39, 1
      %p503 = por %p501, %p502
      %p504 = scmp.ne.s32.totalorder %s495, %s496
      %p505 = scmp.eq.s32.totalorder %s39, 0
      %p506 = por %p504, %p505
      %p507 = scmp.ne.s32.totalorder %s495, %s496
      %p508 = scmp.eq.s32.totalorder %s40, 1
      %p509 = por %p507, %p508
      %p511 = scmp.ne.s32.totalorder %s496, %s510
      %p512 = scmp.eq.s32.totalorder %s40, 0
      %p513 = por %p511, %p512
      %s515 = sadd.s32 %s514, 1
      %p518 = scmp.eq.s32.totalorder %s34, 1
      %p519 = scmp.ne.s32.totalorder %s514, %s516
      %p520 = scmp.eq.s32.totalorder %s34, 0
      %p521 = por %p519, %p520
      %p522 = scmp.ne.s32.totalorder %s514, %s516
      %p523 = scmp.eq.s32.totalorder %s39, 1
      %p524 = por %p522, %p523
      %p525 = scmp.ne.s32.totalorder %s516, %s517
      %p526 = scmp.eq.s32.totalorder %s39, 0
      %p527 = por %p525, %p526
      %p528 = scmp.ne.s32.totalorder %s516, %s517
      %p529 = scmp.eq.s32.totalorder %s40, 1
      %p530 = por %p528, %p529
      %p532 = scmp.ne.s32.totalorder %s517, %s531
      %p533 = scmp.eq.s32.totalorder %s40, 0
      %p534 = por %p532, %p533
      %s536 = sadd.s32 %s535, 1
      %p539 = scmp.eq.s32.totalorder %s34, 1
      %p540 = scmp.ne.s32.totalorder %s535, %s537
      %p541 = scmp.eq.s32.totalorder %s34, 0
      %p542 = por %p540, %p541
      %p543 = scmp.ne.s32.totalorder %s535, %s537
      %p544 = scmp.eq.s32.totalorder %s39, 1
      %p545 = por %p543, %p544
      %p546 = scmp.ne.s32.totalorder %s537, %s538
      %p547 = scmp.eq.s32.totalorder %s39, 0
      %p548 = por %p546, %p547
      %p549 = scmp.ne.s32.totalorder %s537, %s538
      %p550 = scmp.eq.s32.totalorder %s40, 1
      %p551 = por %p549, %p550
      %p553 = scmp.ne.s32.totalorder %s538, %s552
      %p554 = scmp.eq.s32.totalorder %s40, 0
      %p555 = por %p553, %p554
      %s557 = sadd.s32 %s556, 1
      %p560 = scmp.eq.s32.totalorder %s34, 1
      %p561 = scmp.ne.s32.totalorder %s556, %s558
      %p562 = scmp.eq.s32.totalorder %s34, 0
      %p563 = por %p561, %p562
      %p564 = scmp.ne.s32.totalorder %s556, %s558
      %p565 = scmp.eq.s32.totalorder %s39, 1
      %p566 = por %p564, %p565
      %p567 = scmp.ne.s32.totalorder %s558, %s559
      %p568 = scmp.eq.s32.totalorder %s39, 0
      %p569 = por %p567, %p568
      %p570 = scmp.ne.s32.totalorder %s558, %s559
      %p571 = scmp.eq.s32.totalorder %s40, 1
      %p572 = por %p570, %p571
      %p574 = scmp.ne.s32.totalorder %s559, %s573
      %p575 = scmp.eq.s32.totalorder %s40, 0
      %p576 = por %p574, %p575
      %s578 = sadd.s32 %s577, 1
      %p581 = scmp.eq.s32.totalorder %s34, 1
      %p582 = scmp.ne.s32.totalorder %s577, %s579
      %p583 = scmp.eq.s32.totalorder %s34, 0
      %p584 = por %p582, %p583
      %p585 = scmp.ne.s32.totalorder %s577, %s579
      %p586 = scmp.eq.s32.totalorder %s39, 1
      %p587 = por %p585, %p586
      %p588 = scmp.ne.s32.totalorder %s579, %s580
      %p589 = scmp.eq.s32.totalorder %s39, 0
      %p590 = por %p588, %p589
      %p591 = scmp.ne.s32.totalorder %s579, %s580
      %p592 = scmp.eq.s32.totalorder %s40, 1
      %p593 = por %p591, %p592
      %p595 = scmp.ne.s32.totalorder %s580, %s594
      %p596 = scmp.eq.s32.totalorder %s40, 0
      %p597 = por %p595, %p596
      %s598 = ssub.s32 %s34, %s41
      %p599 = scmp.eq.s32.totalorder %s598, 0
      %s601 = sadd.s32 %s600, 1
      %s602 = scalar_select %p599, %s600, %s601
      %p605 = pneg %p599
      %p606 = scmp.eq.s32.totalorder %s34, 1
      %p607 = por %p605, %p606
      %p608 = scmp.ne.s32.totalorder %s600, %s603
      %p609 = scmp.eq.s32.totalorder %s34, 0
      %p610 = por %p608, %p609
      %p611 = scmp.ne.s32.totalorder %s600, %s603
      %p612 = scmp.eq.s32.totalorder %s39, 1
      %p613 = por %p611, %p612
      %p614 = scmp.ne.s32.totalorder %s603, %s604
      %p615 = scmp.eq.s32.totalorder %s39, 0
      %p616 = por %p614, %p615
      %p617 = scmp.ne.s32.totalorder %s603, %s604
      %p618 = scmp.eq.s32.totalorder %s40, 1
      %p619 = por %p617, %p618
      %p621 = scmp.ne.s32.totalorder %s604, %s620
      %p622 = scmp.eq.s32.totalorder %s40, 0
      %p623 = por %p621, %p622
      %p624 = scmp.le.s32.totalorder 1, %s34
      %p625 = scmp.lt.s32.totalorder %s34, 3
      %p626 = pnand %p624, %p625
      %p627 = pneg %p626
      // Predicated region
      $region9: #{dqn_forward.1} parent=5 // pred_check
        _
      $region10: #{dqn_forward.1} parent=5 // pred_check_branch
        %629 = sbr.rel (%p626) target = $region12
      $region11: #{dqn_forward.1} parent=5 // pred_region
        %s630 = ssub.s32 %s34, 1
        // Predicated region
        $region13: #{dqn_forward.1} parent=11 // pred_check
          %p631 = pneg %p107
        $region14: #{dqn_forward.1} parent=11 // pred_check_branch
          %633 = sbr.rel (%p631) target = $region16
        $region15: #{dqn_forward.1} parent=11 // pred_region
          %s635 = ssub.s32 384, 384
          %636 = vsyncadd [#allocation3], %s635
          %s637 = sshll.u32 [#allocation2], 4
          %s638 = int_to_ptr.vmem [resolvable:$true] %s637
          %643 = dma.hbm_to_vmem [thread:$0]  %s2, 384, %s638, [#allocation3], 128, 128, 8
        $region16: #{dqn_forward.1} parent=11 // pred_fallthru
          _
        // Predicated region
        $region17: #{dqn_forward.1} parent=11 // pred_check
          %p644 = pneg %p128
        $region18: #{dqn_forward.1} parent=11 // pred_check_branch
          %646 = sbr.rel (%p644) target = $region20
        $region19: #{dqn_forward.1} parent=11 // pred_region
          _
        $region20: #{dqn_forward.1} parent=11 // pred_fallthru
          _
        // Predicated region
        $region21: #{dqn_forward.1} parent=11 // pred_check
          %p647 = pneg %p149
        $region22: #{dqn_forward.1} parent=11 // pred_check_branch
          %649 = sbr.rel (%p647) target = $region24
        $region23: #{dqn_forward.1} parent=11 // pred_region
          _
        $region24: #{dqn_forward.1} parent=11 // pred_fallthru
          _
        // Predicated region
        $region25: #{dqn_forward.1} parent=11 // pred_check
          %p650 = pneg %p170
        $region26: #{dqn_forward.1} parent=11 // pred_check_branch
          %652 = sbr.rel (%p650) target = $region28
        $region27: #{dqn_forward.1} parent=11 // pred_region
          _
        $region28: #{dqn_forward.1} parent=11 // pred_fallthru
          _
        // Predicated region
        $region29: #{dqn_forward.1} parent=11 // pred_check
          %p653 = pneg %p191
        $region30: #{dqn_forward.1} parent=11 // pred_check_branch
          %655 = sbr.rel (%p653) target = $region32
        $region31: #{dqn_forward.1} parent=11 // pred_region
          _
        $region32: #{dqn_forward.1} parent=11 // pred_fallthru
          _
        // Predicated region
        $region33: #{dqn_forward.1} parent=11 // pred_check
          %p656 = pneg %p212
        $region34: #{dqn_forward.1} parent=11 // pred_check_branch
          %658 = sbr.rel (%p656) target = $region36
        $region35: #{dqn_forward.1} parent=11 // pred_region
          _
        $region36: #{dqn_forward.1} parent=11 // pred_fallthru
          _
        // Predicated region
        $region37: #{dqn_forward.1} parent=11 // pred_check
          %p659 = pneg %p233
        $region38: #{dqn_forward.1} parent=11 // pred_check_branch
          %661 = sbr.rel (%p659) target = $region40
        $region39: #{dqn_forward.1} parent=11 // pred_region
          _
        $region40: #{dqn_forward.1} parent=11 // pred_fallthru
          _
        // Predicated region
        $region41: #{dqn_forward.1} parent=11 // pred_check
          %p662 = pneg %p254
        $region42: #{dqn_forward.1} parent=11 // pred_check_branch
          %664 = sbr.rel (%p662) target = $region44
        $region43: #{dqn_forward.1} parent=11 // pred_region
          _
        $region44: #{dqn_forward.1} parent=11 // pred_fallthru
          _
        // Predicated region
        $region45: #{dqn_forward.1} parent=11 // pred_check
          %p665 = pneg %p275
        $region46: #{dqn_forward.1} parent=11 // pred_check_branch
          %667 = sbr.rel (%p665) target = $region48
        $region47: #{dqn_forward.1} parent=11 // pred_region
          _
        $region48: #{dqn_forward.1} parent=11 // pred_fallthru
          _
        // Predicated region
        $region49: #{dqn_forward.1} parent=11 // pred_check
          %p668 = pneg %p296
        $region50: #{dqn_forward.1} parent=11 // pred_check_branch
          %670 = sbr.rel (%p668) target = $region52
        $region51: #{dqn_forward.1} parent=11 // pred_region
          %s672 = ssub.s32 768, 768
          %673 = vsyncadd [#allocation5], %s672
          %s674 = sshll.u32 [#allocation4], 4
          %s675 = int_to_ptr.vmem [resolvable:$true] %s674
          %680 = dma.hbm_to_vmem [thread:$0]  %s11, 768, %s675, [#allocation5], 128, 128, 8
        $region52: #{dqn_forward.1} parent=11 // pred_fallthru
          _
        // Predicated region
        $region53: #{dqn_forward.1} parent=11 // pred_check
          %p681 = pneg %p317
        $region54: #{dqn_forward.1} parent=11 // pred_check_branch
          %683 = sbr.rel (%p681) target = $region56
        $region55: #{dqn_forward.1} parent=11 // pred_region
          _
        $region56: #{dqn_forward.1} parent=11 // pred_fallthru
          _
        // Predicated region
        $region57: #{dqn_forward.1} parent=11 // pred_check
          %p684 = pneg %p338
        $region58: #{dqn_forward.1} parent=11 // pred_check_branch
          %686 = sbr.rel (%p684) target = $region60
        $region59: #{dqn_forward.1} parent=11 // pred_region
          _
        $region60: #{dqn_forward.1} parent=11 // pred_fallthru
          _
        // Predicated region
        $region61: #{dqn_forward.1} parent=11 // pred_check
          %p687 = pneg %p359
        $region62: #{dqn_forward.1} parent=11 // pred_check_branch
          %689 = sbr.rel (%p687) target = $region64
        $region63: #{dqn_forward.1} parent=11 // pred_region
          _
        $region64: #{dqn_forward.1} parent=11 // pred_fallthru
          _
        // Predicated region
        $region65: #{dqn_forward.1} parent=11 // pred_check
          %p690 = pneg %p380
        $region66: #{dqn_forward.1} parent=11 // pred_check_branch
          %692 = sbr.rel (%p690) target = $region68
        $region67: #{dqn_forward.1} parent=11 // pred_region
          _
        $region68: #{dqn_forward.1} parent=11 // pred_fallthru
          _
        // Predicated region
        $region69: #{dqn_forward.1} parent=11 // pred_check
          %p693 = pneg %p401
        $region70: #{dqn_forward.1} parent=11 // pred_check_branch
          %695 = sbr.rel (%p693) target = $region72
        $region71: #{dqn_forward.1} parent=11 // pred_region
          _
        $region72: #{dqn_forward.1} parent=11 // pred_fallthru
          _
        // Predicated region
        $region73: #{dqn_forward.1} parent=11 // pred_check
          %p696 = pneg %p422
        $region74: #{dqn_forward.1} parent=11 // pred_check_branch
          %698 = sbr.rel (%p696) target = $region76
        $region75: #{dqn_forward.1} parent=11 // pred_region
          _
        $region76: #{dqn_forward.1} parent=11 // pred_fallthru
          _
        // Predicated region
        $region77: #{dqn_forward.1} parent=11 // pred_check
          %p699 = pneg %p443
        $region78: #{dqn_forward.1} parent=11 // pred_check_branch
          %701 = sbr.rel (%p699) target = $region80
        $region79: #{dqn_forward.1} parent=11 // pred_region
          _
        $region80: #{dqn_forward.1} parent=11 // pred_fallthru
          _
        // Predicated region
        $region81: #{dqn_forward.1} parent=11 // pred_check
          %p702 = pneg %p464
        $region82: #{dqn_forward.1} parent=11 // pred_check_branch
          %704 = sbr.rel (%p702) target = $region84
        $region83: #{dqn_forward.1} parent=11 // pred_region
          _
        $region84: #{dqn_forward.1} parent=11 // pred_fallthru
          _
        // Predicated region
        $region85: #{dqn_forward.1} parent=11 // pred_check
          %p705 = pneg %p485
        $region86: #{dqn_forward.1} parent=11 // pred_check_branch
          %707 = sbr.rel (%p705) target = $region88
        $region87: #{dqn_forward.1} parent=11 // pred_region
          _
        $region88: #{dqn_forward.1} parent=11 // pred_fallthru
          _
        // Predicated region
        $region89: #{dqn_forward.1} parent=11 // pred_check
          %p708 = pneg %p506
        $region90: #{dqn_forward.1} parent=11 // pred_check_branch
          %710 = sbr.rel (%p708) target = $region92
        $region91: #{dqn_forward.1} parent=11 // pred_region
          _
        $region92: #{dqn_forward.1} parent=11 // pred_fallthru
          _
        // Predicated region
        $region93: #{dqn_forward.1} parent=11 // pred_check
          %p711 = pneg %p527
        $region94: #{dqn_forward.1} parent=11 // pred_check_branch
          %713 = sbr.rel (%p711) target = $region96
        $region95: #{dqn_forward.1} parent=11 // pred_region
          _
        $region96: #{dqn_forward.1} parent=11 // pred_fallthru
          _
        // Predicated region
        $region97: #{dqn_forward.1} parent=11 // pred_check
          %p714 = pneg %p548
        $region98: #{dqn_forward.1} parent=11 // pred_check_branch
          %716 = sbr.rel (%p714) target = $region100
        $region99: #{dqn_forward.1} parent=11 // pred_region
          _
        $region100: #{dqn_forward.1} parent=11 // pred_fallthru
          _
        // Predicated region
        $region101: #{dqn_forward.1} parent=11 // pred_check
          %p717 = pneg %p569
        $region102: #{dqn_forward.1} parent=11 // pred_check_branch
          %719 = sbr.rel (%p717) target = $region104
        $region103: #{dqn_forward.1} parent=11 // pred_region
          _
        $region104: #{dqn_forward.1} parent=11 // pred_fallthru
          _
        // Predicated region
        $region105: #{dqn_forward.1} parent=11 // pred_check
          %p720 = pneg %p590
        $region106: #{dqn_forward.1} parent=11 // pred_check_branch
          %722 = sbr.rel (%p720) target = $region108
        $region107: #{dqn_forward.1} parent=11 // pred_region
          _
        $region108: #{dqn_forward.1} parent=11 // pred_fallthru
          _
      $region12: #{dqn_forward.1} parent=5 // pred_fallthru
        _
      %p723 = scmp.lt.s32.totalorder %s34, 2
      // Predicated region
      $region109: #{dqn_forward.1} parent=5 // pred_check
        %p724 = pneg %p723
      $region110: #{dqn_forward.1} parent=5 // pred_check_branch
        %726 = sbr.rel (%p724) target = $region112
      $region111: #{dqn_forward.1} parent=5 // pred_region
        // Predicated region
        $region113: #{dqn_forward.1} parent=111 // pred_check
          %p727 = pneg %p54
        $region114: #{dqn_forward.1} parent=111 // pred_check_branch
          %729 = sbr.rel (%p727) target = $region116
        $region115: #{dqn_forward.1} parent=111 // pred_region
          %s730 = smul.u32 24, %s34
          %p731 = scmp.lt.s32.totalorder %s730, 47
          %s732 = scalar_select %p731, %s730, 47
          %s733 = smul.addr %s732, 8
          %s734 = scalar_lea.vmem %s0, %s733
          %s735 = smul.u32 24, %s34
        $region116: #{dqn_forward.1} parent=111 // pred_fallthru
          _
        // Predicated region
        $region117: #{dqn_forward.1} parent=111 // pred_check
          %p736 = pneg %p80
        $region118: #{dqn_forward.1} parent=111 // pred_check_branch
          %738 = sbr.rel (%p736) target = $region120
        $region119: #{dqn_forward.1} parent=111 // pred_region
          %p739 = scmp.lt.s32.totalorder %s34, 1
          %s740 = scalar_select %p739, %s34, 1
          %s741 = smul.addr %s740, 8
          %s742 = scalar_lea.vmem %s1, %s741
        $region120: #{dqn_forward.1} parent=111 // pred_fallthru
          _
      $region112: #{dqn_forward.1} parent=5 // pred_fallthru
        _
      %p743 = scmp.le.s32.totalorder 1, %s34
      %p744 = scmp.lt.s32.totalorder %s34, 3
      %p745 = pnand %p743, %p744
      %p746 = pneg %p745
      // Predicated region
      $region121: #{dqn_forward.1} parent=5 // pred_check
        _
      $region122: #{dqn_forward.1} parent=5 // pred_check_branch
        %748 = sbr.rel (%p745) target = $region124
      $region123: #{dqn_forward.1} parent=5 // pred_region
        %s749 = ssub.s32 %s34, 1
        // Predicated region
        $region125: #{dqn_forward.1} parent=123 // pred_check
          %p750 = pneg %p107
        $region126: #{dqn_forward.1} parent=123 // pred_check_branch
          %752 = sbr.rel (%p750) target = $region128
        $region127: #{dqn_forward.1} parent=123 // pred_region
          %753 = dma.done [#allocation3], 384
        $region128: #{dqn_forward.1} parent=123 // pred_fallthru
          _
        // Predicated region
        $region129: #{dqn_forward.1} parent=123 // pred_check
          %p754 = pneg %p296
        $region130: #{dqn_forward.1} parent=123 // pred_check_branch
          %756 = sbr.rel (%p754) target = $region132
        $region131: #{dqn_forward.1} parent=123 // pred_region
          %757 = dma.done [#allocation5], 768
        $region132: #{dqn_forward.1} parent=123 // pred_fallthru
          _
        %s758 = smul.u32 24, %s39
        %p759 = scmp.lt.s32.totalorder %s758, 47
        %s760 = scalar_select %p759, %s758, 47
        %s761 = smul.addr %s760, 8
        %s762 = scalar_lea.vmem %s0, %s761
        %p763 = pneg %p60
        %p764 = pneg %p57
        %p765 = scmp.lt.s32.totalorder %s39, 1
        %s766 = scalar_select %p765, %s39, 1
        %s767 = smul.addr %s766, 8
        %s768 = scalar_lea.vmem %s1, %s767
        %p769 = pneg %p86
        %p770 = pneg %p83
        %p771 = pneg %p107
        %p772 = pneg %p104
        %p773 = pneg %p128
        %p774 = pneg %p125
        %p775 = pneg %p149
        %p776 = pneg %p146
        %p777 = pneg %p170
        %p778 = pneg %p167
        %p779 = pneg %p191
        %p780 = pneg %p188
        %p781 = pneg %p212
        %p782 = pneg %p209
        %p783 = pneg %p233
        %p784 = pneg %p230
        %p785 = pneg %p254
        %p786 = pneg %p251
        %p787 = pneg %p275
        %p788 = pneg %p272
        %p789 = pneg %p296
        %p790 = pneg %p293
        %p791 = pneg %p317
        %p792 = pneg %p314
        %p793 = pneg %p338
        %p794 = pneg %p335
        %p795 = pneg %p359
        %p796 = pneg %p356
        %p797 = pneg %p380
        %p798 = pneg %p377
        %p799 = pneg %p401
        %p800 = pneg %p398
        %p801 = pneg %p422
        %p802 = pneg %p419
        %p803 = pneg %p443
        %p804 = pneg %p440
        %p805 = pneg %p464
        %p806 = pneg %p461
        %p807 = pneg %p485
        %p808 = pneg %p482
        %p809 = pneg %p506
        %p810 = pneg %p503
        %p811 = pneg %p527
        %p812 = pneg %p524
        %p813 = pneg %p548
        %p814 = pneg %p545
        %p815 = pneg %p569
        %p816 = pneg %p566
        %p817 = pneg %p590
        %p818 = pneg %p587
        %p819 = pneg %p616
        %p820 = pneg %p613
        %p821 = scmp.lt.s32.totalorder %s39, 1
        %s822 = scalar_select %p821, %s39, 1
        %s823 = smul.addr %s822, 8
        %s824 = scalar_lea.vmem %s26, %s823
        %s825 = smul.u32 24, %s39
        %p826 = scmp.lt.s32.totalorder %s825, 47
        %s827 = scalar_select %p826, %s825, 47
        %s828 = smul.addr %s827, 8
        %s829 = scalar_lea.vmem %s0, %s828
        %s830 = smul.u32 24, %s39
        %p831 = scmp.lt.s32.totalorder %s39, 1
        %s832 = scalar_select %p831, %s39, 1
        %s833 = smul.addr %s832, 8
        %s834 = scalar_lea.vmem %s1, %s833
        %p835 = scmp.lt.s32.totalorder %s39, 1
        %s836 = scalar_select %p835, %s39, 1
        %s837 = smul.addr %s836, 8
        %s838 = scalar_lea.vmem %s26, %s837
        %v839 = vld [vmem:[%s829] sm:$0xff]
        %v840 = vld [vmem:[%s829 + $0x8] sm:$0xff]
        %v841 = vld [vmem:[%s829 + $0x10] sm:$0xff]
        %v842 = vld [vmem:[%s829 + $0x18] sm:$0xff]
        %v843 = vld [vmem:[%s829 + $0x20] sm:$0xff]
        %v844 = vld [vmem:[%s829 + $0x28] sm:$0xff]
        %v845 = vld [vmem:[%s829 + $0x30] sm:$0xff]
        %v846 = vld [vmem:[%s829 + $0x38] sm:$0xff]
        %v847 = vld [vmem:[%s829 + $0x40] sm:$0xff]
        %v848 = vld [vmem:[%s829 + $0x48] sm:$0xff]
        %v849 = vld [vmem:[%s829 + $0x50] sm:$0xff]
        %v850 = vld [vmem:[%s829 + $0x58] sm:$0xff]
        %v851 = vld [vmem:[%s829 + $0x60] sm:$0xff]
        %v852 = vld [vmem:[%s829 + $0x68] sm:$0xff]
        %v853 = vld [vmem:[%s829 + $0x70] sm:$0xff]
        %v854 = vld [vmem:[%s829 + $0x78] sm:$0xff]
        %v855 = vld [vmem:[%s829 + $0x80] sm:$0xff]
        %v856 = vld [vmem:[%s829 + $0x88] sm:$0xff]
        %v857 = vld [vmem:[%s829 + $0x90] sm:$0xff]
        %v858 = vld [vmem:[%s829 + $0x98] sm:$0xff]
        %v859 = vld [vmem:[%s829 + $0xa0] sm:$0xff]
        %v860 = vld [vmem:[%s829 + $0xa8] sm:$0xff]
        %v861 = vld [vmem:[%s829 + $0xb0] sm:$0xff]
        %v862 = vld [vmem:[%s829 + $0xb8] sm:$0xff]
        %v863 = vld [vmem:[%s6] sm:$0xff]
        %v864 = vld [vmem:[%s6 + $0x8] sm:$0xff]
        %v865 = vld [vmem:[%s6 + $0x10] sm:$0xff]
        %v866 = vld [vmem:[%s6 + $0x18] sm:$0xff]
        %v867 = vld [vmem:[%s6 + $0x20] sm:$0xff]
        %v868 = vld [vmem:[%s6 + $0x28] sm:$0xff]
        %v869 = vld [vmem:[%s6 + $0x30] sm:$0xff]
        %v870 = vld [vmem:[%s6 + $0x38] sm:$0xff]
        %v871 = vld [vmem:[%s6 + $0x40] sm:$0xff]
        %v872 = vld [vmem:[%s6 + $0x48] sm:$0xff]
        %v873 = vld [vmem:[%s6 + $0x50] sm:$0xff]
        %v874 = vld [vmem:[%s6 + $0x58] sm:$0xff]
        %v875 = vld [vmem:[%s6 + $0x60] sm:$0xff]
        %v876 = vld [vmem:[%s6 + $0x68] sm:$0xff]
        %v877 = vld [vmem:[%s6 + $0x70] sm:$0xff]
        %v878 = vld [vmem:[%s6 + $0x78] sm:$0xff]
        %v879 = vld [vmem:[%s6 + $0x80] sm:$0xff]
        %v880 = vld [vmem:[%s6 + $0x88] sm:$0xff]
        %v881 = vld [vmem:[%s6 + $0x90] sm:$0xff]
        %v882 = vld [vmem:[%s6 + $0x98] sm:$0xff]
        %v883 = vld [vmem:[%s6 + $0xa0] sm:$0xff]
        %v884 = vld [vmem:[%s6 + $0xa8] sm:$0xff]
        %v885 = vld [vmem:[%s6 + $0xb0] sm:$0xff]
        %v886 = vld [vmem:[%s6 + $0xb8] sm:$0xff]
        %v887 = vrot.slane %v839, 7
        %v888 = vrot.slane %v840, 7
        %v889 = vrot.slane %v841, 7
        %v890 = vrot.slane %v842, 7
        %v891 = vrot.slane %v843, 7
        %v892 = vrot.slane %v844, 7
        %v893 = vrot.slane %v845, 7
        %v894 = vrot.slane %v846, 7
        %v895 = vrot.slane %v847, 7
        %v896 = vrot.slane %v848, 7
        %v897 = vrot.slane %v849, 7
        %v898 = vrot.slane %v850, 7
        %v899 = vrot.slane %v851, 7
        %v900 = vrot.slane %v852, 7
        %v901 = vrot.slane %v853, 7
        %v902 = vrot.slane %v854, 7
        %v903 = vrot.slane %v855, 7
        %v904 = vrot.slane %v856, 7
        %v905 = vrot.slane %v857, 7
        %v906 = vrot.slane %v858, 7
        %v907 = vrot.slane %v859, 7
        %v908 = vrot.slane %v860, 7
        %v909 = vrot.slane %v861, 7
        %v910 = vrot.slane %v862, 7
        %v911 = vlaneseq
        %v912 = vshrl.u32 %v911, 7
        %vm913 = vcmp.lt.s32.totalorder %v912, 1
        %v914 = vsel %vm913, %v909, %v910
        %v915 = vsel %vm913, %v908, %v909
        %v916 = vsel %vm913, %v907, %v908
        %v917 = vsel %vm913, %v906, %v907
        %v918 = vsel %vm913, %v905, %v906
        %v919 = vsel %vm913, %v904, %v905
        %v920 = vsel %vm913, %v903, %v904
        %v921 = vsel %vm913, %v902, %v903
        %v922 = vsel %vm913, %v901, %v902
        %v923 = vsel %vm913, %v900, %v901
        %v924 = vsel %vm913, %v899, %v900
        %v925 = vsel %vm913, %v898, %v899
        %v926 = vsel %vm913, %v897, %v898
        %v927 = vsel %vm913, %v896, %v897
        %v928 = vsel %vm913, %v895, %v896
        %v929 = vsel %vm913, %v894, %v895
        %v930 = vsel %vm913, %v893, %v894
        %v931 = vsel %vm913, %v892, %v893
        %v932 = vsel %vm913, %v891, %v892
        %v933 = vsel %vm913, %v890, %v891
        %v934 = vsel %vm913, %v889, %v890
        %v935 = vsel %vm913, %v888, %v889
        %v936 = vsel %vm913, %v887, %v888
        %v937 = vsel %vm913, %v910, %v887
        %v938 = vld [vmem:[%s4] sm:$0xff]
        %v939 = vld [vmem:[%s4 + $0x8] sm:$0xff]
        %v940 = vld [vmem:[%s4 + $0x10] sm:$0xff]
        %v941 = vld [vmem:[%s4 + $0x18] sm:$0xff]
        %v942 = vld [vmem:[%s4 + $0x20] sm:$0xff]
        %v943 = vld [vmem:[%s4 + $0x28] sm:$0xff]
        %v944 = vld [vmem:[%s4 + $0x30] sm:$0xff]
        %v945 = vld [vmem:[%s4 + $0x38] sm:$0xff]
        %v946 = vld [vmem:[%s4 + $0x40] sm:$0xff]
        %v947 = vld [vmem:[%s4 + $0x48] sm:$0xff]
        %v948 = vld [vmem:[%s4 + $0x50] sm:$0xff]
        %v949 = vld [vmem:[%s4 + $0x58] sm:$0xff]
        %v950 = vld [vmem:[%s4 + $0x60] sm:$0xff]
        %v951 = vld [vmem:[%s4 + $0x68] sm:$0xff]
        %v952 = vld [vmem:[%s4 + $0x70] sm:$0xff]
        %v953 = vld [vmem:[%s4 + $0x78] sm:$0xff]
        %v954 = vld [vmem:[%s4 + $0x80] sm:$0xff]
        %v955 = vld [vmem:[%s4 + $0x88] sm:$0xff]
        %v956 = vld [vmem:[%s4 + $0x90] sm:$0xff]
        %v957 = vld [vmem:[%s4 + $0x98] sm:$0xff]
        %v958 = vld [vmem:[%s4 + $0xa0] sm:$0xff]
        %v959 = vld [vmem:[%s4 + $0xa8] sm:$0xff]
        %v960 = vld [vmem:[%s4 + $0xb0] sm:$0xff]
        %v961 = vld [vmem:[%s4 + $0xb8] sm:$0xff]
        %v962 = vmul.f32 %v937, %v938
        %v963 = vmul.f32 %v936, %v939
        %v964 = vmul.f32 %v935, %v940
        %v965 = vmul.f32 %v934, %v941
        %v966 = vmul.f32 %v933, %v942
        %v967 = vmul.f32 %v932, %v943
        %v968 = vmul.f32 %v931, %v944
        %v969 = vmul.f32 %v930, %v945
        %v970 = vmul.f32 %v929, %v946
        %v971 = vmul.f32 %v928, %v947
        %v972 = vmul.f32 %v927, %v948
        %v973 = vmul.f32 %v926, %v949
        %v974 = vmul.f32 %v925, %v950
        %v975 = vmul.f32 %v924, %v951
        %v976 = vmul.f32 %v923, %v952
        %v977 = vmul.f32 %v922, %v953
        %v978 = vmul.f32 %v921, %v954
        %v979 = vmul.f32 %v920, %v955
        %v980 = vmul.f32 %v919, %v956
        %v981 = vmul.f32 %v918, %v957
        %v982 = vmul.f32 %v917, %v958
        %v983 = vmul.f32 %v916, %v959
        %v984 = vmul.f32 %v915, %v960
        %v985 = vmul.f32 %v914, %v961
        %v986 = vrot.slane %v839, 1
        %v987 = vrot.slane %v840, 1
        %v988 = vrot.slane %v841, 1
        %v989 = vrot.slane %v842, 1
        %v990 = vrot.slane %v843, 1
        %v991 = vrot.slane %v844, 1
        %v992 = vrot.slane %v845, 1
        %v993 = vrot.slane %v846, 1
        %v994 = vrot.slane %v847, 1
        %v995 = vrot.slane %v848, 1
        %v996 = vrot.slane %v849, 1
        %v997 = vrot.slane %v850, 1
        %v998 = vrot.slane %v851, 1
        %v999 = vrot.slane %v852, 1
        %v1000 = vrot.slane %v853, 1
        %v1001 = vrot.slane %v854, 1
        %v1002 = vrot.slane %v855, 1
        %v1003 = vrot.slane %v856, 1
        %v1004 = vrot.slane %v857, 1
        %v1005 = vrot.slane %v858, 1
        %v1006 = vrot.slane %v859, 1
        %v1007 = vrot.slane %v860, 1
        %v1008 = vrot.slane %v861, 1
        %v1009 = vrot.slane %v862, 1
        %vm1010 = vcmp.lt.s32.totalorder %v912, 7
        %v1011 = vsel %vm1010, %v1008, %v1009
        %v1012 = vsel %vm1010, %v1007, %v1008
        %v1013 = vsel %vm1010, %v1006, %v1007
        %v1014 = vsel %vm1010, %v1005, %v1006
        %v1015 = vsel %vm1010, %v1004, %v1005
        %v1016 = vsel %vm1010, %v1003, %v1004
        %v1017 = vsel %vm1010, %v1002, %v1003
        %v1018 = vsel %vm1010, %v1001, %v1002
        %v1019 = vsel %vm1010, %v1000, %v1001
        %v1020 = vsel %vm1010, %v999, %v1000
        %v1021 = vsel %vm1010, %v998, %v999
        %v1022 = vsel %vm1010, %v997, %v998
        %v1023 = vsel %vm1010, %v996, %v997
        %v1024 = vsel %vm1010, %v995, %v996
        %v1025 = vsel %vm1010, %v994, %v995
        %v1026 = vsel %vm1010, %v993, %v994
        %v1027 = vsel %vm1010, %v992, %v993
        %v1028 = vsel %vm1010, %v991, %v992
        %v1029 = vsel %vm1010, %v990, %v991
        %v1030 = vsel %vm1010, %v989, %v990
        %v1031 = vsel %vm1010, %v988, %v989
        %v1032 = vsel %vm1010, %v987, %v988
        %v1033 = vsel %vm1010, %v986, %v987
        %v1034 = vsel %vm1010, %v1009, %v986
        %s1035 = scalar_lea.vmem %s4, 192
        %v1036 = vld [vmem:[%s1035] sm:$0xff]
        %v1037 = vld [vmem:[%s1035 + $0x8] sm:$0xff]
        %v1038 = vld [vmem:[%s1035 + $0x10] sm:$0xff]
        %v1039 = vld [vmem:[%s1035 + $0x18] sm:$0xff]
        %v1040 = vld [vmem:[%s1035 + $0x20] sm:$0xff]
        %v1041 = vld [vmem:[%s1035 + $0x28] sm:$0xff]
        %v1042 = vld [vmem:[%s1035 + $0x30] sm:$0xff]
        %v1043 = vld [vmem:[%s1035 + $0x38] sm:$0xff]
        %v1044 = vld [vmem:[%s1035 + $0x40] sm:$0xff]
        %v1045 = vld [vmem:[%s1035 + $0x48] sm:$0xff]
        %v1046 = vld [vmem:[%s1035 + $0x50] sm:$0xff]
        %v1047 = vld [vmem:[%s1035 + $0x58] sm:$0xff]
        %v1048 = vld [vmem:[%s1035 + $0x60] sm:$0xff]
        %v1049 = vld [vmem:[%s1035 + $0x68] sm:$0xff]
        %v1050 = vld [vmem:[%s1035 + $0x70] sm:$0xff]
        %v1051 = vld [vmem:[%s1035 + $0x78] sm:$0xff]
        %v1052 = vld [vmem:[%s1035 + $0x80] sm:$0xff]
        %v1053 = vld [vmem:[%s1035 + $0x88] sm:$0xff]
        %v1054 = vld [vmem:[%s1035 + $0x90] sm:$0xff]
        %v1055 = vld [vmem:[%s1035 + $0x98] sm:$0xff]
        %v1056 = vld [vmem:[%s1035 + $0xa0] sm:$0xff]
        %v1057 = vld [vmem:[%s1035 + $0xa8] sm:$0xff]
        %v1058 = vld [vmem:[%s1035 + $0xb0] sm:$0xff]
        %v1059 = vld [vmem:[%s1035 + $0xb8] sm:$0xff]
        %v1060 = vmul.f32 %v1033, %v1036
        %v1061 = vmul.f32 %v1032, %v1037
        %v1062 = vmul.f32 %v1031, %v1038
        %v1063 = vmul.f32 %v1030, %v1039
        %v1064 = vmul.f32 %v1029, %v1040
        %v1065 = vmul.f32 %v1028, %v1041
        %v1066 = vmul.f32 %v1027, %v1042
        %v1067 = vmul.f32 %v1026, %v1043
        %v1068 = vmul.f32 %v1025, %v1044
        %v1069 = vmul.f32 %v1024, %v1045
        %v1070 = vmul.f32 %v1023, %v1046
        %v1071 = vmul.f32 %v1022, %v1047
        %v1072 = vmul.f32 %v1021, %v1048
        %v1073 = vmul.f32 %v1020, %v1049
        %v1074 = vmul.f32 %v1019, %v1050
        %v1075 = vmul.f32 %v1018, %v1051
        %v1076 = vmul.f32 %v1017, %v1052
        %v1077 = vmul.f32 %v1016, %v1053
        %v1078 = vmul.f32 %v1015, %v1054
        %v1079 = vmul.f32 %v1014, %v1055
        %v1080 = vmul.f32 %v1013, %v1056
        %v1081 = vmul.f32 %v1012, %v1057
        %v1082 = vmul.f32 %v1011, %v1058
        %v1083 = vmul.f32 %v1034, %v1059
        %v1084 = vld [vmem:[#allocation2] sm:$0xff]
        %s1085 = scalar_lea.vmem [#allocation2], 8
        %v1086 = vld [vmem:[%s1085] sm:$0xff]
        %vm1087 = vcmask 64512
        %v1089 = vsel %vm1087, %v839, 0
        %v1092 = vsel %vm1087, %v840, 0
        %v1095 = vsel %vm1087, %v841, 0
        %v1098 = vsel %vm1087, %v842, 0
        %v1101 = vsel %vm1087, %v843, 0
        %v1104 = vsel %vm1087, %v844, 0
        %v1107 = vsel %vm1087, %v845, 0
        %v1110 = vsel %vm1087, %v846, 0
        %v1113 = vsel %vm1087, %v847, 0
        %v1116 = vsel %vm1087, %v848, 0
        %v1119 = vsel %vm1087, %v849, 0
        %v1122 = vsel %vm1087, %v850, 0
        %v1125 = vsel %vm1087, %v851, 0
        %v1128 = vsel %vm1087, %v852, 0
        %v1131 = vsel %vm1087, %v853, 0
        %v1134 = vsel %vm1087, %v854, 0
        %v1137 = vsel %vm1087, %v855, 0
        %v1140 = vsel %vm1087, %v856, 0
        %v1143 = vsel %vm1087, %v857, 0
        %v1146 = vsel %vm1087, %v858, 0
        %v1149 = vsel %vm1087, %v859, 0
        %v1152 = vsel %vm1087, %v860, 0
        %v1155 = vsel %vm1087, %v861, 0
        %v1158 = vsel %vm1087, %v862, 0
        %1160 = vmatprep.subr.mxu0 0.0
        %1161 = vmatpush1.msra.mxu0 %v1086
        %1162 = vmatprep.subr.mxu0 0.0
        %1163 = vmatpush1.msra.mxu0 0.0
        %1164 = vmatprep.subr.mxu0 0.0
        %1165 = vmatpush1.msra.mxu0 0.0
        %1166 = vmatprep.subr.mxu0 0.0
        %1167 = vmatpush1.msra.mxu0 0.0
        %1168 = vmatprep.subr.mxu0 0.0
        %1169 = vmatpush1.msra.mxu0 0.0
        %1170 = vmatprep.subr.mxu0 0.0
        %1171 = vmatpush1.msra.mxu0 0.0
        %1172 = vmatprep.subr.mxu0 0.0
        %1173 = vmatpush1.msra.mxu0 0.0
        %1174 = vmatprep.subr.mxu0 0.0
        %1175 = vmatpush1.msra.mxu0 0.0
        %1176 = vmatprep.subr.mxu0 0.0
        %1177 = vmatpush1.msra.mxu0 0.0
        %1178 = vmatprep.subr.mxu0 0.0
        %1179 = vmatpush1.msra.mxu0 0.0
        %1180 = vmatprep.subr.mxu0 0.0
        %1181 = vmatpush1.msra.mxu0 0.0
        %1182 = vmatprep.subr.mxu0 0.0
        %1183 = vmatpush1.msra.mxu0 0.0
        %1184 = vmatprep.subr.mxu0 0.0
        %1185 = vmatpush1.msra.mxu0 0.0
        %1186 = vmatprep.subr.mxu0 0.0
        %1187 = vmatpush1.msra.mxu0 0.0
        %1188 = vmatprep.subr.mxu0 0.0
        %1189 = vmatpush1.msra.mxu0 0.0
        %1190 = vmatprep.subr.mxu0 0.0
        %1191 = vmatpush1.msra.mxu0 0.0
        %1192 = vmatprep.subr.mxu0 0.0
        %1193 = vmatpush1.msra.mxu0 0.0
        %1194 = vmatprep.subr.mxu0 0.0
        %1195 = vmatpush1.msra.mxu0 0.0
        %1196 = vmatprep.subr.mxu0 0.0
        %1197 = vmatpush1.msra.mxu0 0.0
        %1198 = vmatprep.subr.mxu0 0.0
        %1199 = vmatpush1.msra.mxu0 0.0
        %1200 = vmatprep.subr.mxu0 0.0
        %1201 = vmatpush1.msra.mxu0 0.0
        %1202 = vmatprep.subr.mxu0 0.0
        %1203 = vmatpush1.msra.mxu0 0.0
        %1204 = vmatprep.subr.mxu0 0.0
        %1205 = vmatpush1.msra.mxu0 0.0
        %1206 = vmatprep.subr.mxu0 0.0
        %1207 = vmatpush1.msra.mxu0 0.0
        %1208 = vmatprep.subr.mxu0 0.0
        %1209 = vmatpush1.msra.mxu0 0.0
        %1210 = vmatprep.subr.mxu0 0.0
        %1211 = vmatpush1.msra.mxu0 0.0
        %1212 = vmatprep.subr.mxu0 0.0
        %1213 = vmatpush1.msra.mxu0 0.0
        %1214 = vmatprep.subr.mxu0 0.0
        %1215 = vmatpush1.msra.mxu0 0.0
        %1216 = vmatprep.subr.mxu0 0.0
        %1217 = vmatpush1.msra.mxu0 0.0
        %1218 = vmatprep.subr.mxu0 0.0
        %1219 = vmatpush1.msra.mxu0 0.0
        %1220 = vmatprep.subr.mxu0 0.0
        %1221 = vmatpush1.msra.mxu0 0.0
        %1222 = vmatprep.subr.mxu0 0.0
        %1223 = vmatpush1.msra.mxu0 0.0
        %1224 = vmatprep.mubr.f32.mxu0 0.0
        %1225 = vmatmul.mubr.f32.gmra.mrb[0].mxu0 %v1089
        %v1226 = vpop.f32.mrb[0].mxu0
        %v1227 = vadd.f32 0.0, %v1226
        %v1228 = vpop.f32.mrb[0].mxu0
        %1229 = vmatprep.mubr.f32.mxu0 0.0
        %1230 = vmatmul.mubr.f32.gmra.mrb[0].mxu0 %v1092
        %v1231 = vpop.f32.mrb[0].mxu0
        %v1232 = vadd.f32 0.0, %v1231
        %v1233 = vpop.f32.mrb[0].mxu0
        %1234 = vmatprep.mubr.f32.mxu0 0.0
        %1235 = vmatmul.mubr.f32.gmra.mrb[0].mxu0 %v1095
        %v1236 = vpop.f32.mrb[0].mxu0
        %v1237 = vadd.f32 0.0, %v1236
        %v1238 = vpop.f32.mrb[0].mxu0
        %1239 = vmatprep.mubr.f32.mxu0 0.0
        %1240 = vmatmul.mubr.f32.gmra.mrb[0].mxu0 %v1098
        %v1241 = vpop.f32.mrb[0].mxu0
        %v1242 = vadd.f32 0.0, %v1241
        %v1243 = vpop.f32.mrb[0].mxu0
        %1244 = vmatprep.mubr.f32.mxu0 0.0
        %1245 = vmatmul.mubr.f32.gmra.mrb[0].mxu0 %v1101
        %v1246 = vpop.f32.mrb[0].mxu0
        %v1247 = vadd.f32 0.0, %v1246
        %v1248 = vpop.f32.mrb[0].mxu0
        %1249 = vmatprep.mubr.f32.mxu0 0.0
        %1250 = vmatmul.mubr.f32.gmra.mrb[0].mxu0 %v1104
        %v1251 = vpop.f32.mrb[0].mxu0
        %v1252 = vadd.f32 0.0, %v1251
        %v1253 = vpop.f32.mrb[0].mxu0
        %1254 = vmatprep.mubr.f32.mxu0 0.0
        %1255 = vmatmul.mubr.f32.gmra.mrb[0].mxu0 %v1107
        %v1256 = vpop.f32.mrb[0].mxu0
        %v1257 = vadd.f32 0.0, %v1256
        %v1258 = vpop.f32.mrb[0].mxu0
        %1259 = vmatprep.mubr.f32.mxu0 0.0
        %1260 = vmatmul.mubr.f32.gmra.mrb[0].mxu0 %v1110
        %v1261 = vpop.f32.mrb[0].mxu0
        %v1262 = vadd.f32 0.0, %v1261
        %v1263 = vpop.f32.mrb[0].mxu0
        %1264 = vmatprep.mubr.f32.mxu0 0.0
        %1265 = vmatmul.mubr.f32.gmra.mrb[0].mxu0 %v1113
        %v1266 = vpop.f32.mrb[0].mxu0
        %v1267 = vadd.f32 0.0, %v1266
        %v1268 = vpop.f32.mrb[0].mxu0
        %1269 = vmatprep.mubr.f32.mxu0 0.0
        %1270 = vmatmul.mubr.f32.gmra.mrb[0].mxu0 %v1116
        %v1271 = vpop.f32.mrb[0].mxu0
        %v1272 = vadd.f32 0.0, %v1271
        %v1273 = vpop.f32.mrb[0].mxu0
        %1274 = vmatprep.mubr.f32.mxu0 0.0
        %1275 = vmatmul.mubr.f32.gmra.mrb[0].mxu0 %v1119
        %v1276 = vpop.f32.mrb[0].mxu0
        %v1277 = vadd.f32 0.0, %v1276
        %v1278 = vpop.f32.mrb[0].mxu0
        %1279 = vmatprep.mubr.f32.mxu0 0.0
        %1280 = vmatmul.mubr.f32.gmra.mrb[0].mxu0 %v1122
        %v1281 = vpop.f32.mrb[0].mxu0
        %v1282 = vadd.f32 0.0, %v1281
        %v1283 = vpop.f32.mrb[0].mxu0
        %1284 = vmatprep.mubr.f32.mxu0 0.0
        %1285 = vmatmul.mubr.f32.gmra.mrb[0].mxu0 %v1125
        %v1286 = vpop.f32.mrb[0].mxu0
        %v1287 = vadd.f32 0.0, %v1286
        %v1288 = vpop.f32.mrb[0].mxu0
        %1289 = vmatprep.mubr.f32.mxu0 0.0
        %1290 = vmatmul.mubr.f32.gmra.mrb[0].mxu0 %v1128
        %v1291 = vpop.f32.mrb[0].mxu0
        %v1292 = vadd.f32 0.0, %v1291
        %v1293 = vpop.f32.mrb[0].mxu0
        %1294 = vmatprep.mubr.f32.mxu0 0.0
        %1295 = vmatmul.mubr.f32.gmra.mrb[0].mxu0 %v1131
        %v1296 = vpop.f32.mrb[0].mxu0
        %v1297 = vadd.f32 0.0, %v1296
        %v1298 = vpop.f32.mrb[0].mxu0
        %1299 = vmatprep.mubr.f32.mxu0 0.0
        %1300 = vmatmul.mubr.f32.gmra.mrb[0].mxu0 %v1134
        %v1301 = vpop.f32.mrb[0].mxu0
        %v1302 = vadd.f32 0.0, %v1301
        %v1303 = vpop.f32.mrb[0].mxu0
        %1304 = vmatprep.mubr.f32.mxu0 0.0
        %1305 = vmatmul.mubr.f32.gmra.mrb[0].mxu0 %v1137
        %v1306 = vpop.f32.mrb[0].mxu0
        %v1307 = vadd.f32 0.0, %v1306
        %v1308 = vpop.f32.mrb[0].mxu0
        %1309 = vmatprep.mubr.f32.mxu0 0.0
        %1310 = vmatmul.mubr.f32.gmra.mrb[0].mxu0 %v1140
        %v1311 = vpop.f32.mrb[0].mxu0
        %v1312 = vadd.f32 0.0, %v1311
        %v1313 = vpop.f32.mrb[0].mxu0
        %1314 = vmatprep.mubr.f32.mxu0 0.0
        %1315 = vmatmul.mubr.f32.gmra.mrb[0].mxu0 %v1143
        %v1316 = vpop.f32.mrb[0].mxu0
        %v1317 = vadd.f32 0.0, %v1316
        %v1318 = vpop.f32.mrb[0].mxu0
        %1319 = vmatprep.mubr.f32.mxu0 0.0
        %1320 = vmatmul.mubr.f32.gmra.mrb[0].mxu0 %v1146
        %v1321 = vpop.f32.mrb[0].mxu0
        %v1322 = vadd.f32 0.0, %v1321
        %v1323 = vpop.f32.mrb[0].mxu0
        %1324 = vmatprep.mubr.f32.mxu0 0.0
        %1325 = vmatmul.mubr.f32.gmra.mrb[0].mxu0 %v1149
        %v1326 = vpop.f32.mrb[0].mxu0
        %v1327 = vadd.f32 0.0, %v1326
        %v1328 = vpop.f32.mrb[0].mxu0
        %1329 = vmatprep.mubr.f32.mxu0 0.0
        %1330 = vmatmul.mubr.f32.gmra.mrb[0].mxu0 %v1152
        %v1331 = vpop.f32.mrb[0].mxu0
        %v1332 = vadd.f32 0.0, %v1331
        %v1333 = vpop.f32.mrb[0].mxu0
        %1334 = vmatprep.mubr.f32.mxu0 0.0
        %1335 = vmatmul.mubr.f32.gmra.mrb[0].mxu0 %v1155
        %v1336 = vpop.f32.mrb[0].mxu0
        %v1337 = vadd.f32 0.0, %v1336
        %v1338 = vpop.f32.mrb[0].mxu0
        %1339 = vmatprep.mubr.f32.mxu0 0.0
        %1340 = vmatmul.mubr.f32.gmra.mrb[0].mxu0 %v1158
        %v1341 = vpop.f32.mrb[0].mxu0
        %v1342 = vadd.f32 0.0, %v1341
        %v1343 = vpop.f32.mrb[0].mxu0
        %1344 = vdwg.mxu0
        %v1346 = vsel %vm1087, %v962, 0
        %v1349 = vsel %vm1087, %v963, 0
        %v1352 = vsel %vm1087, %v964, 0
        %v1355 = vsel %vm1087, %v965, 0
        %v1358 = vsel %vm1087, %v966, 0
        %v1361 = vsel %vm1087, %v967, 0
        %v1364 = vsel %vm1087, %v968, 0
        %v1367 = vsel %vm1087, %v969, 0
        %v1370 = vsel %vm1087, %v970, 0
        %v1373 = vsel %vm1087, %v971, 0
        %v1376 = vsel %vm1087, %v972, 0
        %v1379 = vsel %vm1087, %v973, 0
        %v1382 = vsel %vm1087, %v974, 0
        %v1385 = vsel %vm1087, %v975, 0
        %v1388 = vsel %vm1087, %v976, 0
        %v1391 = vsel %vm1087, %v977, 0
        %v1394 = vsel %vm1087, %v978, 0
        %v1397 = vsel %vm1087, %v979, 0
        %v1400 = vsel %vm1087, %v980, 0
        %v1403 = vsel %vm1087, %v981, 0
        %v1406 = vsel %vm1087, %v982, 0
        %v1409 = vsel %vm1087, %v983, 0
        %v1412 = vsel %vm1087, %v984, 0
        %v1415 = vsel %vm1087, %v985, 0
        %1417 = vmatprep.subr.mxu0 0.0
        %1418 = vmatpush1.msra.mxu0 %v1084
        %1419 = vmatprep.subr.mxu0 0.0
        %1420 = vmatpush1.msra.mxu0 0.0
        %1421 = vmatprep.subr.mxu0 0.0
        %1422 = vmatpush1.msra.mxu0 0.0
        %1423 = vmatprep.subr.mxu0 0.0
        %1424 = vmatpush1.msra.mxu0 0.0
        %1425 = vmatprep.subr.mxu0 0.0
        %1426 = vmatpush1.msra.mxu0 0.0
        %1427 = vmatprep.subr.mxu0 0.0
        %1428 = vmatpush1.msra.mxu0 0.0
        %1429 = vmatprep.subr.mxu0 0.0
        %1430 = vmatpush1.msra.mxu0 0.0
        %1431 = vmatprep.subr.mxu0 0.0
        %1432 = vmatpush1.msra.mxu0 0.0
        %1433 = vmatprep.subr.mxu0 0.0
        %1434 = vmatpush1.msra.mxu0 0.0
        %1435 = vmatprep.subr.mxu0 0.0
        %1436 = vmatpush1.msra.mxu0 0.0
        %1437 = vmatprep.subr.mxu0 0.0
        %1438 = vmatpush1.msra.mxu0 0.0
        %1439 = vmatprep.subr.mxu0 0.0
        %1440 = vmatpush1.msra.mxu0 0.0
        %1441 = vmatprep.subr.mxu0 0.0
        %1442 = vmatpush1.msra.mxu0 0.0
        %1443 = vmatprep.subr.mxu0 0.0
        %1444 = vmatpush1.msra.mxu0 0.0
        %1445 = vmatprep.subr.mxu0 0.0
        %1446 = vmatpush1.msra.mxu0 0.0
        %1447 = vmatprep.subr.mxu0 0.0
        %1448 = vmatpush1.msra.mxu0 0.0
        %1449 = vmatprep.subr.mxu0 0.0
        %1450 = vmatpush1.msra.mxu0 0.0
        %1451 = vmatprep.subr.mxu0 0.0
        %1452 = vmatpush1.msra.mxu0 0.0
        %1453 = vmatprep.subr.mxu0 0.0
        %1454 = vmatpush1.msra.mxu0 0.0
        %1455 = vmatprep.subr.mxu0 0.0
        %1456 = vmatpush1.msra.mxu0 0.0
        %1457 = vmatprep.subr.mxu0 0.0
        %1458 = vmatpush1.msra.mxu0 0.0
        %1459 = vmatprep.subr.mxu0 0.0
        %1460 = vmatpush1.msra.mxu0 0.0
        %1461 = vmatprep.subr.mxu0 0.0
        %1462 = vmatpush1.msra.mxu0 0.0
        %1463 = vmatprep.subr.mxu0 0.0
        %1464 = vmatpush1.msra.mxu0 0.0
        %1465 = vmatprep.subr.mxu0 0.0
        %1466 = vmatpush1.msra.mxu0 0.0
        %1467 = vmatprep.subr.mxu0 0.0
        %1468 = vmatpush1.msra.mxu0 0.0
        %1469 = vmatprep.subr.mxu0 0.0
        %1470 = vmatpush1.msra.mxu0 0.0
        %1471 = vmatprep.subr.mxu0 0.0
        %1472 = vmatpush1.msra.mxu0 0.0
        %1473 = vmatprep.subr.mxu0 0.0
        %1474 = vmatpush1.msra.mxu0 0.0
        %1475 = vmatprep.subr.mxu0 0.0
        %1476 = vmatpush1.msra.mxu0 0.0
        %1477 = vmatprep.subr.mxu0 0.0
        %1478 = vmatpush1.msra.mxu0 0.0
        %1479 = vmatprep.subr.mxu0 0.0
        %1480 = vmatpush1.msra.mxu0 0.0
        %1481 = vmatprep.mubr.f32.mxu0 0.0
        %1482 = vmatmul.mubr.f32.gmra.mrb[0].mxu0 %v1346
        %v1483 = vpop.f32.mrb[0].mxu0
        %v1484 = vadd.f32 %v1227, %v1483
        %v1485 = vpop.f32.mrb[0].mxu0
        %1486 = vmatprep.mubr.f32.mxu0 0.0
        %1487 = vmatmul.mubr.f32.gmra.mrb[0].mxu0 %v1349
        %v1488 = vpop.f32.mrb[0].mxu0
        %v1489 = vadd.f32 %v1232, %v1488
        %v1490 = vpop.f32.mrb[0].mxu0
        %1491 = vmatprep.mubr.f32.mxu0 0.0
        %1492 = vmatmul.mubr.f32.gmra.mrb[0].mxu0 %v1352
        %v1493 = vpop.f32.mrb[0].mxu0
        %v1494 = vadd.f32 %v1237, %v1493
        %v1495 = vpop.f32.mrb[0].mxu0
        %1496 = vmatprep.mubr.f32.mxu0 0.0
        %1497 = vmatmul.mubr.f32.gmra.mrb[0].mxu0 %v1355
        %v1498 = vpop.f32.mrb[0].mxu0
        %v1499 = vadd.f32 %v1242, %v1498
        %v1500 = vpop.f32.mrb[0].mxu0
        %1501 = vmatprep.mubr.f32.mxu0 0.0
        %1502 = vmatmul.mubr.f32.gmra.mrb[0].mxu0 %v1358
        %v1503 = vpop.f32.mrb[0].mxu0
        %v1504 = vadd.f32 %v1247, %v1503
        %v1505 = vpop.f32.mrb[0].mxu0
        %1506 = vmatprep.mubr.f32.mxu0 0.0
        %1507 = vmatmul.mubr.f32.gmra.mrb[0].mxu0 %v1361
        %v1508 = vpop.f32.mrb[0].mxu0
        %v1509 = vadd.f32 %v1252, %v1508
        %v1510 = vpop.f32.mrb[0].mxu0
        %1511 = vmatprep.mubr.f32.mxu0 0.0
        %1512 = vmatmul.mubr.f32.gmra.mrb[0].mxu0 %v1364
        %v1513 = vpop.f32.mrb[0].mxu0
        %v1514 = vadd.f32 %v1257, %v1513
        %v1515 = vpop.f32.mrb[0].mxu0
        %1516 = vmatprep.mubr.f32.mxu0 0.0
        %1517 = vmatmul.mubr.f32.gmra.mrb[0].mxu0 %v1367
        %v1518 = vpop.f32.mrb[0].mxu0
        %v1519 = vadd.f32 %v1262, %v1518
        %v1520 = vpop.f32.mrb[0].mxu0
        %1521 = vmatprep.mubr.f32.mxu0 0.0
        %1522 = vmatmul.mubr.f32.gmra.mrb[0].mxu0 %v1370
        %v1523 = vpop.f32.mrb[0].mxu0
        %v1524 = vadd.f32 %v1267, %v1523
        %v1525 = vpop.f32.mrb[0].mxu0
        %1526 = vmatprep.mubr.f32.mxu0 0.0
        %1527 = vmatmul.mubr.f32.gmra.mrb[0].mxu0 %v1373
        %v1528 = vpop.f32.mrb[0].mxu0
        %v1529 = vadd.f32 %v1272, %v1528
        %v1530 = vpop.f32.mrb[0].mxu0
        %1531 = vmatprep.mubr.f32.mxu0 0.0
        %1532 = vmatmul.mubr.f32.gmra.mrb[0].mxu0 %v1376
        %v1533 = vpop.f32.mrb[0].mxu0
        %v1534 = vadd.f32 %v1277, %v1533
        %v1535 = vpop.f32.mrb[0].mxu0
        %1536 = vmatprep.mubr.f32.mxu0 0.0
        %1537 = vmatmul.mubr.f32.gmra.mrb[0].mxu0 %v1379
        %v1538 = vpop.f32.mrb[0].mxu0
        %v1539 = vadd.f32 %v1282, %v1538
        %v1540 = vpop.f32.mrb[0].mxu0
        %1541 = vmatprep.mubr.f32.mxu0 0.0
        %1542 = vmatmul.mubr.f32.gmra.mrb[0].mxu0 %v1382
        %v1543 = vpop.f32.mrb[0].mxu0
        %v1544 = vadd.f32 %v1287, %v1543
        %v1545 = vpop.f32.mrb[0].mxu0
        %1546 = vmatprep.mubr.f32.mxu0 0.0
        %1547 = vmatmul.mubr.f32.gmra.mrb[0].mxu0 %v1385
        %v1548 = vpop.f32.mrb[0].mxu0
        %v1549 = vadd.f32 %v1292, %v1548
        %v1550 = vpop.f32.mrb[0].mxu0
        %1551 = vmatprep.mubr.f32.mxu0 0.0
        %1552 = vmatmul.mubr.f32.gmra.mrb[0].mxu0 %v1388
        %v1553 = vpop.f32.mrb[0].mxu0
        %v1554 = vadd.f32 %v1297, %v1553
        %v1555 = vpop.f32.mrb[0].mxu0
        %1556 = vmatprep.mubr.f32.mxu0 0.0
        %1557 = vmatmul.mubr.f32.gmra.mrb[0].mxu0 %v1391
        %v1558 = vpop.f32.mrb[0].mxu0
        %v1559 = vadd.f32 %v1302, %v1558
        %v1560 = vpop.f32.mrb[0].mxu0
        %1561 = vmatprep.mubr.f32.mxu0 0.0
        %1562 = vmatmul.mubr.f32.gmra.mrb[0].mxu0 %v1394
        %v1563 = vpop.f32.mrb[0].mxu0
        %v1564 = vadd.f32 %v1307, %v1563
        %v1565 = vpop.f32.mrb[0].mxu0
        %1566 = vmatprep.mubr.f32.mxu0 0.0
        %1567 = vmatmul.mubr.f32.gmra.mrb[0].mxu0 %v1397
        %v1568 = vpop.f32.mrb[0].mxu0
        %v1569 = vadd.f32 %v1312, %v1568
        %v1570 = vpop.f32.mrb[0].mxu0
        %1571 = vmatprep.mubr.f32.mxu0 0.0
        %1572 = vmatmul.mubr.f32.gmra.mrb[0].mxu0 %v1400
        %v1573 = vpop.f32.mrb[0].mxu0
        %v1574 = vadd.f32 %v1317, %v1573
        %v1575 = vpop.f32.mrb[0].mxu0
        %1576 = vmatprep.mubr.f32.mxu0 0.0
        %1577 = vmatmul.mubr.f32.gmra.mrb[0].mxu0 %v1403
        %v1578 = vpop.f32.mrb[0].mxu0
        %v1579 = vadd.f32 %v1322, %v1578
        %v1580 = vpop.f32.mrb[0].mxu0
        %1581 = vmatprep.mubr.f32.mxu0 0.0
        %1582 = vmatmul.mubr.f32.gmra.mrb[0].mxu0 %v1406
        %v1583 = vpop.f32.mrb[0].mxu0
        %v1584 = vadd.f32 %v1327, %v1583
        %v1585 = vpop.f32.mrb[0].mxu0
        %1586 = vmatprep.mubr.f32.mxu0 0.0
        %1587 = vmatmul.mubr.f32.gmra.mrb[0].mxu0 %v1409
        %v1588 = vpop.f32.mrb[0].mxu0
        %v1589 = vadd.f32 %v1332, %v1588
        %v1590 = vpop.f32.mrb[0].mxu0
        %1591 = vmatprep.mubr.f32.mxu0 0.0
        %1592 = vmatmul.mubr.f32.gmra.mrb[0].mxu0 %v1412
        %v1593 = vpop.f32.mrb[0].mxu0
        %v1594 = vadd.f32 %v1337, %v1593
        %v1595 = vpop.f32.mrb[0].mxu0
        %1596 = vmatprep.mubr.f32.mxu0 0.0
        %1597 = vmatmul.mubr.f32.gmra.mrb[0].mxu0 %v1415
        %v1598 = vpop.f32.mrb[0].mxu0
        %v1599 = vadd.f32 %v1342, %v1598
        %v1600 = vpop.f32.mrb[0].mxu0
        %1601 = vdwg.mxu0
        %s1602 = scalar_lea.vmem [#allocation2], 16
        %v1603 = vld [vmem:[%s1602] sm:$0xff]
        %v1605 = vsel %vm1087, %v1060, 0
        %v1608 = vsel %vm1087, %v1061, 0
        %v1611 = vsel %vm1087, %v1062, 0
        %v1614 = vsel %vm1087, %v1063, 0
        %v1617 = vsel %vm1087, %v1064, 0
        %v1620 = vsel %vm1087, %v1065, 0
        %v1623 = vsel %vm1087, %v1066, 0
        %v1626 = vsel %vm1087, %v1067, 0
        %v1629 = vsel %vm1087, %v1068, 0
        %v1632 = vsel %vm1087, %v1069, 0
        %v1635 = vsel %vm1087, %v1070, 0
        %v1638 = vsel %vm1087, %v1071, 0
        %v1641 = vsel %vm1087, %v1072, 0
        %v1644 = vsel %vm1087, %v1073, 0
        %v1647 = vsel %vm1087, %v1074, 0
        %v1650 = vsel %vm1087, %v1075, 0
        %v1653 = vsel %vm1087, %v1076, 0
        %v1656 = vsel %vm1087, %v1077, 0
        %v1659 = vsel %vm1087, %v1078, 0
        %v1662 = vsel %vm1087, %v1079, 0
        %v1665 = vsel %vm1087, %v1080, 0
        %v1668 = vsel %vm1087, %v1081, 0
        %v1671 = vsel %vm1087, %v1082, 0
        %v1674 = vsel %vm1087, %v1083, 0
        %1676 = vmatprep.subr.mxu0 0.0
        %1677 = vmatpush1.msra.mxu0 %v1603
        %1678 = vmatprep.subr.mxu0 0.0
        %1679 = vmatpush1.msra.mxu0 0.0
        %1680 = vmatprep.subr.mxu0 0.0
        %1681 = vmatpush1.msra.mxu0 0.0
        %1682 = vmatprep.subr.mxu0 0.0
        %1683 = vmatpush1.msra.mxu0 0.0
        %1684 = vmatprep.subr.mxu0 0.0
        %1685 = vmatpush1.msra.mxu0 0.0
        %1686 = vmatprep.subr.mxu0 0.0
        %1687 = vmatpush1.msra.mxu0 0.0
        %1688 = vmatprep.subr.mxu0 0.0
        %1689 = vmatpush1.msra.mxu0 0.0
        %1690 = vmatprep.subr.mxu0 0.0
        %1691 = vmatpush1.msra.mxu0 0.0
        %1692 = vmatprep.subr.mxu0 0.0
        %1693 = vmatpush1.msra.mxu0 0.0
        %1694 = vmatprep.subr.mxu0 0.0
        %1695 = vmatpush1.msra.mxu0 0.0
        %1696 = vmatprep.subr.mxu0 0.0
        %1697 = vmatpush1.msra.mxu0 0.0
        %1698 = vmatprep.subr.mxu0 0.0
        %1699 = vmatpush1.msra.mxu0 0.0
        %1700 = vmatprep.subr.mxu0 0.0
        %1701 = vmatpush1.msra.mxu0 0.0
        %1702 = vmatprep.subr.mxu0 0.0
        %1703 = vmatpush1.msra.mxu0 0.0
        %1704 = vmatprep.subr.mxu0 0.0
        %1705 = vmatpush1.msra.mxu0 0.0
        %1706 = vmatprep.subr.mxu0 0.0
        %1707 = vmatpush1.msra.mxu0 0.0
        %1708 = vmatprep.subr.mxu0 0.0
        %1709 = vmatpush1.msra.mxu0 0.0
        %1710 = vmatprep.subr.mxu0 0.0
        %1711 = vmatpush1.msra.mxu0 0.0
        %1712 = vmatprep.subr.mxu0 0.0
        %1713 = vmatpush1.msra.mxu0 0.0
        %1714 = vmatprep.subr.mxu0 0.0
        %1715 = vmatpush1.msra.mxu0 0.0
        %1716 = vmatprep.subr.mxu0 0.0
        %1717 = vmatpush1.msra.mxu0 0.0
        %1718 = vmatprep.subr.mxu0 0.0
        %1719 = vmatpush1.msra.mxu0 0.0
        %1720 = vmatprep.subr.mxu0 0.0
        %1721 = vmatpush1.msra.mxu0 0.0
        %1722 = vmatprep.subr.mxu0 0.0
        %1723 = vmatpush1.msra.mxu0 0.0
        %1724 = vmatprep.subr.mxu0 0.0
        %1725 = vmatpush1.msra.mxu0 0.0
        %1726 = vmatprep.subr.mxu0 0.0
        %1727 = vmatpush1.msra.mxu0 0.0
        %1728 = vmatprep.subr.mxu0 0.0
        %1729 = vmatpush1.msra.mxu0 0.0
        %1730 = vmatprep.subr.mxu0 0.0
        %1731 = vmatpush1.msra.mxu0 0.0
        %1732 = vmatprep.subr.mxu0 0.0
        %1733 = vmatpush1.msra.mxu0 0.0
        %1734 = vmatprep.subr.mxu0 0.0
        %1735 = vmatpush1.msra.mxu0 0.0
        %1736 = vmatprep.subr.mxu0 0.0
        %1737 = vmatpush1.msra.mxu0 0.0
        %1738 = vmatprep.subr.mxu0 0.0
        %1739 = vmatpush1.msra.mxu0 0.0
        %1740 = vmatprep.mubr.f32.mxu0 0.0
        %1741 = vmatmul.mubr.f32.gmra.mrb[0].mxu0 %v1605
        %v1742 = vpop.f32.mrb[0].mxu0
        %v1743 = vadd.f32 0.0, %v1742
        %v1744 = vpop.f32.mrb[0].mxu0
        %1745 = vmatprep.mubr.f32.mxu0 0.0
        %1746 = vmatmul.mubr.f32.gmra.mrb[0].mxu0 %v1608
        %v1747 = vpop.f32.mrb[0].mxu0
        %v1748 = vadd.f32 0.0, %v1747
        %v1749 = vpop.f32.mrb[0].mxu0
        %1750 = vmatprep.mubr.f32.mxu0 0.0
        %1751 = vmatmul.mubr.f32.gmra.mrb[0].mxu0 %v1611
        %v1752 = vpop.f32.mrb[0].mxu0
        %v1753 = vadd.f32 0.0, %v1752
        %v1754 = vpop.f32.mrb[0].mxu0
        %1755 = vmatprep.mubr.f32.mxu0 0.0
        %1756 = vmatmul.mubr.f32.gmra.mrb[0].mxu0 %v1614
        %v1757 = vpop.f32.mrb[0].mxu0
        %v1758 = vadd.f32 0.0, %v1757
        %v1759 = vpop.f32.mrb[0].mxu0
        %1760 = vmatprep.mubr.f32.mxu0 0.0
        %1761 = vmatmul.mubr.f32.gmra.mrb[0].mxu0 %v1617
        %v1762 = vpop.f32.mrb[0].mxu0
        %v1763 = vadd.f32 0.0, %v1762
        %v1764 = vpop.f32.mrb[0].mxu0
        %1765 = vmatprep.mubr.f32.mxu0 0.0
        %1766 = vmatmul.mubr.f32.gmra.mrb[0].mxu0 %v1620
        %v1767 = vpop.f32.mrb[0].mxu0
        %v1768 = vadd.f32 0.0, %v1767
        %v1769 = vpop.f32.mrb[0].mxu0
        %1770 = vmatprep.mubr.f32.mxu0 0.0
        %1771 = vmatmul.mubr.f32.gmra.mrb[0].mxu0 %v1623
        %v1772 = vpop.f32.mrb[0].mxu0
        %v1773 = vadd.f32 0.0, %v1772
        %v1774 = vpop.f32.mrb[0].mxu0
        %1775 = vmatprep.mubr.f32.mxu0 0.0
        %1776 = vmatmul.mubr.f32.gmra.mrb[0].mxu0 %v1626
        %v1777 = vpop.f32.mrb[0].mxu0
        %v1778 = vadd.f32 0.0, %v1777
        %v1779 = vpop.f32.mrb[0].mxu0
        %1780 = vmatprep.mubr.f32.mxu0 0.0
        %1781 = vmatmul.mubr.f32.gmra.mrb[0].mxu0 %v1629
        %v1782 = vpop.f32.mrb[0].mxu0
        %v1783 = vadd.f32 0.0, %v1782
        %v1784 = vpop.f32.mrb[0].mxu0
        %1785 = vmatprep.mubr.f32.mxu0 0.0
        %1786 = vmatmul.mubr.f32.gmra.mrb[0].mxu0 %v1632
        %v1787 = vpop.f32.mrb[0].mxu0
        %v1788 = vadd.f32 0.0, %v1787
        %v1789 = vpop.f32.mrb[0].mxu0
        %1790 = vmatprep.mubr.f32.mxu0 0.0
        %1791 = vmatmul.mubr.f32.gmra.mrb[0].mxu0 %v1635
        %v1792 = vpop.f32.mrb[0].mxu0
        %v1793 = vadd.f32 0.0, %v1792
        %v1794 = vpop.f32.mrb[0].mxu0
        %1795 = vmatprep.mubr.f32.mxu0 0.0
        %1796 = vmatmul.mubr.f32.gmra.mrb[0].mxu0 %v1638
        %v1797 = vpop.f32.mrb[0].mxu0
        %v1798 = vadd.f32 0.0, %v1797
        %v1799 = vpop.f32.mrb[0].mxu0
        %1800 = vmatprep.mubr.f32.mxu0 0.0
        %1801 = vmatmul.mubr.f32.gmra.mrb[0].mxu0 %v1641
        %v1802 = vpop.f32.mrb[0].mxu0
        %v1803 = vadd.f32 0.0, %v1802
        %v1804 = vpop.f32.mrb[0].mxu0
        %1805 = vmatprep.mubr.f32.mxu0 0.0
        %1806 = vmatmul.mubr.f32.gmra.mrb[0].mxu0 %v1644
        %v1807 = vpop.f32.mrb[0].mxu0
        %v1808 = vadd.f32 0.0, %v1807
        %v1809 = vpop.f32.mrb[0].mxu0
        %1810 = vmatprep.mubr.f32.mxu0 0.0
        %1811 = vmatmul.mubr.f32.gmra.mrb[0].mxu0 %v1647
        %v1812 = vpop.f32.mrb[0].mxu0
        %v1813 = vadd.f32 0.0, %v1812
        %v1814 = vpop.f32.mrb[0].mxu0
        %1815 = vmatprep.mubr.f32.mxu0 0.0
        %1816 = vmatmul.mubr.f32.gmra.mrb[0].mxu0 %v1650
        %v1817 = vpop.f32.mrb[0].mxu0
        %v1818 = vadd.f32 0.0, %v1817
        %v1819 = vpop.f32.mrb[0].mxu0
        %1820 = vmatprep.mubr.f32.mxu0 0.0
        %1821 = vmatmul.mubr.f32.gmra.mrb[0].mxu0 %v1653
        %v1822 = vpop.f32.mrb[0].mxu0
        %v1823 = vadd.f32 0.0, %v1822
        %v1824 = vpop.f32.mrb[0].mxu0
        %1825 = vmatprep.mubr.f32.mxu0 0.0
        %1826 = vmatmul.mubr.f32.gmra.mrb[0].mxu0 %v1656
        %v1827 = vpop.f32.mrb[0].mxu0
        %v1828 = vadd.f32 0.0, %v1827
        %v1829 = vpop.f32.mrb[0].mxu0
        %1830 = vmatprep.mubr.f32.mxu0 0.0
        %1831 = vmatmul.mubr.f32.gmra.mrb[0].mxu0 %v1659
        %v1832 = vpop.f32.mrb[0].mxu0
        %v1833 = vadd.f32 0.0, %v1832
        %v1834 = vpop.f32.mrb[0].mxu0
        %1835 = vmatprep.mubr.f32.mxu0 0.0
        %1836 = vmatmul.mubr.f32.gmra.mrb[0].mxu0 %v1662
        %v1837 = vpop.f32.mrb[0].mxu0
        %v1838 = vadd.f32 0.0, %v1837
        %v1839 = vpop.f32.mrb[0].mxu0
        %1840 = vmatprep.mubr.f32.mxu0 0.0
        %1841 = vmatmul.mubr.f32.gmra.mrb[0].mxu0 %v1665
        %v1842 = vpop.f32.mrb[0].mxu0
        %v1843 = vadd.f32 0.0, %v1842
        %v1844 = vpop.f32.mrb[0].mxu0
        %1845 = vmatprep.mubr.f32.mxu0 0.0
        %1846 = vmatmul.mubr.f32.gmra.mrb[0].mxu0 %v1668
        %v1847 = vpop.f32.mrb[0].mxu0
        %v1848 = vadd.f32 0.0, %v1847
        %v1849 = vpop.f32.mrb[0].mxu0
        %1850 = vmatprep.mubr.f32.mxu0 0.0
        %1851 = vmatmul.mubr.f32.gmra.mrb[0].mxu0 %v1671
        %v1852 = vpop.f32.mrb[0].mxu0
        %v1853 = vadd.f32 0.0, %v1852
        %v1854 = vpop.f32.mrb[0].mxu0
        %1855 = vmatprep.mubr.f32.mxu0 0.0
        %1856 = vmatmul.mubr.f32.gmra.mrb[0].mxu0 %v1674
        %v1857 = vpop.f32.mrb[0].mxu0
        %v1858 = vadd.f32 0.0, %v1857
        %v1859 = vpop.f32.mrb[0].mxu0
        %1860 = vdwg.mxu0
        %v1861 = vadd.f32 %v1484, %v1743
        %v1862 = vadd.f32 %v1489, %v1748
        %v1863 = vadd.f32 %v1494, %v1753
        %v1864 = vadd.f32 %v1499, %v1758
        %v1865 = vadd.f32 %v1504, %v1763
        %v1866 = vadd.f32 %v1509, %v1768
        %v1867 = vadd.f32 %v1514, %v1773
        %v1868 = vadd.f32 %v1519, %v1778
        %v1869 = vadd.f32 %v1524, %v1783
        %v1870 = vadd.f32 %v1529, %v1788
        %v1871 = vadd.f32 %v1534, %v1793
        %v1872 = vadd.f32 %v1539, %v1798
        %v1873 = vadd.f32 %v1544, %v1803
        %v1874 = vadd.f32 %v1549, %v1808
        %v1875 = vadd.f32 %v1554, %v1813
        %v1876 = vadd.f32 %v1559, %v1818
        %v1877 = vadd.f32 %v1564, %v1823
        %v1878 = vadd.f32 %v1569, %v1828
        %v1879 = vadd.f32 %v1574, %v1833
        %v1880 = vadd.f32 %v1579, %v1838
        %v1881 = vadd.f32 %v1584, %v1843
        %v1882 = vadd.f32 %v1589, %v1848
        %v1883 = vadd.f32 %v1594, %v1853
        %v1884 = vadd.f32 %v1599, %v1858
        %v1885 = vld [vmem:[%s3] sm:$0x1]
        %v1887 = vlaneseq
        %v1888 = vshrl.u32 %v1887, 7
        %v1889 = vsub.s32 0, %v1888
        %v1890 = vrot.slane %v1885, %v1889
        %v1892 = vadd.f32 %v1861, %v1890
        %v1893 = vadd.f32 %v1862, %v1890
        %v1894 = vadd.f32 %v1863, %v1890
        %v1895 = vadd.f32 %v1864, %v1890
        %v1896 = vadd.f32 %v1865, %v1890
        %v1897 = vadd.f32 %v1866, %v1890
        %v1898 = vadd.f32 %v1867, %v1890
        %v1899 = vadd.f32 %v1868, %v1890
        %v1900 = vadd.f32 %v1869, %v1890
        %v1901 = vadd.f32 %v1870, %v1890
        %v1902 = vadd.f32 %v1871, %v1890
        %v1903 = vadd.f32 %v1872, %v1890
        %v1904 = vadd.f32 %v1873, %v1890
        %v1905 = vadd.f32 %v1874, %v1890
        %v1906 = vadd.f32 %v1875, %v1890
        %v1907 = vadd.f32 %v1876, %v1890
        %v1908 = vadd.f32 %v1877, %v1890
        %v1909 = vadd.f32 %v1878, %v1890
        %v1910 = vadd.f32 %v1879, %v1890
        %v1911 = vadd.f32 %v1880, %v1890
        %v1912 = vadd.f32 %v1881, %v1890
        %v1913 = vadd.f32 %v1882, %v1890
        %v1914 = vadd.f32 %v1883, %v1890
        %v1915 = vadd.f32 %v1884, %v1890
        %v1916 = vmax.f32 %v1892, 0.0
        %v1917 = vmax.f32 %v1893, 0.0
        %v1918 = vmax.f32 %v1894, 0.0
        %v1919 = vmax.f32 %v1895, 0.0
        %v1920 = vmax.f32 %v1896, 0.0
        %v1921 = vmax.f32 %v1897, 0.0
        %v1922 = vmax.f32 %v1898, 0.0
        %v1923 = vmax.f32 %v1899, 0.0
        %v1924 = vmax.f32 %v1900, 0.0
        %v1925 = vmax.f32 %v1901, 0.0
        %v1926 = vmax.f32 %v1902, 0.0
        %v1927 = vmax.f32 %v1903, 0.0
        %v1928 = vmax.f32 %v1904, 0.0
        %v1929 = vmax.f32 %v1905, 0.0
        %v1930 = vmax.f32 %v1906, 0.0
        %v1931 = vmax.f32 %v1907, 0.0
        %v1932 = vmax.f32 %v1908, 0.0
        %v1933 = vmax.f32 %v1909, 0.0
        %v1934 = vmax.f32 %v1910, 0.0
        %v1935 = vmax.f32 %v1911, 0.0
        %v1936 = vmax.f32 %v1912, 0.0
        %v1937 = vmax.f32 %v1913, 0.0
        %v1938 = vmax.f32 %v1914, 0.0
        %v1939 = vmax.f32 %v1915, 0.0
        %1940 = vrot.lane.b32.xlu0 %v1916, 112
        %v1941 = vpop.permute.xlu0 %1940
        %1942 = vrot.lane.b32.xlu0 %v1917, 112
        %v1943 = vpop.permute.xlu0 %1942
        %1944 = vrot.lane.b32.xlu0 %v1918, 112
        %v1945 = vpop.permute.xlu0 %1944
        %1946 = vrot.lane.b32.xlu0 %v1919, 112
        %v1947 = vpop.permute.xlu0 %1946
        %1948 = vrot.lane.b32.xlu0 %v1920, 112
        %v1949 = vpop.permute.xlu0 %1948
        %1950 = vrot.lane.b32.xlu0 %v1921, 112
        %v1951 = vpop.permute.xlu0 %1950
        %1952 = vrot.lane.b32.xlu0 %v1922, 112
        %v1953 = vpop.permute.xlu0 %1952
        %1954 = vrot.lane.b32.xlu0 %v1923, 112
        %v1955 = vpop.permute.xlu0 %1954
        %1956 = vrot.lane.b32.xlu0 %v1924, 112
        %v1957 = vpop.permute.xlu0 %1956
        %1958 = vrot.lane.b32.xlu0 %v1925, 112
        %v1959 = vpop.permute.xlu0 %1958
        %1960 = vrot.lane.b32.xlu0 %v1926, 112
        %v1961 = vpop.permute.xlu0 %1960
        %1962 = vrot.lane.b32.xlu0 %v1927, 112
        %v1963 = vpop.permute.xlu0 %1962
        %1964 = vrot.lane.b32.xlu0 %v1928, 112
        %v1965 = vpop.permute.xlu0 %1964
        %1966 = vrot.lane.b32.xlu0 %v1929, 112
        %v1967 = vpop.permute.xlu0 %1966
        %1968 = vrot.lane.b32.xlu0 %v1930, 112
        %v1969 = vpop.permute.xlu0 %1968
        %1970 = vrot.lane.b32.xlu0 %v1931, 112
        %v1971 = vpop.permute.xlu0 %1970
        %1972 = vrot.lane.b32.xlu0 %v1932, 112
        %v1973 = vpop.permute.xlu0 %1972
        %1974 = vrot.lane.b32.xlu0 %v1933, 112
        %v1975 = vpop.permute.xlu0 %1974
        %1976 = vrot.lane.b32.xlu0 %v1934, 112
        %v1977 = vpop.permute.xlu0 %1976
        %1978 = vrot.lane.b32.xlu0 %v1935, 112
        %v1979 = vpop.permute.xlu0 %1978
        %1980 = vrot.lane.b32.xlu0 %v1936, 112
        %v1981 = vpop.permute.xlu0 %1980
        %1982 = vrot.lane.b32.xlu0 %v1937, 112
        %v1983 = vpop.permute.xlu0 %1982
        %1984 = vrot.lane.b32.xlu0 %v1938, 112
        %v1985 = vpop.permute.xlu0 %1984
        %1986 = vrot.lane.b32.xlu0 %v1939, 112
        %v1987 = vpop.permute.xlu0 %1986
        %v1988 = vmax.f32 %v1916, %v1941
        %v1989 = vmax.f32 %v1917, %v1943
        %v1990 = vmax.f32 %v1918, %v1945
        %v1991 = vmax.f32 %v1919, %v1947
        %v1992 = vmax.f32 %v1920, %v1949
        %v1993 = vmax.f32 %v1921, %v1951
        %v1994 = vmax.f32 %v1922, %v1953
        %v1995 = vmax.f32 %v1923, %v1955
        %v1996 = vmax.f32 %v1924, %v1957
        %v1997 = vmax.f32 %v1925, %v1959
        %v1998 = vmax.f32 %v1926, %v1961
        %v1999 = vmax.f32 %v1927, %v1963
        %v2000 = vmax.f32 %v1928, %v1965
        %v2001 = vmax.f32 %v1929, %v1967
        %v2002 = vmax.f32 %v1930, %v1969
        %v2003 = vmax.f32 %v1931, %v1971
        %v2004 = vmax.f32 %v1932, %v1973
        %v2005 = vmax.f32 %v1933, %v1975
        %v2006 = vmax.f32 %v1934, %v1977
        %v2007 = vmax.f32 %v1935, %v1979
        %v2008 = vmax.f32 %v1936, %v1981
        %v2009 = vmax.f32 %v1937, %v1983
        %v2010 = vmax.f32 %v1938, %v1985
        %v2011 = vmax.f32 %v1939, %v1987
        %v2012 = vld [vmem:[%s5] sm:$0xff]
        %v2013 = vld [vmem:[%s5 + $0x8] sm:$0xff]
        %v2014 = vld [vmem:[%s5 + $0x10] sm:$0xff]
        %v2015 = vld [vmem:[%s5 + $0x18] sm:$0xff]
        %v2016 = vld [vmem:[%s5 + $0x20] sm:$0xff]
        %v2017 = vld [vmem:[%s5 + $0x28] sm:$0xff]
        %v2018 = vld [vmem:[%s5 + $0x30] sm:$0xff]
        %v2019 = vld [vmem:[%s5 + $0x38] sm:$0xff]
        %v2020 = vld [vmem:[%s5 + $0x40] sm:$0xff]
        %v2021 = vld [vmem:[%s5 + $0x48] sm:$0xff]
        %v2022 = vld [vmem:[%s5 + $0x50] sm:$0xff]
        %v2023 = vld [vmem:[%s5 + $0x58] sm:$0xff]
        %v2024 = vld [vmem:[%s5 + $0x60] sm:$0xff]
        %v2025 = vld [vmem:[%s5 + $0x68] sm:$0xff]
        %v2026 = vld [vmem:[%s5 + $0x70] sm:$0xff]
        %v2027 = vld [vmem:[%s5 + $0x78] sm:$0xff]
        %2028 = vmatprep.subr.mxu0 0.0
        %2029 = vmatpush1.msra.mxu0 %v2012
        %2030 = vmatprep.subr.mxu0 0.0
        %2031 = vmatpush1.msra.mxu0 %v2013
        %2032 = vmatprep.subr.mxu0 0.0
        %2033 = vmatpush1.msra.mxu0 %v2014
        %2034 = vmatprep.subr.mxu0 0.0
        %2035 = vmatpush1.msra.mxu0 %v2015
        %2036 = vmatprep.subr.mxu0 0.0
        %2037 = vmatpush1.msra.mxu0 %v2016
        %2038 = vmatprep.subr.mxu0 0.0
        %2039 = vmatpush1.msra.mxu0 %v2017
        %2040 = vmatprep.subr.mxu0 0.0
        %2041 = vmatpush1.msra.mxu0 %v2018
        %2042 = vmatprep.subr.mxu0 0.0
        %2043 = vmatpush1.msra.mxu0 %v2019
        %2044 = vmatprep.subr.mxu0 0.0
        %2045 = vmatpush1.msra.mxu0 %v2020
        %2046 = vmatprep.subr.mxu0 0.0
        %2047 = vmatpush1.msra.mxu0 %v2021
        %2048 = vmatprep.subr.mxu0 0.0
        %2049 = vmatpush1.msra.mxu0 %v2022
        %2050 = vmatprep.subr.mxu0 0.0
        %2051 = vmatpush1.msra.mxu0 %v2023
        %2052 = vmatprep.subr.mxu0 0.0
        %2053 = vmatpush1.msra.mxu0 %v2024
        %2054 = vmatprep.subr.mxu0 0.0
        %2055 = vmatpush1.msra.mxu0 %v2025
        %2056 = vmatprep.subr.mxu0 0.0
        %2057 = vmatpush1.msra.mxu0 %v2026
        %2058 = vmatprep.subr.mxu0 0.0
        %2059 = vmatpush1.msra.mxu0 %v2027
        %2060 = vmatprep.subr.mxu0 0.0
        %2061 = vmatpush1.msra.mxu0 0.0
        %2062 = vmatprep.subr.mxu0 0.0
        %2063 = vmatpush1.msra.mxu0 0.0
        %2064 = vmatprep.subr.mxu0 0.0
        %2065 = vmatpush1.msra.mxu0 0.0
        %2066 = vmatprep.subr.mxu0 0.0
        %2067 = vmatpush1.msra.mxu0 0.0
        %2068 = vmatprep.subr.mxu0 0.0
        %2069 = vmatpush1.msra.mxu0 0.0
        %2070 = vmatprep.subr.mxu0 0.0
        %2071 = vmatpush1.msra.mxu0 0.0
        %2072 = vmatprep.subr.mxu0 0.0
        %2073 = vmatpush1.msra.mxu0 0.0
        %2074 = vmatprep.subr.mxu0 0.0
        %2075 = vmatpush1.msra.mxu0 0.0
        %2076 = vmatprep.subr.mxu0 0.0
        %2077 = vmatpush1.msra.mxu0 0.0
        %2078 = vmatprep.subr.mxu0 0.0
        %2079 = vmatpush1.msra.mxu0 0.0
        %2080 = vmatprep.subr.mxu0 0.0
        %2081 = vmatpush1.msra.mxu0 0.0
        %2082 = vmatprep.subr.mxu0 0.0
        %2083 = vmatpush1.msra.mxu0 0.0
        %2084 = vmatprep.subr.mxu0 0.0
        %2085 = vmatpush1.msra.mxu0 0.0
        %2086 = vmatprep.subr.mxu0 0.0
        %2087 = vmatpush1.msra.mxu0 0.0
        %2088 = vmatprep.subr.mxu0 0.0
        %2089 = vmatpush1.msra.mxu0 0.0
        %2090 = vmatprep.subr.mxu0 0.0
        %2091 = vmatpush1.msra.mxu0 0.0
        %2092 = vmatprep.mubr.f32.mxu0 0.0
        %2093 = vmatmul.mubr.f32.gmra.mrb[0].mxu0 %v1988
        %v2094 = vpop.f32.mrb[0].mxu0
        %v2095 = vadd.f32 0.0, %v2094
        %v2096 = vpop.f32.mrb[0].mxu0
        %2097 = vmatprep.mubr.f32.mxu0 0.0
        %2098 = vmatmul.mubr.f32.gmra.mrb[0].mxu0 %v1989
        %v2099 = vpop.f32.mrb[0].mxu0
        %v2100 = vadd.f32 0.0, %v2099
        %v2101 = vpop.f32.mrb[0].mxu0
        %2102 = vmatprep.mubr.f32.mxu0 0.0
        %2103 = vmatmul.mubr.f32.gmra.mrb[0].mxu0 %v1990
        %v2104 = vpop.f32.mrb[0].mxu0
        %v2105 = vadd.f32 0.0, %v2104
        %v2106 = vpop.f32.mrb[0].mxu0
        %2107 = vmatprep.mubr.f32.mxu0 0.0
        %2108 = vmatmul.mubr.f32.gmra.mrb[0].mxu0 %v1991
        %v2109 = vpop.f32.mrb[0].mxu0
        %v2110 = vadd.f32 0.0, %v2109
        %v2111 = vpop.f32.mrb[0].mxu0
        %2112 = vmatprep.mubr.f32.mxu0 0.0
        %2113 = vmatmul.mubr.f32.gmra.mrb[0].mxu0 %v1992
        %v2114 = vpop.f32.mrb[0].mxu0
        %v2115 = vadd.f32 0.0, %v2114
        %v2116 = vpop.f32.mrb[0].mxu0
        %2117 = vmatprep.mubr.f32.mxu0 0.0
        %2118 = vmatmul.mubr.f32.gmra.mrb[0].mxu0 %v1993
        %v2119 = vpop.f32.mrb[0].mxu0
        %v2120 = vadd.f32 0.0, %v2119
        %v2121 = vpop.f32.mrb[0].mxu0
        %2122 = vmatprep.mubr.f32.mxu0 0.0
        %2123 = vmatmul.mubr.f32.gmra.mrb[0].mxu0 %v1994
        %v2124 = vpop.f32.mrb[0].mxu0
        %v2125 = vadd.f32 0.0, %v2124
        %v2126 = vpop.f32.mrb[0].mxu0
        %2127 = vmatprep.mubr.f32.mxu0 0.0
        %2128 = vmatmul.mubr.f32.gmra.mrb[0].mxu0 %v1995
        %v2129 = vpop.f32.mrb[0].mxu0
        %v2130 = vadd.f32 0.0, %v2129
        %v2131 = vpop.f32.mrb[0].mxu0
        %2132 = vmatprep.mubr.f32.mxu0 0.0
        %2133 = vmatmul.mubr.f32.gmra.mrb[0].mxu0 %v1996
        %v2134 = vpop.f32.mrb[0].mxu0
        %v2135 = vadd.f32 0.0, %v2134
        %v2136 = vpop.f32.mrb[0].mxu0
        %2137 = vmatprep.mubr.f32.mxu0 0.0
        %2138 = vmatmul.mubr.f32.gmra.mrb[0].mxu0 %v1997
        %v2139 = vpop.f32.mrb[0].mxu0
        %v2140 = vadd.f32 0.0, %v2139
        %v2141 = vpop.f32.mrb[0].mxu0
        %2142 = vmatprep.mubr.f32.mxu0 0.0
        %2143 = vmatmul.mubr.f32.gmra.mrb[0].mxu0 %v1998
        %v2144 = vpop.f32.mrb[0].mxu0
        %v2145 = vadd.f32 0.0, %v2144
        %v2146 = vpop.f32.mrb[0].mxu0
        %2147 = vmatprep.mubr.f32.mxu0 0.0
        %2148 = vmatmul.mubr.f32.gmra.mrb[0].mxu0 %v1999
        %v2149 = vpop.f32.mrb[0].mxu0
        %v2150 = vadd.f32 0.0, %v2149
        %v2151 = vpop.f32.mrb[0].mxu0
        %2152 = vmatprep.mubr.f32.mxu0 0.0
        %2153 = vmatmul.mubr.f32.gmra.mrb[0].mxu0 %v2000
        %v2154 = vpop.f32.mrb[0].mxu0
        %v2155 = vadd.f32 0.0, %v2154
        %v2156 = vpop.f32.mrb[0].mxu0
        %2157 = vmatprep.mubr.f32.mxu0 0.0
        %2158 = vmatmul.mubr.f32.gmra.mrb[0].mxu0 %v2001
        %v2159 = vpop.f32.mrb[0].mxu0
        %v2160 = vadd.f32 0.0, %v2159
        %v2161 = vpop.f32.mrb[0].mxu0
        %2162 = vmatprep.mubr.f32.mxu0 0.0
        %2163 = vmatmul.mubr.f32.gmra.mrb[0].mxu0 %v2002
        %v2164 = vpop.f32.mrb[0].mxu0
        %v2165 = vadd.f32 0.0, %v2164
        %v2166 = vpop.f32.mrb[0].mxu0
        %2167 = vmatprep.mubr.f32.mxu0 0.0
        %2168 = vmatmul.mubr.f32.gmra.mrb[0].mxu0 %v2003
        %v2169 = vpop.f32.mrb[0].mxu0
        %v2170 = vadd.f32 0.0, %v2169
        %v2171 = vpop.f32.mrb[0].mxu0
        %2172 = vmatprep.mubr.f32.mxu0 0.0
        %2173 = vmatmul.mubr.f32.gmra.mrb[0].mxu0 %v2004
        %v2174 = vpop.f32.mrb[0].mxu0
        %v2175 = vadd.f32 0.0, %v2174
        %v2176 = vpop.f32.mrb[0].mxu0
        %2177 = vmatprep.mubr.f32.mxu0 0.0
        %2178 = vmatmul.mubr.f32.gmra.mrb[0].mxu0 %v2005
        %v2179 = vpop.f32.mrb[0].mxu0
        %v2180 = vadd.f32 0.0, %v2179
        %v2181 = vpop.f32.mrb[0].mxu0
        %2182 = vmatprep.mubr.f32.mxu0 0.0
        %2183 = vmatmul.mubr.f32.gmra.mrb[0].mxu0 %v2006
        %v2184 = vpop.f32.mrb[0].mxu0
        %v2185 = vadd.f32 0.0, %v2184
        %v2186 = vpop.f32.mrb[0].mxu0
        %2187 = vmatprep.mubr.f32.mxu0 0.0
        %2188 = vmatmul.mubr.f32.gmra.mrb[0].mxu0 %v2007
        %v2189 = vpop.f32.mrb[0].mxu0
        %v2190 = vadd.f32 0.0, %v2189
        %v2191 = vpop.f32.mrb[0].mxu0
        %2192 = vmatprep.mubr.f32.mxu0 0.0
        %2193 = vmatmul.mubr.f32.gmra.mrb[0].mxu0 %v2008
        %v2194 = vpop.f32.mrb[0].mxu0
        %v2195 = vadd.f32 0.0, %v2194
        %v2196 = vpop.f32.mrb[0].mxu0
        %2197 = vmatprep.mubr.f32.mxu0 0.0
        %2198 = vmatmul.mubr.f32.gmra.mrb[0].mxu0 %v2009
        %v2199 = vpop.f32.mrb[0].mxu0
        %v2200 = vadd.f32 0.0, %v2199
        %v2201 = vpop.f32.mrb[0].mxu0
        %2202 = vmatprep.mubr.f32.mxu0 0.0
        %2203 = vmatmul.mubr.f32.gmra.mrb[0].mxu0 %v2010
        %v2204 = vpop.f32.mrb[0].mxu0
        %v2205 = vadd.f32 0.0, %v2204
        %v2206 = vpop.f32.mrb[0].mxu0
        %2207 = vmatprep.mubr.f32.mxu0 0.0
        %2208 = vmatmul.mubr.f32.gmra.mrb[0].mxu0 %v2011
        %v2209 = vpop.f32.mrb[0].mxu0
        %v2210 = vadd.f32 0.0, %v2209
        %v2211 = vpop.f32.mrb[0].mxu0
        %2212 = vdwg.mxu0
        %v2213 = vrot.slane %v2095, 1
        %v2214 = vrot.slane %v2100, 1
        %v2215 = vrot.slane %v2105, 1
        %v2216 = vrot.slane %v2110, 1
        %v2217 = vrot.slane %v2115, 1
        %v2218 = vrot.slane %v2120, 1
        %v2219 = vrot.slane %v2125, 1
        %v2220 = vrot.slane %v2130, 1
        %v2221 = vrot.slane %v2135, 1
        %v2222 = vrot.slane %v2140, 1
        %v2223 = vrot.slane %v2145, 1
        %v2224 = vrot.slane %v2150, 1
        %v2225 = vrot.slane %v2155, 1
        %v2226 = vrot.slane %v2160, 1
        %v2227 = vrot.slane %v2165, 1
        %v2228 = vrot.slane %v2170, 1
        %v2229 = vrot.slane %v2175, 1
        %v2230 = vrot.slane %v2180, 1
        %v2231 = vrot.slane %v2185, 1
        %v2232 = vrot.slane %v2190, 1
        %v2233 = vrot.slane %v2195, 1
        %v2234 = vrot.slane %v2200, 1
        %v2235 = vrot.slane %v2205, 1
        %v2236 = vrot.slane %v2210, 1
        %v2237 = vsel %vm1010, %v2235, %v2236
        %v2238 = vsel %vm1010, %v2234, %v2235
        %v2239 = vsel %vm1010, %v2233, %v2234
        %v2240 = vsel %vm1010, %v2232, %v2233
        %v2241 = vsel %vm1010, %v2231, %v2232
        %v2242 = vsel %vm1010, %v2230, %v2231
        %v2243 = vsel %vm1010, %v2229, %v2230
        %v2244 = vsel %vm1010, %v2228, %v2229
        %v2245 = vsel %vm1010, %v2227, %v2228
        %v2246 = vsel %vm1010, %v2226, %v2227
        %v2247 = vsel %vm1010, %v2225, %v2226
        %v2248 = vsel %vm1010, %v2224, %v2225
        %v2249 = vsel %vm1010, %v2223, %v2224
        %v2250 = vsel %vm1010, %v2222, %v2223
        %v2251 = vsel %vm1010, %v2221, %v2222
        %v2252 = vsel %vm1010, %v2220, %v2221
        %v2253 = vsel %vm1010, %v2219, %v2220
        %v2254 = vsel %vm1010, %v2218, %v2219
        %v2255 = vsel %vm1010, %v2217, %v2218
        %v2256 = vsel %vm1010, %v2216, %v2217
        %v2257 = vsel %vm1010, %v2215, %v2216
        %v2258 = vsel %vm1010, %v2214, %v2215
        %v2259 = vsel %vm1010, %v2213, %v2214
        %v2260 = vsel %vm1010, %v2236, %v2213
        %v2261 = vmax.f32 %v2095, %v2259
        %v2262 = vmax.f32 %v2100, %v2258
        %v2263 = vmax.f32 %v2105, %v2257
        %v2264 = vmax.f32 %v2110, %v2256
        %v2265 = vmax.f32 %v2115, %v2255
        %v2266 = vmax.f32 %v2120, %v2254
        %v2267 = vmax.f32 %v2125, %v2253
        %v2268 = vmax.f32 %v2130, %v2252
        %v2269 = vmax.f32 %v2135, %v2251
        %v2270 = vmax.f32 %v2140, %v2250
        %v2271 = vmax.f32 %v2145, %v2249
        %v2272 = vmax.f32 %v2150, %v2248
        %v2273 = vmax.f32 %v2155, %v2247
        %v2274 = vmax.f32 %v2160, %v2246
        %v2275 = vmax.f32 %v2165, %v2245
        %v2276 = vmax.f32 %v2170, %v2244
        %v2277 = vmax.f32 %v2175, %v2243
        %v2278 = vmax.f32 %v2180, %v2242
        %v2279 = vmax.f32 %v2185, %v2241
        %v2280 = vmax.f32 %v2190, %v2240
        %v2281 = vmax.f32 %v2195, %v2239
        %v2282 = vmax.f32 %v2200, %v2238
        %v2283 = vmax.f32 %v2205, %v2237
        %v2284 = vmax.f32 %v2210, %v2260
        %vm2285 = vcmask 523264
        %v2287 = vsel %vm2285, %v864, 0
        %v2290 = vsel %vm2285, %v866, 0
        %v2293 = vsel %vm2285, %v868, 0
        %v2296 = vsel %vm2285, %v870, 0
        %v2299 = vsel %vm2285, %v872, 0
        %v2302 = vsel %vm2285, %v874, 0
        %v2305 = vsel %vm2285, %v876, 0
        %v2308 = vsel %vm2285, %v878, 0
        %v2311 = vsel %vm2285, %v880, 0
        %v2314 = vsel %vm2285, %v882, 0
        %v2317 = vsel %vm2285, %v884, 0
        %v2320 = vsel %vm2285, %v886, 0
        %2322 = vmatprep.subr.mxu0 0.0
        %2323 = vmatpush1.msra.mxu0 %v2261
        %2324 = vmatprep.subr.mxu0 0.0
        %2325 = vmatpush1.msra.mxu0 %v2262
        %2326 = vmatprep.subr.mxu0 0.0
        %2327 = vmatpush1.msra.mxu0 %v2263
        %2328 = vmatprep.subr.mxu0 0.0
        %2329 = vmatpush1.msra.mxu0 %v2264
        %2330 = vmatprep.subr.mxu0 0.0
        %2331 = vmatpush1.msra.mxu0 %v2265
        %2332 = vmatprep.subr.mxu0 0.0
        %2333 = vmatpush1.msra.mxu0 %v2266
        %2334 = vmatprep.subr.mxu0 0.0
        %2335 = vmatpush1.msra.mxu0 %v2267
        %2336 = vmatprep.subr.mxu0 0.0
        %2337 = vmatpush1.msra.mxu0 %v2268
        %2338 = vmatprep.subr.mxu0 0.0
        %2339 = vmatpush1.msra.mxu0 %v2269
        %2340 = vmatprep.subr.mxu0 0.0
        %2341 = vmatpush1.msra.mxu0 %v2270
        %2342 = vmatprep.subr.mxu0 0.0
        %2343 = vmatpush1.msra.mxu0 %v2271
        %2344 = vmatprep.subr.mxu0 0.0
        %2345 = vmatpush1.msra.mxu0 %v2272
        %2346 = vmatprep.subr.mxu0 0.0
        %2347 = vmatpush1.msra.mxu0 %v2273
        %2348 = vmatprep.subr.mxu0 0.0
        %2349 = vmatpush1.msra.mxu0 %v2274
        %2350 = vmatprep.subr.mxu0 0.0
        %2351 = vmatpush1.msra.mxu0 %v2275
        %2352 = vmatprep.subr.mxu0 0.0
        %2353 = vmatpush1.msra.mxu0 %v2276
        %2354 = vmatprep.subr.mxu0 0.0
        %2355 = vmatpush1.msra.mxu0 %v2277
        %2356 = vmatprep.subr.mxu0 0.0
        %2357 = vmatpush1.msra.mxu0 %v2278
        %2358 = vmatprep.subr.mxu0 0.0
        %2359 = vmatpush1.msra.mxu0 %v2279
        %2360 = vmatprep.subr.mxu0 0.0
        %2361 = vmatpush1.msra.mxu0 %v2280
        %2362 = vmatprep.subr.mxu0 0.0
        %2363 = vmatpush1.msra.mxu0 %v2281
        %2364 = vmatprep.subr.mxu0 0.0
        %2365 = vmatpush1.msra.mxu0 %v2282
        %2366 = vmatprep.subr.mxu0 0.0
        %2367 = vmatpush1.msra.mxu0 %v2283
        %2368 = vmatprep.subr.mxu0 0.0
        %2369 = vmatpush1.msra.mxu0 %v2284
        %2370 = vmatprep.subr.mxu0 0.0
        %2371 = vmatpush1.msra.mxu0 0.0
        %2372 = vmatprep.subr.mxu0 0.0
        %2373 = vmatpush1.msra.mxu0 0.0
        %2374 = vmatprep.subr.mxu0 0.0
        %2375 = vmatpush1.msra.mxu0 0.0
        %2376 = vmatprep.subr.mxu0 0.0
        %2377 = vmatpush1.msra.mxu0 0.0
        %2378 = vmatprep.subr.mxu0 0.0
        %2379 = vmatpush1.msra.mxu0 0.0
        %2380 = vmatprep.subr.mxu0 0.0
        %2381 = vmatpush1.msra.mxu0 0.0
        %2382 = vmatprep.subr.mxu0 0.0
        %2383 = vmatpush1.msra.mxu0 0.0
        %2384 = vmatprep.subr.mxu0 0.0
        %2385 = vmatpush1.msra.mxu0 0.0
        %2386 = vmatprep.mubr.f32.mxu0 %v2287
        %2387 = vmatmul.mubr.f32.gmra.mrb[0].mxu0 %v863
        %v2388 = vpop.f32.mrb[0].mxu0
        %v2389 = vadd.f32 0.0, %v2388
        %v2390 = vpop.f32.mrb[0].mxu0
        %2391 = vmatprep.mubr.f32.mxu0 %v2290
        %2392 = vmatmul.mubr.f32.gmra.mrb[0].mxu0 %v865
        %v2393 = vpop.f32.mrb[0].mxu0
        %v2394 = vadd.f32 0.0, %v2393
        %v2395 = vpop.f32.mrb[0].mxu0
        %2396 = vmatprep.mubr.f32.mxu0 %v2293
        %2397 = vmatmul.mubr.f32.gmra.mrb[0].mxu0 %v867
        %v2398 = vpop.f32.mrb[0].mxu0
        %v2399 = vadd.f32 0.0, %v2398
        %v2400 = vpop.f32.mrb[0].mxu0
        %2401 = vmatprep.mubr.f32.mxu0 %v2296
        %2402 = vmatmul.mubr.f32.gmra.mrb[0].mxu0 %v869
        %v2403 = vpop.f32.mrb[0].mxu0
        %v2404 = vadd.f32 0.0, %v2403
        %v2405 = vpop.f32.mrb[0].mxu0
        %2406 = vmatprep.mubr.f32.mxu0 %v2299
        %2407 = vmatmul.mubr.f32.gmra.mrb[0].mxu0 %v871
        %v2408 = vpop.f32.mrb[0].mxu0
        %v2409 = vadd.f32 0.0, %v2408
        %v2410 = vpop.f32.mrb[0].mxu0
        %2411 = vmatprep.mubr.f32.mxu0 %v2302
        %2412 = vmatmul.mubr.f32.gmra.mrb[0].mxu0 %v873
        %v2413 = vpop.f32.mrb[0].mxu0
        %v2414 = vadd.f32 0.0, %v2413
        %v2415 = vpop.f32.mrb[0].mxu0
        %2416 = vmatprep.mubr.f32.mxu0 %v2305
        %2417 = vmatmul.mubr.f32.gmra.mrb[0].mxu0 %v875
        %v2418 = vpop.f32.mrb[0].mxu0
        %v2419 = vadd.f32 0.0, %v2418
        %v2420 = vpop.f32.mrb[0].mxu0
        %2421 = vmatprep.mubr.f32.mxu0 %v2308
        %2422 = vmatmul.mubr.f32.gmra.mrb[0].mxu0 %v877
        %v2423 = vpop.f32.mrb[0].mxu0
        %v2424 = vadd.f32 0.0, %v2423
        %v2425 = vpop.f32.mrb[0].mxu0
        %2426 = vmatprep.mubr.f32.mxu0 %v2311
        %2427 = vmatmul.mubr.f32.gmra.mrb[0].mxu0 %v879
        %v2428 = vpop.f32.mrb[0].mxu0
        %v2429 = vadd.f32 0.0, %v2428
        %v2430 = vpop.f32.mrb[0].mxu0
        %2431 = vmatprep.mubr.f32.mxu0 %v2314
        %2432 = vmatmul.mubr.f32.gmra.mrb[0].mxu0 %v881
        %v2433 = vpop.f32.mrb[0].mxu0
        %v2434 = vadd.f32 0.0, %v2433
        %v2435 = vpop.f32.mrb[0].mxu0
        %2436 = vmatprep.mubr.f32.mxu0 %v2317
        %2437 = vmatmul.mubr.f32.gmra.mrb[0].mxu0 %v883
        %v2438 = vpop.f32.mrb[0].mxu0
        %v2439 = vadd.f32 0.0, %v2438
        %v2440 = vpop.f32.mrb[0].mxu0
        %2441 = vmatprep.mubr.f32.mxu0 %v2320
        %2442 = vmatmul.mubr.f32.gmra.mrb[0].mxu0 %v885
        %v2443 = vpop.f32.mrb[0].mxu0
        %v2444 = vadd.f32 0.0, %v2443
        %v2445 = vpop.f32.mrb[0].mxu0
        %2446 = vdwg.mxu0
        %v2447 = vld [vmem:[#allocation4] sm:$0xff]
        %v2448 = vld [vmem:[#allocation4 + $0x8] sm:$0xff]
        %v2449 = vld [vmem:[#allocation4 + $0x10] sm:$0xff]
        %v2450 = vld [vmem:[#allocation4 + $0x18] sm:$0xff]
        %v2451 = vld [vmem:[#allocation4 + $0x20] sm:$0xff]
        %v2452 = vld [vmem:[#allocation4 + $0x28] sm:$0xff]
        %v2453 = vrot.slane %v2389, 7
        %v2454 = vrot.slane %v2394, 7
        %v2455 = vrot.slane %v2399, 7
        %v2456 = vrot.slane %v2404, 7
        %v2457 = vrot.slane %v2409, 7
        %v2458 = vrot.slane %v2414, 7
        %v2459 = vrot.slane %v2419, 7
        %v2460 = vrot.slane %v2424, 7
        %v2461 = vrot.slane %v2429, 7
        %v2462 = vrot.slane %v2434, 7
        %v2463 = vrot.slane %v2439, 7
        %v2464 = vrot.slane %v2444, 7
        %v2465 = vsel %vm913, %v2463, %v2464
        %v2466 = vsel %vm913, %v2462, %v2463
        %v2467 = vsel %vm913, %v2461, %v2462
        %v2468 = vsel %vm913, %v2460, %v2461
        %v2469 = vsel %vm913, %v2459, %v2460
        %v2470 = vsel %vm913, %v2458, %v2459
        %v2471 = vsel %vm913, %v2457, %v2458
        %v2472 = vsel %vm913, %v2456, %v2457
        %v2473 = vsel %vm913, %v2455, %v2456
        %v2474 = vsel %vm913, %v2454, %v2455
        %v2475 = vsel %vm913, %v2453, %v2454
        %v2476 = vsel %vm913, %v2464, %v2453
        %v2477 = vld [vmem:[%s9] sm:$0xff]
        %v2478 = vld [vmem:[%s9 + $0x8] sm:$0xff]
        %v2479 = vld [vmem:[%s9 + $0x10] sm:$0xff]
        %v2480 = vld [vmem:[%s9 + $0x18] sm:$0xff]
        %v2481 = vld [vmem:[%s9 + $0x20] sm:$0xff]
        %v2482 = vld [vmem:[%s9 + $0x28] sm:$0xff]
        %v2483 = vld [vmem:[%s9 + $0x30] sm:$0xff]
        %v2484 = vld [vmem:[%s9 + $0x38] sm:$0xff]
        %v2485 = vld [vmem:[%s9 + $0x40] sm:$0xff]
        %v2486 = vld [vmem:[%s9 + $0x48] sm:$0xff]
        %v2487 = vld [vmem:[%s9 + $0x50] sm:$0xff]
        %v2488 = vld [vmem:[%s9 + $0x58] sm:$0xff]
        %v2489 = vmul.f32 %v2476, %v2477
        %v2490 = vmul.f32 %v2475, %v2478
        %v2491 = vmul.f32 %v2474, %v2479
        %v2492 = vmul.f32 %v2473, %v2480
        %v2493 = vmul.f32 %v2472, %v2481
        %v2494 = vmul.f32 %v2471, %v2482
        %v2495 = vmul.f32 %v2470, %v2483
        %v2496 = vmul.f32 %v2469, %v2484
        %v2497 = vmul.f32 %v2468, %v2485
        %v2498 = vmul.f32 %v2467, %v2486
        %v2499 = vmul.f32 %v2466, %v2487
        %v2500 = vmul.f32 %v2465, %v2488
        %v2501 = vrot.slane %v2389, 1
        %v2502 = vrot.slane %v2394, 1
        %v2503 = vrot.slane %v2399, 1
        %v2504 = vrot.slane %v2404, 1
        %v2505 = vrot.slane %v2409, 1
        %v2506 = vrot.slane %v2414, 1
        %v2507 = vrot.slane %v2419, 1
        %v2508 = vrot.slane %v2424, 1
        %v2509 = vrot.slane %v2429, 1
        %v2510 = vrot.slane %v2434, 1
        %v2511 = vrot.slane %v2439, 1
        %v2512 = vrot.slane %v2444, 1
        %v2513 = vsel %vm1010, %v2511, %v2512
        %v2514 = vsel %vm1010, %v2510, %v2511
        %v2515 = vsel %vm1010, %v2509, %v2510
        %v2516 = vsel %vm1010, %v2508, %v2509
        %v2517 = vsel %vm1010, %v2507, %v2508
        %v2518 = vsel %vm1010, %v2506, %v2507
        %v2519 = vsel %vm1010, %v2505, %v2506
        %v2520 = vsel %vm1010, %v2504, %v2505
        %v2521 = vsel %vm1010, %v2503, %v2504
        %v2522 = vsel %vm1010, %v2502, %v2503
        %v2523 = vsel %vm1010, %v2501, %v2502
        %v2524 = vsel %vm1010, %v2512, %v2501
        %s2525 = scalar_lea.vmem %s9, 96
        %v2526 = vld [vmem:[%s2525] sm:$0xff]
        %v2527 = vld [vmem:[%s2525 + $0x8] sm:$0xff]
        %v2528 = vld [vmem:[%s2525 + $0x10] sm:$0xff]
        %v2529 = vld [vmem:[%s2525 + $0x18] sm:$0xff]
        %v2530 = vld [vmem:[%s2525 + $0x20] sm:$0xff]
        %v2531 = vld [vmem:[%s2525 + $0x28] sm:$0xff]
        %v2532 = vld [vmem:[%s2525 + $0x30] sm:$0xff]
        %v2533 = vld [vmem:[%s2525 + $0x38] sm:$0xff]
        %v2534 = vld [vmem:[%s2525 + $0x40] sm:$0xff]
        %v2535 = vld [vmem:[%s2525 + $0x48] sm:$0xff]
        %v2536 = vld [vmem:[%s2525 + $0x50] sm:$0xff]
        %v2537 = vld [vmem:[%s2525 + $0x58] sm:$0xff]
        %v2538 = vmul.f32 %v2523, %v2526
        %v2539 = vmul.f32 %v2522, %v2527
        %v2540 = vmul.f32 %v2521, %v2528
        %v2541 = vmul.f32 %v2520, %v2529
        %v2542 = vmul.f32 %v2519, %v2530
        %v2543 = vmul.f32 %v2518, %v2531
        %v2544 = vmul.f32 %v2517, %v2532
        %v2545 = vmul.f32 %v2516, %v2533
        %v2546 = vmul.f32 %v2515, %v2534
        %v2547 = vmul.f32 %v2514, %v2535
        %v2548 = vmul.f32 %v2513, %v2536
        %v2549 = vmul.f32 %v2524, %v2537
        %v2550 = vld [vmem:[%s7] sm:$0xff]
        %v2551 = vld [vmem:[%s7 + $0x8] sm:$0xff]
        %v2552 = vld [vmem:[%s7 + $0x10] sm:$0xff]
        %v2553 = vld [vmem:[%s7 + $0x18] sm:$0xff]
        %v2554 = vld [vmem:[%s7 + $0x20] sm:$0xff]
        %v2555 = vld [vmem:[%s7 + $0x28] sm:$0xff]
        %v2556 = vld [vmem:[%s7 + $0x30] sm:$0xff]
        %v2557 = vld [vmem:[%s7 + $0x38] sm:$0xff]
        %s2558 = scalar_lea.vmem %s7, 64
        %v2559 = vld [vmem:[%s2558] sm:$0xff]
        %v2560 = vld [vmem:[%s2558 + $0x8] sm:$0xff]
        %v2561 = vld [vmem:[%s2558 + $0x10] sm:$0xff]
        %v2562 = vld [vmem:[%s2558 + $0x18] sm:$0xff]
        %v2563 = vld [vmem:[%s2558 + $0x20] sm:$0xff]
        %v2564 = vld [vmem:[%s2558 + $0x28] sm:$0xff]
        %v2565 = vld [vmem:[%s2558 + $0x30] sm:$0xff]
        %v2566 = vld [vmem:[%s2558 + $0x38] sm:$0xff]
        %v2568 = vsel %vm2285, %v2389, 0
        %v2571 = vsel %vm2285, %v2394, 0
        %v2574 = vsel %vm2285, %v2399, 0
        %v2577 = vsel %vm2285, %v2404, 0
        %v2580 = vsel %vm2285, %v2409, 0
        %v2583 = vsel %vm2285, %v2414, 0
        %v2586 = vsel %vm2285, %v2419, 0
        %v2589 = vsel %vm2285, %v2424, 0
        %v2592 = vsel %vm2285, %v2429, 0
        %v2595 = vsel %vm2285, %v2434, 0
        %v2598 = vsel %vm2285, %v2439, 0
        %v2601 = vsel %vm2285, %v2444, 0
        %2603 = vmatprep.subr.mxu0 0.0
        %2604 = vmatpush1.msra.mxu0 %v2559
        %2605 = vmatprep.subr.mxu0 0.0
        %2606 = vmatpush1.msra.mxu0 %v2560
        %2607 = vmatprep.subr.mxu0 0.0
        %2608 = vmatpush1.msra.mxu0 %v2561
        %2609 = vmatprep.subr.mxu0 0.0
        %2610 = vmatpush1.msra.mxu0 %v2562
        %2611 = vmatprep.subr.mxu0 0.0
        %2612 = vmatpush1.msra.mxu0 %v2563
        %2613 = vmatprep.subr.mxu0 0.0
        %2614 = vmatpush1.msra.mxu0 %v2564
        %2615 = vmatprep.subr.mxu0 0.0
        %2616 = vmatpush1.msra.mxu0 %v2565
        %2617 = vmatprep.subr.mxu0 0.0
        %2618 = vmatpush1.msra.mxu0 %v2566
        %2619 = vmatprep.subr.mxu0 0.0
        %2620 = vmatpush1.msra.mxu0 0.0
        %2621 = vmatprep.subr.mxu0 0.0
        %2622 = vmatpush1.msra.mxu0 0.0
        %2623 = vmatprep.subr.mxu0 0.0
        %2624 = vmatpush1.msra.mxu0 0.0
        %2625 = vmatprep.subr.mxu0 0.0
        %2626 = vmatpush1.msra.mxu0 0.0
        %2627 = vmatprep.subr.mxu0 0.0
        %2628 = vmatpush1.msra.mxu0 0.0
        %2629 = vmatprep.subr.mxu0 0.0
        %2630 = vmatpush1.msra.mxu0 0.0
        %2631 = vmatprep.subr.mxu0 0.0
        %2632 = vmatpush1.msra.mxu0 0.0
        %2633 = vmatprep.subr.mxu0 0.0
        %2634 = vmatpush1.msra.mxu0 0.0
        %2635 = vmatprep.subr.mxu0 0.0
        %2636 = vmatpush1.msra.mxu0 0.0
        %2637 = vmatprep.subr.mxu0 0.0
        %2638 = vmatpush1.msra.mxu0 0.0
        %2639 = vmatprep.subr.mxu0 0.0
        %2640 = vmatpush1.msra.mxu0 0.0
        %2641 = vmatprep.subr.mxu0 0.0
        %2642 = vmatpush1.msra.mxu0 0.0
        %2643 = vmatprep.subr.mxu0 0.0
        %2644 = vmatpush1.msra.mxu0 0.0
        %2645 = vmatprep.subr.mxu0 0.0
        %2646 = vmatpush1.msra.mxu0 0.0
        %2647 = vmatprep.subr.mxu0 0.0
        %2648 = vmatpush1.msra.mxu0 0.0
        %2649 = vmatprep.subr.mxu0 0.0
        %2650 = vmatpush1.msra.mxu0 0.0
        %2651 = vmatprep.subr.mxu0 0.0
        %2652 = vmatpush1.msra.mxu0 0.0
        %2653 = vmatprep.subr.mxu0 0.0
        %2654 = vmatpush1.msra.mxu0 0.0
        %2655 = vmatprep.subr.mxu0 0.0
        %2656 = vmatpush1.msra.mxu0 0.0
        %2657 = vmatprep.subr.mxu0 0.0
        %2658 = vmatpush1.msra.mxu0 0.0
        %2659 = vmatprep.subr.mxu0 0.0
        %2660 = vmatpush1.msra.mxu0 0.0
        %2661 = vmatprep.subr.mxu0 0.0
        %2662 = vmatpush1.msra.mxu0 0.0
        %2663 = vmatprep.subr.mxu0 0.0
        %2664 = vmatpush1.msra.mxu0 0.0
        %2665 = vmatprep.subr.mxu0 0.0
        %2666 = vmatpush1.msra.mxu0 0.0
        %2667 = vmatprep.mubr.f32.mxu0 0.0
        %2668 = vmatmul.mubr.f32.gmra.mrb[0].mxu0 %v2568
        %v2669 = vpop.f32.mrb[0].mxu0
        %v2670 = vadd.f32 0.0, %v2669
        %v2671 = vpop.f32.mrb[0].mxu0
        %2672 = vmatprep.mubr.f32.mxu0 0.0
        %2673 = vmatmul.mubr.f32.gmra.mrb[0].mxu0 %v2571
        %v2674 = vpop.f32.mrb[0].mxu0
        %v2675 = vadd.f32 0.0, %v2674
        %v2676 = vpop.f32.mrb[0].mxu0
        %2677 = vmatprep.mubr.f32.mxu0 0.0
        %2678 = vmatmul.mubr.f32.gmra.mrb[0].mxu0 %v2574
        %v2679 = vpop.f32.mrb[0].mxu0
        %v2680 = vadd.f32 0.0, %v2679
        %v2681 = vpop.f32.mrb[0].mxu0
        %2682 = vmatprep.mubr.f32.mxu0 0.0
        %2683 = vmatmul.mubr.f32.gmra.mrb[0].mxu0 %v2577
        %v2684 = vpop.f32.mrb[0].mxu0
        %v2685 = vadd.f32 0.0, %v2684
        %v2686 = vpop.f32.mrb[0].mxu0
        %2687 = vmatprep.mubr.f32.mxu0 0.0
        %2688 = vmatmul.mubr.f32.gmra.mrb[0].mxu0 %v2580
        %v2689 = vpop.f32.mrb[0].mxu0
        %v2690 = vadd.f32 0.0, %v2689
        %v2691 = vpop.f32.mrb[0].mxu0
        %2692 = vmatprep.mubr.f32.mxu0 0.0
        %2693 = vmatmul.mubr.f32.gmra.mrb[0].mxu0 %v2583
        %v2694 = vpop.f32.mrb[0].mxu0
        %v2695 = vadd.f32 0.0, %v2694
        %v2696 = vpop.f32.mrb[0].mxu0
        %2697 = vmatprep.mubr.f32.mxu0 0.0
        %2698 = vmatmul.mubr.f32.gmra.mrb[0].mxu0 %v2586
        %v2699 = vpop.f32.mrb[0].mxu0
        %v2700 = vadd.f32 0.0, %v2699
        %v2701 = vpop.f32.mrb[0].mxu0
        %2702 = vmatprep.mubr.f32.mxu0 0.0
        %2703 = vmatmul.mubr.f32.gmra.mrb[0].mxu0 %v2589
        %v2704 = vpop.f32.mrb[0].mxu0
        %v2705 = vadd.f32 0.0, %v2704
        %v2706 = vpop.f32.mrb[0].mxu0
        %2707 = vmatprep.mubr.f32.mxu0 0.0
        %2708 = vmatmul.mubr.f32.gmra.mrb[0].mxu0 %v2592
        %v2709 = vpop.f32.mrb[0].mxu0
        %v2710 = vadd.f32 0.0, %v2709
        %v2711 = vpop.f32.mrb[0].mxu0
        %2712 = vmatprep.mubr.f32.mxu0 0.0
        %2713 = vmatmul.mubr.f32.gmra.mrb[0].mxu0 %v2595
        %v2714 = vpop.f32.mrb[0].mxu0
        %v2715 = vadd.f32 0.0, %v2714
        %v2716 = vpop.f32.mrb[0].mxu0
        %2717 = vmatprep.mubr.f32.mxu0 0.0
        %2718 = vmatmul.mubr.f32.gmra.mrb[0].mxu0 %v2598
        %v2719 = vpop.f32.mrb[0].mxu0
        %v2720 = vadd.f32 0.0, %v2719
        %v2721 = vpop.f32.mrb[0].mxu0
        %2722 = vmatprep.mubr.f32.mxu0 0.0
        %2723 = vmatmul.mubr.f32.gmra.mrb[0].mxu0 %v2601
        %v2724 = vpop.f32.mrb[0].mxu0
        %v2725 = vadd.f32 0.0, %v2724
        %v2726 = vpop.f32.mrb[0].mxu0
        %2727 = vdwg.mxu0
        %v2729 = vsel %vm2285, %v2489, 0
        %v2732 = vsel %vm2285, %v2490, 0
        %v2735 = vsel %vm2285, %v2491, 0
        %v2738 = vsel %vm2285, %v2492, 0
        %v2741 = vsel %vm2285, %v2493, 0
        %v2744 = vsel %vm2285, %v2494, 0
        %v2747 = vsel %vm2285, %v2495, 0
        %v2750 = vsel %vm2285, %v2496, 0
        %v2753 = vsel %vm2285, %v2497, 0
        %v2756 = vsel %vm2285, %v2498, 0
        %v2759 = vsel %vm2285, %v2499, 0
        %v2762 = vsel %vm2285, %v2500, 0
        %2764 = vmatprep.subr.mxu0 0.0
        %2765 = vmatpush1.msra.mxu0 %v2550
        %2766 = vmatprep.subr.mxu0 0.0
        %2767 = vmatpush1.msra.mxu0 %v2551
        %2768 = vmatprep.subr.mxu0 0.0
        %2769 = vmatpush1.msra.mxu0 %v2552
        %2770 = vmatprep.subr.mxu0 0.0
        %2771 = vmatpush1.msra.mxu0 %v2553
        %2772 = vmatprep.subr.mxu0 0.0
        %2773 = vmatpush1.msra.mxu0 %v2554
        %2774 = vmatprep.subr.mxu0 0.0
        %2775 = vmatpush1.msra.mxu0 %v2555
        %2776 = vmatprep.subr.mxu0 0.0
        %2777 = vmatpush1.msra.mxu0 %v2556
        %2778 = vmatprep.subr.mxu0 0.0
        %2779 = vmatpush1.msra.mxu0 %v2557
        %2780 = vmatprep.subr.mxu0 0.0
        %2781 = vmatpush1.msra.mxu0 0.0
        %2782 = vmatprep.subr.mxu0 0.0
        %2783 = vmatpush1.msra.mxu0 0.0
        %2784 = vmatprep.subr.mxu0 0.0
        %2785 = vmatpush1.msra.mxu0 0.0
        %2786 = vmatprep.subr.mxu0 0.0
        %2787 = vmatpush1.msra.mxu0 0.0
        %2788 = vmatprep.subr.mxu0 0.0
        %2789 = vmatpush1.msra.mxu0 0.0
        %2790 = vmatprep.subr.mxu0 0.0
        %2791 = vmatpush1.msra.mxu0 0.0
        %2792 = vmatprep.subr.mxu0 0.0
        %2793 = vmatpush1.msra.mxu0 0.0
        %2794 = vmatprep.subr.mxu0 0.0
        %2795 = vmatpush1.msra.mxu0 0.0
        %2796 = vmatprep.subr.mxu0 0.0
        %2797 = vmatpush1.msra.mxu0 0.0
        %2798 = vmatprep.subr.mxu0 0.0
        %2799 = vmatpush1.msra.mxu0 0.0
        %2800 = vmatprep.subr.mxu0 0.0
        %2801 = vmatpush1.msra.mxu0 0.0
        %2802 = vmatprep.subr.mxu0 0.0
        %2803 = vmatpush1.msra.mxu0 0.0
        %2804 = vmatprep.subr.mxu0 0.0
        %2805 = vmatpush1.msra.mxu0 0.0
        %2806 = vmatprep.subr.mxu0 0.0
        %2807 = vmatpush1.msra.mxu0 0.0
        %2808 = vmatprep.subr.mxu0 0.0
        %2809 = vmatpush1.msra.mxu0 0.0
        %2810 = vmatprep.subr.mxu0 0.0
        %2811 = vmatpush1.msra.mxu0 0.0
        %2812 = vmatprep.subr.mxu0 0.0
        %2813 = vmatpush1.msra.mxu0 0.0
        %2814 = vmatprep.subr.mxu0 0.0
        %2815 = vmatpush1.msra.mxu0 0.0
        %2816 = vmatprep.subr.mxu0 0.0
        %2817 = vmatpush1.msra.mxu0 0.0
        %2818 = vmatprep.subr.mxu0 0.0
        %2819 = vmatpush1.msra.mxu0 0.0
        %2820 = vmatprep.subr.mxu0 0.0
        %2821 = vmatpush1.msra.mxu0 0.0
        %2822 = vmatprep.subr.mxu0 0.0
        %2823 = vmatpush1.msra.mxu0 0.0
        %2824 = vmatprep.subr.mxu0 0.0
        %2825 = vmatpush1.msra.mxu0 0.0
        %2826 = vmatprep.subr.mxu0 0.0
        %2827 = vmatpush1.msra.mxu0 0.0
        %2828 = vmatprep.mubr.f32.mxu0 0.0
        %2829 = vmatmul.mubr.f32.gmra.mrb[0].mxu0 %v2729
        %v2830 = vpop.f32.mrb[0].mxu0
        %v2831 = vadd.f32 %v2670, %v2830
        %v2832 = vpop.f32.mrb[0].mxu0
        %2833 = vmatprep.mubr.f32.mxu0 0.0
        %2834 = vmatmul.mubr.f32.gmra.mrb[0].mxu0 %v2732
        %v2835 = vpop.f32.mrb[0].mxu0
        %v2836 = vadd.f32 %v2675, %v2835
        %v2837 = vpop.f32.mrb[0].mxu0
        %2838 = vmatprep.mubr.f32.mxu0 0.0
        %2839 = vmatmul.mubr.f32.gmra.mrb[0].mxu0 %v2735
        %v2840 = vpop.f32.mrb[0].mxu0
        %v2841 = vadd.f32 %v2680, %v2840
        %v2842 = vpop.f32.mrb[0].mxu0
        %2843 = vmatprep.mubr.f32.mxu0 0.0
        %2844 = vmatmul.mubr.f32.gmra.mrb[0].mxu0 %v2738
        %v2845 = vpop.f32.mrb[0].mxu0
        %v2846 = vadd.f32 %v2685, %v2845
        %v2847 = vpop.f32.mrb[0].mxu0
        %2848 = vmatprep.mubr.f32.mxu0 0.0
        %2849 = vmatmul.mubr.f32.gmra.mrb[0].mxu0 %v2741
        %v2850 = vpop.f32.mrb[0].mxu0
        %v2851 = vadd.f32 %v2690, %v2850
        %v2852 = vpop.f32.mrb[0].mxu0
        %2853 = vmatprep.mubr.f32.mxu0 0.0
        %2854 = vmatmul.mubr.f32.gmra.mrb[0].mxu0 %v2744
        %v2855 = vpop.f32.mrb[0].mxu0
        %v2856 = vadd.f32 %v2695, %v2855
        %v2857 = vpop.f32.mrb[0].mxu0
        %2858 = vmatprep.mubr.f32.mxu0 0.0
        %2859 = vmatmul.mubr.f32.gmra.mrb[0].mxu0 %v2747
        %v2860 = vpop.f32.mrb[0].mxu0
        %v2861 = vadd.f32 %v2700, %v2860
        %v2862 = vpop.f32.mrb[0].mxu0
        %2863 = vmatprep.mubr.f32.mxu0 0.0
        %2864 = vmatmul.mubr.f32.gmra.mrb[0].mxu0 %v2750
        %v2865 = vpop.f32.mrb[0].mxu0
        %v2866 = vadd.f32 %v2705, %v2865
        %v2867 = vpop.f32.mrb[0].mxu0
        %2868 = vmatprep.mubr.f32.mxu0 0.0
        %2869 = vmatmul.mubr.f32.gmra.mrb[0].mxu0 %v2753
        %v2870 = vpop.f32.mrb[0].mxu0
        %v2871 = vadd.f32 %v2710, %v2870
        %v2872 = vpop.f32.mrb[0].mxu0
        %2873 = vmatprep.mubr.f32.mxu0 0.0
        %2874 = vmatmul.mubr.f32.gmra.mrb[0].mxu0 %v2756
        %v2875 = vpop.f32.mrb[0].mxu0
        %v2876 = vadd.f32 %v2715, %v2875
        %v2877 = vpop.f32.mrb[0].mxu0
        %2878 = vmatprep.mubr.f32.mxu0 0.0
        %2879 = vmatmul.mubr.f32.gmra.mrb[0].mxu0 %v2759
        %v2880 = vpop.f32.mrb[0].mxu0
        %v2881 = vadd.f32 %v2720, %v2880
        %v2882 = vpop.f32.mrb[0].mxu0
        %2883 = vmatprep.mubr.f32.mxu0 0.0
        %2884 = vmatmul.mubr.f32.gmra.mrb[0].mxu0 %v2762
        %v2885 = vpop.f32.mrb[0].mxu0
        %v2886 = vadd.f32 %v2725, %v2885
        %v2887 = vpop.f32.mrb[0].mxu0
        %2888 = vdwg.mxu0
        %s2889 = scalar_lea.vmem %s7, 128
        %v2890 = vld [vmem:[%s2889] sm:$0xff]
        %v2891 = vld [vmem:[%s2889 + $0x8] sm:$0xff]
        %v2892 = vld [vmem:[%s2889 + $0x10] sm:$0xff]
        %v2893 = vld [vmem:[%s2889 + $0x18] sm:$0xff]
        %v2894 = vld [vmem:[%s2889 + $0x20] sm:$0xff]
        %v2895 = vld [vmem:[%s2889 + $0x28] sm:$0xff]
        %v2896 = vld [vmem:[%s2889 + $0x30] sm:$0xff]
        %v2897 = vld [vmem:[%s2889 + $0x38] sm:$0xff]
        %v2899 = vsel %vm2285, %v2538, 0
        %v2902 = vsel %vm2285, %v2539, 0
        %v2905 = vsel %vm2285, %v2540, 0
        %v2908 = vsel %vm2285, %v2541, 0
        %v2911 = vsel %vm2285, %v2542, 0
        %v2914 = vsel %vm2285, %v2543, 0
        %v2917 = vsel %vm2285, %v2544, 0
        %v2920 = vsel %vm2285, %v2545, 0
        %v2923 = vsel %vm2285, %v2546, 0
        %v2926 = vsel %vm2285, %v2547, 0
        %v2929 = vsel %vm2285, %v2548, 0
        %v2932 = vsel %vm2285, %v2549, 0
        %2934 = vmatprep.subr.mxu0 0.0
        %2935 = vmatpush1.msra.mxu0 %v2890
        %2936 = vmatprep.subr.mxu0 0.0
        %2937 = vmatpush1.msra.mxu0 %v2891
        %2938 = vmatprep.subr.mxu0 0.0
        %2939 = vmatpush1.msra.mxu0 %v2892
        %2940 = vmatprep.subr.mxu0 0.0
        %2941 = vmatpush1.msra.mxu0 %v2893
        %2942 = vmatprep.subr.mxu0 0.0
        %2943 = vmatpush1.msra.mxu0 %v2894
        %2944 = vmatprep.subr.mxu0 0.0
        %2945 = vmatpush1.msra.mxu0 %v2895
        %2946 = vmatprep.subr.mxu0 0.0
        %2947 = vmatpush1.msra.mxu0 %v2896
        %2948 = vmatprep.subr.mxu0 0.0
        %2949 = vmatpush1.msra.mxu0 %v2897
        %2950 = vmatprep.subr.mxu0 0.0
        %2951 = vmatpush1.msra.mxu0 0.0
        %2952 = vmatprep.subr.mxu0 0.0
        %2953 = vmatpush1.msra.mxu0 0.0
        %2954 = vmatprep.subr.mxu0 0.0
        %2955 = vmatpush1.msra.mxu0 0.0
        %2956 = vmatprep.subr.mxu0 0.0
        %2957 = vmatpush1.msra.mxu0 0.0
        %2958 = vmatprep.subr.mxu0 0.0
        %2959 = vmatpush1.msra.mxu0 0.0
        %2960 = vmatprep.subr.mxu0 0.0
        %2961 = vmatpush1.msra.mxu0 0.0
        %2962 = vmatprep.subr.mxu0 0.0
        %2963 = vmatpush1.msra.mxu0 0.0
        %2964 = vmatprep.subr.mxu0 0.0
        %2965 = vmatpush1.msra.mxu0 0.0
        %2966 = vmatprep.subr.mxu0 0.0
        %2967 = vmatpush1.msra.mxu0 0.0
        %2968 = vmatprep.subr.mxu0 0.0
        %2969 = vmatpush1.msra.mxu0 0.0
        %2970 = vmatprep.subr.mxu0 0.0
        %2971 = vmatpush1.msra.mxu0 0.0
        %2972 = vmatprep.subr.mxu0 0.0
        %2973 = vmatpush1.msra.mxu0 0.0
        %2974 = vmatprep.subr.mxu0 0.0
        %2975 = vmatpush1.msra.mxu0 0.0
        %2976 = vmatprep.subr.mxu0 0.0
        %2977 = vmatpush1.msra.mxu0 0.0
        %2978 = vmatprep.subr.mxu0 0.0
        %2979 = vmatpush1.msra.mxu0 0.0
        %2980 = vmatprep.subr.mxu0 0.0
        %2981 = vmatpush1.msra.mxu0 0.0
        %2982 = vmatprep.subr.mxu0 0.0
        %2983 = vmatpush1.msra.mxu0 0.0
        %2984 = vmatprep.subr.mxu0 0.0
        %2985 = vmatpush1.msra.mxu0 0.0
        %2986 = vmatprep.subr.mxu0 0.0
        %2987 = vmatpush1.msra.mxu0 0.0
        %2988 = vmatprep.subr.mxu0 0.0
        %2989 = vmatpush1.msra.mxu0 0.0
        %2990 = vmatprep.subr.mxu0 0.0
        %2991 = vmatpush1.msra.mxu0 0.0
        %2992 = vmatprep.subr.mxu0 0.0
        %2993 = vmatpush1.msra.mxu0 0.0
        %2994 = vmatprep.subr.mxu0 0.0
        %2995 = vmatpush1.msra.mxu0 0.0
        %2996 = vmatprep.subr.mxu0 0.0
        %2997 = vmatpush1.msra.mxu0 0.0
        %2998 = vmatprep.mubr.f32.mxu0 0.0
        %2999 = vmatmul.mubr.f32.gmra.mrb[0].mxu0 %v2899
        %v3000 = vpop.f32.mrb[0].mxu0
        %v3001 = vadd.f32 0.0, %v3000
        %v3002 = vpop.f32.mrb[0].mxu0
        %3003 = vmatprep.mubr.f32.mxu0 0.0
        %3004 = vmatmul.mubr.f32.gmra.mrb[0].mxu0 %v2902
        %v3005 = vpop.f32.mrb[0].mxu0
        %v3006 = vadd.f32 0.0, %v3005
        %v3007 = vpop.f32.mrb[0].mxu0
        %3008 = vmatprep.mubr.f32.mxu0 0.0
        %3009 = vmatmul.mubr.f32.gmra.mrb[0].mxu0 %v2905
        %v3010 = vpop.f32.mrb[0].mxu0
        %v3011 = vadd.f32 0.0, %v3010
        %v3012 = vpop.f32.mrb[0].mxu0
        %3013 = vmatprep.mubr.f32.mxu0 0.0
        %3014 = vmatmul.mubr.f32.gmra.mrb[0].mxu0 %v2908
        %v3015 = vpop.f32.mrb[0].mxu0
        %v3016 = vadd.f32 0.0, %v3015
        %v3017 = vpop.f32.mrb[0].mxu0
        %3018 = vmatprep.mubr.f32.mxu0 0.0
        %3019 = vmatmul.mubr.f32.gmra.mrb[0].mxu0 %v2911
        %v3020 = vpop.f32.mrb[0].mxu0
        %v3021 = vadd.f32 0.0, %v3020
        %v3022 = vpop.f32.mrb[0].mxu0
        %3023 = vmatprep.mubr.f32.mxu0 0.0
        %3024 = vmatmul.mubr.f32.gmra.mrb[0].mxu0 %v2914
        %v3025 = vpop.f32.mrb[0].mxu0
        %v3026 = vadd.f32 0.0, %v3025
        %v3027 = vpop.f32.mrb[0].mxu0
        %3028 = vmatprep.mubr.f32.mxu0 0.0
        %3029 = vmatmul.mubr.f32.gmra.mrb[0].mxu0 %v2917
        %v3030 = vpop.f32.mrb[0].mxu0
        %v3031 = vadd.f32 0.0, %v3030
        %v3032 = vpop.f32.mrb[0].mxu0
        %3033 = vmatprep.mubr.f32.mxu0 0.0
        %3034 = vmatmul.mubr.f32.gmra.mrb[0].mxu0 %v2920
        %v3035 = vpop.f32.mrb[0].mxu0
        %v3036 = vadd.f32 0.0, %v3035
        %v3037 = vpop.f32.mrb[0].mxu0
        %3038 = vmatprep.mubr.f32.mxu0 0.0
        %3039 = vmatmul.mubr.f32.gmra.mrb[0].mxu0 %v2923
        %v3040 = vpop.f32.mrb[0].mxu0
        %v3041 = vadd.f32 0.0, %v3040
        %v3042 = vpop.f32.mrb[0].mxu0
        %3043 = vmatprep.mubr.f32.mxu0 0.0
        %3044 = vmatmul.mubr.f32.gmra.mrb[0].mxu0 %v2926
        %v3045 = vpop.f32.mrb[0].mxu0
        %v3046 = vadd.f32 0.0, %v3045
        %v3047 = vpop.f32.mrb[0].mxu0
        %3048 = vmatprep.mubr.f32.mxu0 0.0
        %3049 = vmatmul.mubr.f32.gmra.mrb[0].mxu0 %v2929
        %v3050 = vpop.f32.mrb[0].mxu0
        %v3051 = vadd.f32 0.0, %v3050
        %v3052 = vpop.f32.mrb[0].mxu0
        %3053 = vmatprep.mubr.f32.mxu0 0.0
        %3054 = vmatmul.mubr.f32.gmra.mrb[0].mxu0 %v2932
        %v3055 = vpop.f32.mrb[0].mxu0
        %v3056 = vadd.f32 0.0, %v3055
        %v3057 = vpop.f32.mrb[0].mxu0
        %3058 = vdwg.mxu0
        %v3059 = vadd.f32 %v2831, %v3001
        %v3060 = vadd.f32 %v2836, %v3006
        %v3061 = vadd.f32 %v2841, %v3011
        %v3062 = vadd.f32 %v2846, %v3016
        %v3063 = vadd.f32 %v2851, %v3021
        %v3064 = vadd.f32 %v2856, %v3026
        %v3065 = vadd.f32 %v2861, %v3031
        %v3066 = vadd.f32 %v2866, %v3036
        %v3067 = vadd.f32 %v2871, %v3041
        %v3068 = vadd.f32 %v2876, %v3046
        %v3069 = vadd.f32 %v2881, %v3051
        %v3070 = vadd.f32 %v2886, %v3056
        %v3071 = vld [vmem:[%s8] sm:$0x1]
        %v3073 = vlaneseq
        %v3074 = vshrl.u32 %v3073, 7
        %v3075 = vsub.s32 0, %v3074
        %v3076 = vrot.slane %v3071, %v3075
        %v3078 = vadd.f32 %v3059, %v3076
        %v3079 = vadd.f32 %v3060, %v3076
        %v3080 = vadd.f32 %v3061, %v3076
        %v3081 = vadd.f32 %v3062, %v3076
        %v3082 = vadd.f32 %v3063, %v3076
        %v3083 = vadd.f32 %v3064, %v3076
        %v3084 = vadd.f32 %v3065, %v3076
        %v3085 = vadd.f32 %v3066, %v3076
        %v3086 = vadd.f32 %v3067, %v3076
        %v3087 = vadd.f32 %v3068, %v3076
        %v3088 = vadd.f32 %v3069, %v3076
        %v3089 = vadd.f32 %v3070, %v3076
        %v3090 = vmax.f32 %v3078, 0.0
        %v3091 = vmax.f32 %v3079, 0.0
        %v3092 = vmax.f32 %v3080, 0.0
        %v3093 = vmax.f32 %v3081, 0.0
        %v3094 = vmax.f32 %v3082, 0.0
        %v3095 = vmax.f32 %v3083, 0.0
        %v3096 = vmax.f32 %v3084, 0.0
        %v3097 = vmax.f32 %v3085, 0.0
        %v3098 = vmax.f32 %v3086, 0.0
        %v3099 = vmax.f32 %v3087, 0.0
        %v3100 = vmax.f32 %v3088, 0.0
        %v3101 = vmax.f32 %v3089, 0.0
        %3102 = vrot.lane.b32.xlu0 %v3090, 96
        %v3103 = vpop.permute.xlu0 %3102
        %3104 = vrot.lane.b32.xlu0 %v3091, 96
        %v3105 = vpop.permute.xlu0 %3104
        %3106 = vrot.lane.b32.xlu0 %v3092, 96
        %v3107 = vpop.permute.xlu0 %3106
        %3108 = vrot.lane.b32.xlu0 %v3093, 96
        %v3109 = vpop.permute.xlu0 %3108
        %3110 = vrot.lane.b32.xlu0 %v3094, 96
        %v3111 = vpop.permute.xlu0 %3110
        %3112 = vrot.lane.b32.xlu0 %v3095, 96
        %v3113 = vpop.permute.xlu0 %3112
        %3114 = vrot.lane.b32.xlu0 %v3096, 96
        %v3115 = vpop.permute.xlu0 %3114
        %3116 = vrot.lane.b32.xlu0 %v3097, 96
        %v3117 = vpop.permute.xlu0 %3116
        %3118 = vrot.lane.b32.xlu0 %v3098, 96
        %v3119 = vpop.permute.xlu0 %3118
        %3120 = vrot.lane.b32.xlu0 %v3099, 96
        %v3121 = vpop.permute.xlu0 %3120
        %3122 = vrot.lane.b32.xlu0 %v3100, 96
        %v3123 = vpop.permute.xlu0 %3122
        %3124 = vrot.lane.b32.xlu0 %v3101, 96
        %v3125 = vpop.permute.xlu0 %3124
        %v3126 = vmax.f32 %v3090, %v3103
        %v3127 = vmax.f32 %v3091, %v3105
        %v3128 = vmax.f32 %v3092, %v3107
        %v3129 = vmax.f32 %v3093, %v3109
        %v3130 = vmax.f32 %v3094, %v3111
        %v3131 = vmax.f32 %v3095, %v3113
        %v3132 = vmax.f32 %v3096, %v3115
        %v3133 = vmax.f32 %v3097, %v3117
        %v3134 = vmax.f32 %v3098, %v3119
        %v3135 = vmax.f32 %v3099, %v3121
        %v3136 = vmax.f32 %v3100, %v3123
        %v3137 = vmax.f32 %v3101, %v3125
        %v3138 = vld [vmem:[%s10] sm:$0xff]
        %v3139 = vld [vmem:[%s10 + $0x8] sm:$0xff]
        %v3140 = vld [vmem:[%s10 + $0x10] sm:$0xff]
        %v3141 = vld [vmem:[%s10 + $0x18] sm:$0xff]
        %v3142 = vld [vmem:[%s10 + $0x20] sm:$0xff]
        %v3143 = vld [vmem:[%s10 + $0x28] sm:$0xff]
        %v3144 = vld [vmem:[%s10 + $0x30] sm:$0xff]
        %v3145 = vld [vmem:[%s10 + $0x38] sm:$0xff]
        %v3146 = vld [vmem:[%s10 + $0x40] sm:$0xff]
        %v3147 = vld [vmem:[%s10 + $0x48] sm:$0xff]
        %v3148 = vld [vmem:[%s10 + $0x50] sm:$0xff]
        %v3149 = vld [vmem:[%s10 + $0x58] sm:$0xff]
        %v3150 = vld [vmem:[%s10 + $0x60] sm:$0xff]
        %v3151 = vld [vmem:[%s10 + $0x68] sm:$0xff]
        %v3152 = vld [vmem:[%s10 + $0x70] sm:$0xff]
        %v3153 = vld [vmem:[%s10 + $0x78] sm:$0xff]
        %3154 = vmatprep.subr.mxu0 0.0
        %3155 = vmatpush1.msra.mxu0 %v3138
        %3156 = vmatprep.subr.mxu0 0.0
        %3157 = vmatpush1.msra.mxu0 %v3139
        %3158 = vmatprep.subr.mxu0 0.0
        %3159 = vmatpush1.msra.mxu0 %v3140
        %3160 = vmatprep.subr.mxu0 0.0
        %3161 = vmatpush1.msra.mxu0 %v3141
        %3162 = vmatprep.subr.mxu0 0.0
        %3163 = vmatpush1.msra.mxu0 %v3142
        %3164 = vmatprep.subr.mxu0 0.0
        %3165 = vmatpush1.msra.mxu0 %v3143
        %3166 = vmatprep.subr.mxu0 0.0
        %3167 = vmatpush1.msra.mxu0 %v3144
        %3168 = vmatprep.subr.mxu0 0.0
        %3169 = vmatpush1.msra.mxu0 %v3145
        %3170 = vmatprep.subr.mxu0 0.0
        %3171 = vmatpush1.msra.mxu0 %v3146
        %3172 = vmatprep.subr.mxu0 0.0
        %3173 = vmatpush1.msra.mxu0 %v3147
        %3174 = vmatprep.subr.mxu0 0.0
        %3175 = vmatpush1.msra.mxu0 %v3148
        %3176 = vmatprep.subr.mxu0 0.0
        %3177 = vmatpush1.msra.mxu0 %v3149
        %3178 = vmatprep.subr.mxu0 0.0
        %3179 = vmatpush1.msra.mxu0 %v3150
        %3180 = vmatprep.subr.mxu0 0.0
        %3181 = vmatpush1.msra.mxu0 %v3151
        %3182 = vmatprep.subr.mxu0 0.0
        %3183 = vmatpush1.msra.mxu0 %v3152
        %3184 = vmatprep.subr.mxu0 0.0
        %3185 = vmatpush1.msra.mxu0 %v3153
        %3186 = vmatprep.subr.mxu0 0.0
        %3187 = vmatpush1.msra.mxu0 0.0
        %3188 = vmatprep.subr.mxu0 0.0
        %3189 = vmatpush1.msra.mxu0 0.0
        %3190 = vmatprep.subr.mxu0 0.0
        %3191 = vmatpush1.msra.mxu0 0.0
        %3192 = vmatprep.subr.mxu0 0.0
        %3193 = vmatpush1.msra.mxu0 0.0
        %3194 = vmatprep.subr.mxu0 0.0
        %3195 = vmatpush1.msra.mxu0 0.0
        %3196 = vmatprep.subr.mxu0 0.0
        %3197 = vmatpush1.msra.mxu0 0.0
        %3198 = vmatprep.subr.mxu0 0.0
        %3199 = vmatpush1.msra.mxu0 0.0
        %3200 = vmatprep.subr.mxu0 0.0
        %3201 = vmatpush1.msra.mxu0 0.0
        %3202 = vmatprep.subr.mxu0 0.0
        %3203 = vmatpush1.msra.mxu0 0.0
        %3204 = vmatprep.subr.mxu0 0.0
        %3205 = vmatpush1.msra.mxu0 0.0
        %3206 = vmatprep.subr.mxu0 0.0
        %3207 = vmatpush1.msra.mxu0 0.0
        %3208 = vmatprep.subr.mxu0 0.0
        %3209 = vmatpush1.msra.mxu0 0.0
        %3210 = vmatprep.subr.mxu0 0.0
        %3211 = vmatpush1.msra.mxu0 0.0
        %3212 = vmatprep.subr.mxu0 0.0
        %3213 = vmatpush1.msra.mxu0 0.0
        %3214 = vmatprep.subr.mxu0 0.0
        %3215 = vmatpush1.msra.mxu0 0.0
        %3216 = vmatprep.subr.mxu0 0.0
        %3217 = vmatpush1.msra.mxu0 0.0
        %3218 = vmatprep.mubr.f32.mxu0 0.0
        %3219 = vmatmul.mubr.f32.gmra.mrb[0].mxu0 %v3126
        %v3220 = vpop.f32.mrb[0].mxu0
        %v3221 = vadd.f32 0.0, %v3220
        %v3222 = vpop.f32.mrb[0].mxu0
        %3223 = vmatprep.mubr.f32.mxu0 0.0
        %3224 = vmatmul.mubr.f32.gmra.mrb[0].mxu0 %v3127
        %v3225 = vpop.f32.mrb[0].mxu0
        %v3226 = vadd.f32 0.0, %v3225
        %v3227 = vpop.f32.mrb[0].mxu0
        %3228 = vmatprep.mubr.f32.mxu0 0.0
        %3229 = vmatmul.mubr.f32.gmra.mrb[0].mxu0 %v3128
        %v3230 = vpop.f32.mrb[0].mxu0
        %v3231 = vadd.f32 0.0, %v3230
        %v3232 = vpop.f32.mrb[0].mxu0
        %3233 = vmatprep.mubr.f32.mxu0 0.0
        %3234 = vmatmul.mubr.f32.gmra.mrb[0].mxu0 %v3129
        %v3235 = vpop.f32.mrb[0].mxu0
        %v3236 = vadd.f32 0.0, %v3235
        %v3237 = vpop.f32.mrb[0].mxu0
        %3238 = vmatprep.mubr.f32.mxu0 0.0
        %3239 = vmatmul.mubr.f32.gmra.mrb[0].mxu0 %v3130
        %v3240 = vpop.f32.mrb[0].mxu0
        %v3241 = vadd.f32 0.0, %v3240
        %v3242 = vpop.f32.mrb[0].mxu0
        %3243 = vmatprep.mubr.f32.mxu0 0.0
        %3244 = vmatmul.mubr.f32.gmra.mrb[0].mxu0 %v3131
        %v3245 = vpop.f32.mrb[0].mxu0
        %v3246 = vadd.f32 0.0, %v3245
        %v3247 = vpop.f32.mrb[0].mxu0
        %3248 = vmatprep.mubr.f32.mxu0 0.0
        %3249 = vmatmul.mubr.f32.gmra.mrb[0].mxu0 %v3132
        %v3250 = vpop.f32.mrb[0].mxu0
        %v3251 = vadd.f32 0.0, %v3250
        %v3252 = vpop.f32.mrb[0].mxu0
        %3253 = vmatprep.mubr.f32.mxu0 0.0
        %3254 = vmatmul.mubr.f32.gmra.mrb[0].mxu0 %v3133
        %v3255 = vpop.f32.mrb[0].mxu0
        %v3256 = vadd.f32 0.0, %v3255
        %v3257 = vpop.f32.mrb[0].mxu0
        %3258 = vmatprep.mubr.f32.mxu0 0.0
        %3259 = vmatmul.mubr.f32.gmra.mrb[0].mxu0 %v3134
        %v3260 = vpop.f32.mrb[0].mxu0
        %v3261 = vadd.f32 0.0, %v3260
        %v3262 = vpop.f32.mrb[0].mxu0
        %3263 = vmatprep.mubr.f32.mxu0 0.0
        %3264 = vmatmul.mubr.f32.gmra.mrb[0].mxu0 %v3135
        %v3265 = vpop.f32.mrb[0].mxu0
        %v3266 = vadd.f32 0.0, %v3265
        %v3267 = vpop.f32.mrb[0].mxu0
        %3268 = vmatprep.mubr.f32.mxu0 0.0
        %3269 = vmatmul.mubr.f32.gmra.mrb[0].mxu0 %v3136
        %v3270 = vpop.f32.mrb[0].mxu0
        %v3271 = vadd.f32 0.0, %v3270
        %v3272 = vpop.f32.mrb[0].mxu0
        %3273 = vmatprep.mubr.f32.mxu0 0.0
        %3274 = vmatmul.mubr.f32.gmra.mrb[0].mxu0 %v3137
        %v3275 = vpop.f32.mrb[0].mxu0
        %v3276 = vadd.f32 0.0, %v3275
        %v3277 = vpop.f32.mrb[0].mxu0
        %3278 = vdwg.mxu0
        %v3279 = vrot.slane %v3221, 1
        %v3280 = vrot.slane %v3226, 1
        %v3281 = vrot.slane %v3231, 1
        %v3282 = vrot.slane %v3236, 1
        %v3283 = vrot.slane %v3241, 1
        %v3284 = vrot.slane %v3246, 1
        %v3285 = vrot.slane %v3251, 1
        %v3286 = vrot.slane %v3256, 1
        %v3287 = vrot.slane %v3261, 1
        %v3288 = vrot.slane %v3266, 1
        %v3289 = vrot.slane %v3271, 1
        %v3290 = vrot.slane %v3276, 1
        %v3291 = vsel %vm1010, %v3289, %v3290
        %v3292 = vsel %vm1010, %v3288, %v3289
        %v3293 = vsel %vm1010, %v3287, %v3288
        %v3294 = vsel %vm1010, %v3286, %v3287
        %v3295 = vsel %vm1010, %v3285, %v3286
        %v3296 = vsel %vm1010, %v3284, %v3285
        %v3297 = vsel %vm1010, %v3283, %v3284
        %v3298 = vsel %vm1010, %v3282, %v3283
        %v3299 = vsel %vm1010, %v3281, %v3282
        %v3300 = vsel %vm1010, %v3280, %v3281
        %v3301 = vsel %vm1010, %v3279, %v3280
        %v3302 = vsel %vm1010, %v3290, %v3279
        %v3303 = vmax.f32 %v3221, %v3301
        %v3304 = vmax.f32 %v3226, %v3300
        %v3305 = vmax.f32 %v3231, %v3299
        %v3306 = vmax.f32 %v3236, %v3298
        %v3307 = vmax.f32 %v3241, %v3297
        %v3308 = vmax.f32 %v3246, %v3296
        %v3309 = vmax.f32 %v3251, %v3295
        %v3310 = vmax.f32 %v3256, %v3294
        %v3311 = vmax.f32 %v3261, %v3293
        %v3312 = vmax.f32 %v3266, %v3292
        %v3313 = vmax.f32 %v3271, %v3291
        %v3314 = vmax.f32 %v3276, %v3302
        %vm3315 = vcmask 785408
        %v3317 = vsel %vm3315, %v2447, 0
        %v3320 = vsel %vm3315, %v2448, 0
        %v3323 = vsel %vm3315, %v2449, 0
        %v3326 = vsel %vm3315, %v2450, 0
        %v3329 = vsel %vm3315, %v2451, 0
        %v3332 = vsel %vm3315, %v2452, 0
        %3334 = vmatprep.subr.mxu0 0.0
        %3335 = vmatpush1.msra.mxu0 %v3303
        %3336 = vmatprep.subr.mxu0 0.0
        %3337 = vmatpush1.msra.mxu0 %v3304
        %3338 = vmatprep.subr.mxu0 0.0
        %3339 = vmatpush1.msra.mxu0 %v3305
        %3340 = vmatprep.subr.mxu0 0.0
        %3341 = vmatpush1.msra.mxu0 %v3306
        %3342 = vmatprep.subr.mxu0 0.0
        %3343 = vmatpush1.msra.mxu0 %v3307
        %3344 = vmatprep.subr.mxu0 0.0
        %3345 = vmatpush1.msra.mxu0 %v3308
        %3346 = vmatprep.subr.mxu0 0.0
        %3347 = vmatpush1.msra.mxu0 %v3309
        %3348 = vmatprep.subr.mxu0 0.0
        %3349 = vmatpush1.msra.mxu0 %v3310
        %3350 = vmatprep.subr.mxu0 0.0
        %3351 = vmatpush1.msra.mxu0 %v3311
        %3352 = vmatprep.subr.mxu0 0.0
        %3353 = vmatpush1.msra.mxu0 %v3312
        %3354 = vmatprep.subr.mxu0 0.0
        %3355 = vmatpush1.msra.mxu0 %v3313
        %3356 = vmatprep.subr.mxu0 0.0
        %3357 = vmatpush1.msra.mxu0 %v3314
        %3358 = vmatprep.subr.mxu0 0.0
        %3359 = vmatpush1.msra.mxu0 0.0
        %3360 = vmatprep.subr.mxu0 0.0
        %3361 = vmatpush1.msra.mxu0 0.0
        %3362 = vmatprep.subr.mxu0 0.0
        %3363 = vmatpush1.msra.mxu0 0.0
        %3364 = vmatprep.subr.mxu0 0.0
        %3365 = vmatpush1.msra.mxu0 0.0
        %3366 = vmatprep.subr.mxu0 0.0
        %3367 = vmatpush1.msra.mxu0 0.0
        %3368 = vmatprep.subr.mxu0 0.0
        %3369 = vmatpush1.msra.mxu0 0.0
        %3370 = vmatprep.subr.mxu0 0.0
        %3371 = vmatpush1.msra.mxu0 0.0
        %3372 = vmatprep.subr.mxu0 0.0
        %3373 = vmatpush1.msra.mxu0 0.0
        %3374 = vmatprep.subr.mxu0 0.0
        %3375 = vmatpush1.msra.mxu0 0.0
        %3376 = vmatprep.subr.mxu0 0.0
        %3377 = vmatpush1.msra.mxu0 0.0
        %3378 = vmatprep.subr.mxu0 0.0
        %3379 = vmatpush1.msra.mxu0 0.0
        %3380 = vmatprep.subr.mxu0 0.0
        %3381 = vmatpush1.msra.mxu0 0.0
        %3382 = vmatprep.subr.mxu0 0.0
        %3383 = vmatpush1.msra.mxu0 0.0
        %3384 = vmatprep.subr.mxu0 0.0
        %3385 = vmatpush1.msra.mxu0 0.0
        %3386 = vmatprep.subr.mxu0 0.0
        %3387 = vmatpush1.msra.mxu0 0.0
        %3388 = vmatprep.subr.mxu0 0.0
        %3389 = vmatpush1.msra.mxu0 0.0
        %3390 = vmatprep.subr.mxu0 0.0
        %3391 = vmatpush1.msra.mxu0 0.0
        %3392 = vmatprep.subr.mxu0 0.0
        %3393 = vmatpush1.msra.mxu0 0.0
        %3394 = vmatprep.subr.mxu0 0.0
        %3395 = vmatpush1.msra.mxu0 0.0
        %3396 = vmatprep.subr.mxu0 0.0
        %3397 = vmatpush1.msra.mxu0 0.0
        %3398 = vmatprep.mubr.f32.mxu0 0.0
        %3399 = vmatmul.mubr.f32.gmra.mrb[0].mxu0 %v3317
        %v3400 = vpop.f32.mrb[0].mxu0
        %v3401 = vadd.f32 0.0, %v3400
        %v3402 = vpop.f32.mrb[0].mxu0
        %3403 = vmatprep.mubr.f32.mxu0 0.0
        %3404 = vmatmul.mubr.f32.gmra.mrb[0].mxu0 %v3320
        %v3405 = vpop.f32.mrb[0].mxu0
        %v3406 = vadd.f32 0.0, %v3405
        %v3407 = vpop.f32.mrb[0].mxu0
        %3408 = vmatprep.mubr.f32.mxu0 0.0
        %3409 = vmatmul.mubr.f32.gmra.mrb[0].mxu0 %v3323
        %v3410 = vpop.f32.mrb[0].mxu0
        %v3411 = vadd.f32 0.0, %v3410
        %v3412 = vpop.f32.mrb[0].mxu0
        %3413 = vmatprep.mubr.f32.mxu0 0.0
        %3414 = vmatmul.mubr.f32.gmra.mrb[0].mxu0 %v3326
        %v3415 = vpop.f32.mrb[0].mxu0
        %v3416 = vadd.f32 0.0, %v3415
        %v3417 = vpop.f32.mrb[0].mxu0
        %3418 = vmatprep.mubr.f32.mxu0 0.0
        %3419 = vmatmul.mubr.f32.gmra.mrb[0].mxu0 %v3329
        %v3420 = vpop.f32.mrb[0].mxu0
        %v3421 = vadd.f32 0.0, %v3420
        %v3422 = vpop.f32.mrb[0].mxu0
        %3423 = vmatprep.mubr.f32.mxu0 0.0
        %3424 = vmatmul.mubr.f32.gmra.mrb[0].mxu0 %v3332
        %v3425 = vpop.f32.mrb[0].mxu0
        %v3426 = vadd.f32 0.0, %v3425
        %v3427 = vpop.f32.mrb[0].mxu0
        %3428 = vdwg.mxu0
        %v3429 = vrot.slane %v3401, 7
        %v3430 = vrot.slane %v3406, 7
        %v3431 = vrot.slane %v3411, 7
        %v3432 = vrot.slane %v3416, 7
        %v3433 = vrot.slane %v3421, 7
        %v3434 = vrot.slane %v3426, 7
        %v3435 = vsel %vm913, %v3433, %v3434
        %v3436 = vsel %vm913, %v3432, %v3433
        %v3437 = vsel %vm913, %v3431, %v3432
        %v3438 = vsel %vm913, %v3430, %v3431
        %v3439 = vsel %vm913, %v3429, %v3430
        %v3440 = vsel %vm913, %v3434, %v3429
        %v3441 = vld [vmem:[%s14] sm:$0xff]
        %v3442 = vld [vmem:[%s14 + $0x8] sm:$0xff]
        %v3443 = vld [vmem:[%s14 + $0x10] sm:$0xff]
        %v3444 = vld [vmem:[%s14 + $0x18] sm:$0xff]
        %v3445 = vld [vmem:[%s14 + $0x20] sm:$0xff]
        %v3446 = vld [vmem:[%s14 + $0x28] sm:$0xff]
        %v3447 = vmul.f32 %v3440, %v3441
        %v3448 = vmul.f32 %v3439, %v3442
        %v3449 = vmul.f32 %v3438, %v3443
        %v3450 = vmul.f32 %v3437, %v3444
        %v3451 = vmul.f32 %v3436, %v3445
        %v3452 = vmul.f32 %v3435, %v3446
        %v3453 = vrot.slane %v3401, 1
        %v3454 = vrot.slane %v3406, 1
        %v3455 = vrot.slane %v3411, 1
        %v3456 = vrot.slane %v3416, 1
        %v3457 = vrot.slane %v3421, 1
        %v3458 = vrot.slane %v3426, 1
        %v3459 = vsel %vm1010, %v3457, %v3458
        %v3460 = vsel %vm1010, %v3456, %v3457
        %v3461 = vsel %vm1010, %v3455, %v3456
        %v3462 = vsel %vm1010, %v3454, %v3455
        %v3463 = vsel %vm1010, %v3453, %v3454
        %v3464 = vsel %vm1010, %v3458, %v3453
        %s3465 = scalar_lea.vmem %s14, 48
        %v3466 = vld [vmem:[%s3465] sm:$0xff]
        %v3467 = vld [vmem:[%s3465 + $0x8] sm:$0xff]
        %v3468 = vld [vmem:[%s3465 + $0x10] sm:$0xff]
        %v3469 = vld [vmem:[%s3465 + $0x18] sm:$0xff]
        %v3470 = vld [vmem:[%s3465 + $0x20] sm:$0xff]
        %v3471 = vld [vmem:[%s3465 + $0x28] sm:$0xff]
        %v3472 = vmul.f32 %v3463, %v3466
        %v3473 = vmul.f32 %v3462, %v3467
        %v3474 = vmul.f32 %v3461, %v3468
        %v3475 = vmul.f32 %v3460, %v3469
        %v3476 = vmul.f32 %v3459, %v3470
        %v3477 = vmul.f32 %v3464, %v3471
        %v3478 = vld [vmem:[%s12] sm:$0xff]
        %v3479 = vld [vmem:[%s12 + $0x8] sm:$0xff]
        %v3480 = vld [vmem:[%s12 + $0x10] sm:$0xff]
        %v3481 = vld [vmem:[%s12 + $0x18] sm:$0xff]
        %v3482 = vld [vmem:[%s12 + $0x20] sm:$0xff]
        %v3483 = vld [vmem:[%s12 + $0x28] sm:$0xff]
        %v3484 = vld [vmem:[%s12 + $0x30] sm:$0xff]
        %v3485 = vld [vmem:[%s12 + $0x38] sm:$0xff]
        %s3486 = scalar_lea.vmem %s12, 64
        %v3487 = vld [vmem:[%s3486] sm:$0xff]
        %v3488 = vld [vmem:[%s3486 + $0x8] sm:$0xff]
        %v3489 = vld [vmem:[%s3486 + $0x10] sm:$0xff]
        %v3490 = vld [vmem:[%s3486 + $0x18] sm:$0xff]
        %v3491 = vld [vmem:[%s3486 + $0x20] sm:$0xff]
        %v3492 = vld [vmem:[%s3486 + $0x28] sm:$0xff]
        %v3493 = vld [vmem:[%s3486 + $0x30] sm:$0xff]
        %v3494 = vld [vmem:[%s3486 + $0x38] sm:$0xff]
        %v3496 = vsel %vm2285, %v3401, 0
        %v3499 = vsel %vm2285, %v3406, 0
        %v3502 = vsel %vm2285, %v3411, 0
        %v3505 = vsel %vm2285, %v3416, 0
        %v3508 = vsel %vm2285, %v3421, 0
        %v3511 = vsel %vm2285, %v3426, 0
        %3513 = vmatprep.subr.mxu0 0.0
        %3514 = vmatpush1.msra.mxu0 %v3487
        %3515 = vmatprep.subr.mxu0 0.0
        %3516 = vmatpush1.msra.mxu0 %v3488
        %3517 = vmatprep.subr.mxu0 0.0
        %3518 = vmatpush1.msra.mxu0 %v3489
        %3519 = vmatprep.subr.mxu0 0.0
        %3520 = vmatpush1.msra.mxu0 %v3490
        %3521 = vmatprep.subr.mxu0 0.0
        %3522 = vmatpush1.msra.mxu0 %v3491
        %3523 = vmatprep.subr.mxu0 0.0
        %3524 = vmatpush1.msra.mxu0 %v3492
        %3525 = vmatprep.subr.mxu0 0.0
        %3526 = vmatpush1.msra.mxu0 %v3493
        %3527 = vmatprep.subr.mxu0 0.0
        %3528 = vmatpush1.msra.mxu0 %v3494
        %3529 = vmatprep.subr.mxu0 0.0
        %3530 = vmatpush1.msra.mxu0 0.0
        %3531 = vmatprep.subr.mxu0 0.0
        %3532 = vmatpush1.msra.mxu0 0.0
        %3533 = vmatprep.subr.mxu0 0.0
        %3534 = vmatpush1.msra.mxu0 0.0
        %3535 = vmatprep.subr.mxu0 0.0
        %3536 = vmatpush1.msra.mxu0 0.0
        %3537 = vmatprep.subr.mxu0 0.0
        %3538 = vmatpush1.msra.mxu0 0.0
        %3539 = vmatprep.subr.mxu0 0.0
        %3540 = vmatpush1.msra.mxu0 0.0
        %3541 = vmatprep.subr.mxu0 0.0
        %3542 = vmatpush1.msra.mxu0 0.0
        %3543 = vmatprep.subr.mxu0 0.0
        %3544 = vmatpush1.msra.mxu0 0.0
        %3545 = vmatprep.subr.mxu0 0.0
        %3546 = vmatpush1.msra.mxu0 0.0
        %3547 = vmatprep.subr.mxu0 0.0
        %3548 = vmatpush1.msra.mxu0 0.0
        %3549 = vmatprep.subr.mxu0 0.0
        %3550 = vmatpush1.msra.mxu0 0.0
        %3551 = vmatprep.subr.mxu0 0.0
        %3552 = vmatpush1.msra.mxu0 0.0
        %3553 = vmatprep.subr.mxu0 0.0
        %3554 = vmatpush1.msra.mxu0 0.0
        %3555 = vmatprep.subr.mxu0 0.0
        %3556 = vmatpush1.msra.mxu0 0.0
        %3557 = vmatprep.subr.mxu0 0.0
        %3558 = vmatpush1.msra.mxu0 0.0
        %3559 = vmatprep.subr.mxu0 0.0
        %3560 = vmatpush1.msra.mxu0 0.0
        %3561 = vmatprep.subr.mxu0 0.0
        %3562 = vmatpush1.msra.mxu0 0.0
        %3563 = vmatprep.subr.mxu0 0.0
        %3564 = vmatpush1.msra.mxu0 0.0
        %3565 = vmatprep.subr.mxu0 0.0
        %3566 = vmatpush1.msra.mxu0 0.0
        %3567 = vmatprep.subr.mxu0 0.0
        %3568 = vmatpush1.msra.mxu0 0.0
        %3569 = vmatprep.subr.mxu0 0.0
        %3570 = vmatpush1.msra.mxu0 0.0
        %3571 = vmatprep.subr.mxu0 0.0
        %3572 = vmatpush1.msra.mxu0 0.0
        %3573 = vmatprep.subr.mxu0 0.0
        %3574 = vmatpush1.msra.mxu0 0.0
        %3575 = vmatprep.subr.mxu0 0.0
        %3576 = vmatpush1.msra.mxu0 0.0
        %3577 = vmatprep.mubr.f32.mxu0 0.0
        %3578 = vmatmul.mubr.f32.gmra.mrb[0].mxu0 %v3496
        %v3579 = vpop.f32.mrb[0].mxu0
        %v3580 = vadd.f32 0.0, %v3579
        %v3581 = vpop.f32.mrb[0].mxu0
        %3582 = vmatprep.mubr.f32.mxu0 0.0
        %3583 = vmatmul.mubr.f32.gmra.mrb[0].mxu0 %v3499
        %v3584 = vpop.f32.mrb[0].mxu0
        %v3585 = vadd.f32 0.0, %v3584
        %v3586 = vpop.f32.mrb[0].mxu0
        %3587 = vmatprep.mubr.f32.mxu0 0.0
        %3588 = vmatmul.mubr.f32.gmra.mrb[0].mxu0 %v3502
        %v3589 = vpop.f32.mrb[0].mxu0
        %v3590 = vadd.f32 0.0, %v3589
        %v3591 = vpop.f32.mrb[0].mxu0
        %3592 = vmatprep.mubr.f32.mxu0 0.0
        %3593 = vmatmul.mubr.f32.gmra.mrb[0].mxu0 %v3505
        %v3594 = vpop.f32.mrb[0].mxu0
        %v3595 = vadd.f32 0.0, %v3594
        %v3596 = vpop.f32.mrb[0].mxu0
        %3597 = vmatprep.mubr.f32.mxu0 0.0
        %3598 = vmatmul.mubr.f32.gmra.mrb[0].mxu0 %v3508
        %v3599 = vpop.f32.mrb[0].mxu0
        %v3600 = vadd.f32 0.0, %v3599
        %v3601 = vpop.f32.mrb[0].mxu0
        %3602 = vmatprep.mubr.f32.mxu0 0.0
        %3603 = vmatmul.mubr.f32.gmra.mrb[0].mxu0 %v3511
        %v3604 = vpop.f32.mrb[0].mxu0
        %v3605 = vadd.f32 0.0, %v3604
        %v3606 = vpop.f32.mrb[0].mxu0
        %3607 = vdwg.mxu0
        %v3609 = vsel %vm2285, %v3447, 0
        %v3612 = vsel %vm2285, %v3448, 0
        %v3615 = vsel %vm2285, %v3449, 0
        %v3618 = vsel %vm2285, %v3450, 0
        %v3621 = vsel %vm2285, %v3451, 0
        %v3624 = vsel %vm2285, %v3452, 0
        %3626 = vmatprep.subr.mxu0 0.0
        %3627 = vmatpush1.msra.mxu0 %v3478
        %3628 = vmatprep.subr.mxu0 0.0
        %3629 = vmatpush1.msra.mxu0 %v3479
        %3630 = vmatprep.subr.mxu0 0.0
        %3631 = vmatpush1.msra.mxu0 %v3480
        %3632 = vmatprep.subr.mxu0 0.0
        %3633 = vmatpush1.msra.mxu0 %v3481
        %3634 = vmatprep.subr.mxu0 0.0
        %3635 = vmatpush1.msra.mxu0 %v3482
        %3636 = vmatprep.subr.mxu0 0.0
        %3637 = vmatpush1.msra.mxu0 %v3483
        %3638 = vmatprep.subr.mxu0 0.0
        %3639 = vmatpush1.msra.mxu0 %v3484
        %3640 = vmatprep.subr.mxu0 0.0
        %3641 = vmatpush1.msra.mxu0 %v3485
        %3642 = vmatprep.subr.mxu0 0.0
        %3643 = vmatpush1.msra.mxu0 0.0
        %3644 = vmatprep.subr.mxu0 0.0
        %3645 = vmatpush1.msra.mxu0 0.0
        %3646 = vmatprep.subr.mxu0 0.0
        %3647 = vmatpush1.msra.mxu0 0.0
        %3648 = vmatprep.subr.mxu0 0.0
        %3649 = vmatpush1.msra.mxu0 0.0
        %3650 = vmatprep.subr.mxu0 0.0
        %3651 = vmatpush1.msra.mxu0 0.0
        %3652 = vmatprep.subr.mxu0 0.0
        %3653 = vmatpush1.msra.mxu0 0.0
        %3654 = vmatprep.subr.mxu0 0.0
        %3655 = vmatpush1.msra.mxu0 0.0
        %3656 = vmatprep.subr.mxu0 0.0
        %3657 = vmatpush1.msra.mxu0 0.0
        %3658 = vmatprep.subr.mxu0 0.0
        %3659 = vmatpush1.msra.mxu0 0.0
        %3660 = vmatprep.subr.mxu0 0.0
        %3661 = vmatpush1.msra.mxu0 0.0
        %3662 = vmatprep.subr.mxu0 0.0
        %3663 = vmatpush1.msra.mxu0 0.0
        %3664 = vmatprep.subr.mxu0 0.0
        %3665 = vmatpush1.msra.mxu0 0.0
        %3666 = vmatprep.subr.mxu0 0.0
        %3667 = vmatpush1.msra.mxu0 0.0
        %3668 = vmatprep.subr.mxu0 0.0
        %3669 = vmatpush1.msra.mxu0 0.0
        %3670 = vmatprep.subr.mxu0 0.0
        %3671 = vmatpush1.msra.mxu0 0.0
        %3672 = vmatprep.subr.mxu0 0.0
        %3673 = vmatpush1.msra.mxu0 0.0
        %3674 = vmatprep.subr.mxu0 0.0
        %3675 = vmatpush1.msra.mxu0 0.0
        %3676 = vmatprep.subr.mxu0 0.0
        %3677 = vmatpush1.msra.mxu0 0.0
        %3678 = vmatprep.subr.mxu0 0.0
        %3679 = vmatpush1.msra.mxu0 0.0
        %3680 = vmatprep.subr.mxu0 0.0
        %3681 = vmatpush1.msra.mxu0 0.0
        %3682 = vmatprep.subr.mxu0 0.0
        %3683 = vmatpush1.msra.mxu0 0.0
        %3684 = vmatprep.subr.mxu0 0.0
        %3685 = vmatpush1.msra.mxu0 0.0
        %3686 = vmatprep.subr.mxu0 0.0
        %3687 = vmatpush1.msra.mxu0 0.0
        %3688 = vmatprep.subr.mxu0 0.0
        %3689 = vmatpush1.msra.mxu0 0.0
        %3690 = vmatprep.mubr.f32.mxu0 0.0
        %3691 = vmatmul.mubr.f32.gmra.mrb[0].mxu0 %v3609
        %v3692 = vpop.f32.mrb[0].mxu0
        %v3693 = vadd.f32 %v3580, %v3692
        %v3694 = vpop.f32.mrb[0].mxu0
        %3695 = vmatprep.mubr.f32.mxu0 0.0
        %3696 = vmatmul.mubr.f32.gmra.mrb[0].mxu0 %v3612
        %v3697 = vpop.f32.mrb[0].mxu0
        %v3698 = vadd.f32 %v3585, %v3697
        %v3699 = vpop.f32.mrb[0].mxu0
        %3700 = vmatprep.mubr.f32.mxu0 0.0
        %3701 = vmatmul.mubr.f32.gmra.mrb[0].mxu0 %v3615
        %v3702 = vpop.f32.mrb[0].mxu0
        %v3703 = vadd.f32 %v3590, %v3702
        %v3704 = vpop.f32.mrb[0].mxu0
        %3705 = vmatprep.mubr.f32.mxu0 0.0
        %3706 = vmatmul.mubr.f32.gmra.mrb[0].mxu0 %v3618
        %v3707 = vpop.f32.mrb[0].mxu0
        %v3708 = vadd.f32 %v3595, %v3707
        %v3709 = vpop.f32.mrb[0].mxu0
        %3710 = vmatprep.mubr.f32.mxu0 0.0
        %3711 = vmatmul.mubr.f32.gmra.mrb[0].mxu0 %v3621
        %v3712 = vpop.f32.mrb[0].mxu0
        %v3713 = vadd.f32 %v3600, %v3712
        %v3714 = vpop.f32.mrb[0].mxu0
        %3715 = vmatprep.mubr.f32.mxu0 0.0
        %3716 = vmatmul.mubr.f32.gmra.mrb[0].mxu0 %v3624
        %v3717 = vpop.f32.mrb[0].mxu0
        %v3718 = vadd.f32 %v3605, %v3717
        %v3719 = vpop.f32.mrb[0].mxu0
        %3720 = vdwg.mxu0
        %s3721 = scalar_lea.vmem %s12, 128
        %v3722 = vld [vmem:[%s3721] sm:$0xff]
        %v3723 = vld [vmem:[%s3721 + $0x8] sm:$0xff]
        %v3724 = vld [vmem:[%s3721 + $0x10] sm:$0xff]
        %v3725 = vld [vmem:[%s3721 + $0x18] sm:$0xff]
        %v3726 = vld [vmem:[%s3721 + $0x20] sm:$0xff]
        %v3727 = vld [vmem:[%s3721 + $0x28] sm:$0xff]
        %v3728 = vld [vmem:[%s3721 + $0x30] sm:$0xff]
        %v3729 = vld [vmem:[%s3721 + $0x38] sm:$0xff]
        %v3731 = vsel %vm2285, %v3472, 0
        %v3734 = vsel %vm2285, %v3473, 0
        %v3737 = vsel %vm2285, %v3474, 0
        %v3740 = vsel %vm2285, %v3475, 0
        %v3743 = vsel %vm2285, %v3476, 0
        %v3746 = vsel %vm2285, %v3477, 0
        %3748 = vmatprep.subr.mxu0 0.0
        %3749 = vmatpush1.msra.mxu0 %v3722
        %3750 = vmatprep.subr.mxu0 0.0
        %3751 = vmatpush1.msra.mxu0 %v3723
        %3752 = vmatprep.subr.mxu0 0.0
        %3753 = vmatpush1.msra.mxu0 %v3724
        %3754 = vmatprep.subr.mxu0 0.0
        %3755 = vmatpush1.msra.mxu0 %v3725
        %3756 = vmatprep.subr.mxu0 0.0
        %3757 = vmatpush1.msra.mxu0 %v3726
        %3758 = vmatprep.subr.mxu0 0.0
        %3759 = vmatpush1.msra.mxu0 %v3727
        %3760 = vmatprep.subr.mxu0 0.0
        %3761 = vmatpush1.msra.mxu0 %v3728
        %3762 = vmatprep.subr.mxu0 0.0
        %3763 = vmatpush1.msra.mxu0 %v3729
        %3764 = vmatprep.subr.mxu0 0.0
        %3765 = vmatpush1.msra.mxu0 0.0
        %3766 = vmatprep.subr.mxu0 0.0
        %3767 = vmatpush1.msra.mxu0 0.0
        %3768 = vmatprep.subr.mxu0 0.0
        %3769 = vmatpush1.msra.mxu0 0.0
        %3770 = vmatprep.subr.mxu0 0.0
        %3771 = vmatpush1.msra.mxu0 0.0
        %3772 = vmatprep.subr.mxu0 0.0
        %3773 = vmatpush1.msra.mxu0 0.0
        %3774 = vmatprep.subr.mxu0 0.0
        %3775 = vmatpush1.msra.mxu0 0.0
        %3776 = vmatprep.subr.mxu0 0.0
        %3777 = vmatpush1.msra.mxu0 0.0
        %3778 = vmatprep.subr.mxu0 0.0
        %3779 = vmatpush1.msra.mxu0 0.0
        %3780 = vmatprep.subr.mxu0 0.0
        %3781 = vmatpush1.msra.mxu0 0.0
        %3782 = vmatprep.subr.mxu0 0.0
        %3783 = vmatpush1.msra.mxu0 0.0
        %3784 = vmatprep.subr.mxu0 0.0
        %3785 = vmatpush1.msra.mxu0 0.0
        %3786 = vmatprep.subr.mxu0 0.0
        %3787 = vmatpush1.msra.mxu0 0.0
        %3788 = vmatprep.subr.mxu0 0.0
        %3789 = vmatpush1.msra.mxu0 0.0
        %3790 = vmatprep.subr.mxu0 0.0
        %3791 = vmatpush1.msra.mxu0 0.0
        %3792 = vmatprep.subr.mxu0 0.0
        %3793 = vmatpush1.msra.mxu0 0.0
        %3794 = vmatprep.subr.mxu0 0.0
        %3795 = vmatpush1.msra.mxu0 0.0
        %3796 = vmatprep.subr.mxu0 0.0
        %3797 = vmatpush1.msra.mxu0 0.0
        %3798 = vmatprep.subr.mxu0 0.0
        %3799 = vmatpush1.msra.mxu0 0.0
        %3800 = vmatprep.subr.mxu0 0.0
        %3801 = vmatpush1.msra.mxu0 0.0
        %3802 = vmatprep.subr.mxu0 0.0
        %3803 = vmatpush1.msra.mxu0 0.0
        %3804 = vmatprep.subr.mxu0 0.0
        %3805 = vmatpush1.msra.mxu0 0.0
        %3806 = vmatprep.subr.mxu0 0.0
        %3807 = vmatpush1.msra.mxu0 0.0
        %3808 = vmatprep.subr.mxu0 0.0
        %3809 = vmatpush1.msra.mxu0 0.0
        %3810 = vmatprep.subr.mxu0 0.0
        %3811 = vmatpush1.msra.mxu0 0.0
        %3812 = vmatprep.mubr.f32.mxu0 0.0
        %3813 = vmatmul.mubr.f32.gmra.mrb[0].mxu0 %v3731
        %v3814 = vpop.f32.mrb[0].mxu0
        %v3815 = vadd.f32 0.0, %v3814
        %v3816 = vpop.f32.mrb[0].mxu0
        %3817 = vmatprep.mubr.f32.mxu0 0.0
        %3818 = vmatmul.mubr.f32.gmra.mrb[0].mxu0 %v3734
        %v3819 = vpop.f32.mrb[0].mxu0
        %v3820 = vadd.f32 0.0, %v3819
        %v3821 = vpop.f32.mrb[0].mxu0
        %3822 = vmatprep.mubr.f32.mxu0 0.0
        %3823 = vmatmul.mubr.f32.gmra.mrb[0].mxu0 %v3737
        %v3824 = vpop.f32.mrb[0].mxu0
        %v3825 = vadd.f32 0.0, %v3824
        %v3826 = vpop.f32.mrb[0].mxu0
        %3827 = vmatprep.mubr.f32.mxu0 0.0
        %3828 = vmatmul.mubr.f32.gmra.mrb[0].mxu0 %v3740
        %v3829 = vpop.f32.mrb[0].mxu0
        %v3830 = vadd.f32 0.0, %v3829
        %v3831 = vpop.f32.mrb[0].mxu0
        %3832 = vmatprep.mubr.f32.mxu0 0.0
        %3833 = vmatmul.mubr.f32.gmra.mrb[0].mxu0 %v3743
        %v3834 = vpop.f32.mrb[0].mxu0
        %v3835 = vadd.f32 0.0, %v3834
        %v3836 = vpop.f32.mrb[0].mxu0
        %3837 = vmatprep.mubr.f32.mxu0 0.0
        %3838 = vmatmul.mubr.f32.gmra.mrb[0].mxu0 %v3746
        %v3839 = vpop.f32.mrb[0].mxu0
        %v3840 = vadd.f32 0.0, %v3839
        %v3841 = vpop.f32.mrb[0].mxu0
        %3842 = vdwg.mxu0
        %v3843 = vadd.f32 %v3693, %v3815
        %v3844 = vadd.f32 %v3698, %v3820
        %v3845 = vadd.f32 %v3703, %v3825
        %v3846 = vadd.f32 %v3708, %v3830
        %v3847 = vadd.f32 %v3713, %v3835
        %v3848 = vadd.f32 %v3718, %v3840
        %v3849 = vld [vmem:[%s13] sm:$0x1]
        %v3851 = vlaneseq
        %v3852 = vshrl.u32 %v3851, 7
        %v3853 = vsub.s32 0, %v3852
        %v3854 = vrot.slane %v3849, %v3853
        %v3856 = vadd.f32 %v3843, %v3854
        %v3857 = vadd.f32 %v3844, %v3854
        %v3858 = vadd.f32 %v3845, %v3854
        %v3859 = vadd.f32 %v3846, %v3854
        %v3860 = vadd.f32 %v3847, %v3854
        %v3861 = vadd.f32 %v3848, %v3854
        %v3862 = vmax.f32 %v3856, 0.0
        %v3863 = vmax.f32 %v3857, 0.0
        %v3864 = vmax.f32 %v3858, 0.0
        %v3865 = vmax.f32 %v3859, 0.0
        %v3866 = vmax.f32 %v3860, 0.0
        %v3867 = vmax.f32 %v3861, 0.0
        %3868 = vrot.lane.b32.xlu0 %v3862, 64
        %v3869 = vpop.permute.xlu0 %3868
        %3870 = vrot.lane.b32.xlu0 %v3863, 64
        %v3871 = vpop.permute.xlu0 %3870
        %3872 = vrot.lane.b32.xlu0 %v3864, 64
        %v3873 = vpop.permute.xlu0 %3872
        %3874 = vrot.lane.b32.xlu0 %v3865, 64
        %v3875 = vpop.permute.xlu0 %3874
        %3876 = vrot.lane.b32.xlu0 %v3866, 64
        %v3877 = vpop.permute.xlu0 %3876
        %3878 = vrot.lane.b32.xlu0 %v3867, 64
        %v3879 = vpop.permute.xlu0 %3878
        %v3880 = vmax.f32 %v3862, %v3869
        %v3881 = vmax.f32 %v3863, %v3871
        %v3882 = vmax.f32 %v3864, %v3873
        %v3883 = vmax.f32 %v3865, %v3875
        %v3884 = vmax.f32 %v3866, %v3877
        %v3885 = vmax.f32 %v3867, %v3879
        %v3886 = vld [vmem:[%s15] sm:$0xff]
        %v3887 = vld [vmem:[%s15 + $0x8] sm:$0xff]
        %v3888 = vld [vmem:[%s15 + $0x10] sm:$0xff]
        %v3889 = vld [vmem:[%s15 + $0x18] sm:$0xff]
        %v3890 = vld [vmem:[%s15 + $0x20] sm:$0xff]
        %v3891 = vld [vmem:[%s15 + $0x28] sm:$0xff]
        %v3892 = vld [vmem:[%s15 + $0x30] sm:$0xff]
        %v3893 = vld [vmem:[%s15 + $0x38] sm:$0xff]
        %v3894 = vld [vmem:[%s15 + $0x40] sm:$0xff]
        %v3895 = vld [vmem:[%s15 + $0x48] sm:$0xff]
        %v3896 = vld [vmem:[%s15 + $0x50] sm:$0xff]
        %v3897 = vld [vmem:[%s15 + $0x58] sm:$0xff]
        %v3898 = vld [vmem:[%s15 + $0x60] sm:$0xff]
        %v3899 = vld [vmem:[%s15 + $0x68] sm:$0xff]
        %v3900 = vld [vmem:[%s15 + $0x70] sm:$0xff]
        %v3901 = vld [vmem:[%s15 + $0x78] sm:$0xff]
        %3902 = vmatprep.subr.mxu0 0.0
        %3903 = vmatpush1.msra.mxu0 %v3886
        %3904 = vmatprep.subr.mxu0 0.0
        %3905 = vmatpush1.msra.mxu0 %v3887
        %3906 = vmatprep.subr.mxu0 0.0
        %3907 = vmatpush1.msra.mxu0 %v3888
        %3908 = vmatprep.subr.mxu0 0.0
        %3909 = vmatpush1.msra.mxu0 %v3889
        %3910 = vmatprep.subr.mxu0 0.0
        %3911 = vmatpush1.msra.mxu0 %v3890
        %3912 = vmatprep.subr.mxu0 0.0
        %3913 = vmatpush1.msra.mxu0 %v3891
        %3914 = vmatprep.subr.mxu0 0.0
        %3915 = vmatpush1.msra.mxu0 %v3892
        %3916 = vmatprep.subr.mxu0 0.0
        %3917 = vmatpush1.msra.mxu0 %v3893
        %3918 = vmatprep.subr.mxu0 0.0
        %3919 = vmatpush1.msra.mxu0 %v3894
        %3920 = vmatprep.subr.mxu0 0.0
        %3921 = vmatpush1.msra.mxu0 %v3895
        %3922 = vmatprep.subr.mxu0 0.0
        %3923 = vmatpush1.msra.mxu0 %v3896
        %3924 = vmatprep.subr.mxu0 0.0
        %3925 = vmatpush1.msra.mxu0 %v3897
        %3926 = vmatprep.subr.mxu0 0.0
        %3927 = vmatpush1.msra.mxu0 %v3898
        %3928 = vmatprep.subr.mxu0 0.0
        %3929 = vmatpush1.msra.mxu0 %v3899
        %3930 = vmatprep.subr.mxu0 0.0
        %3931 = vmatpush1.msra.mxu0 %v3900
        %3932 = vmatprep.subr.mxu0 0.0
        %3933 = vmatpush1.msra.mxu0 %v3901
        %3934 = vmatprep.subr.mxu0 0.0
        %3935 = vmatpush1.msra.mxu0 0.0
        %3936 = vmatprep.subr.mxu0 0.0
        %3937 = vmatpush1.msra.mxu0 0.0
        %3938 = vmatprep.subr.mxu0 0.0
        %3939 = vmatpush1.msra.mxu0 0.0
        %3940 = vmatprep.subr.mxu0 0.0
        %3941 = vmatpush1.msra.mxu0 0.0
        %3942 = vmatprep.subr.mxu0 0.0
        %3943 = vmatpush1.msra.mxu0 0.0
        %3944 = vmatprep.subr.mxu0 0.0
        %3945 = vmatpush1.msra.mxu0 0.0
        %3946 = vmatprep.subr.mxu0 0.0
        %3947 = vmatpush1.msra.mxu0 0.0
        %3948 = vmatprep.subr.mxu0 0.0
        %3949 = vmatpush1.msra.mxu0 0.0
        %3950 = vmatprep.subr.mxu0 0.0
        %3951 = vmatpush1.msra.mxu0 0.0
        %3952 = vmatprep.subr.mxu0 0.0
        %3953 = vmatpush1.msra.mxu0 0.0
        %3954 = vmatprep.subr.mxu0 0.0
        %3955 = vmatpush1.msra.mxu0 0.0
        %3956 = vmatprep.subr.mxu0 0.0
        %3957 = vmatpush1.msra.mxu0 0.0
        %3958 = vmatprep.subr.mxu0 0.0
        %3959 = vmatpush1.msra.mxu0 0.0
        %3960 = vmatprep.subr.mxu0 0.0
        %3961 = vmatpush1.msra.mxu0 0.0
        %3962 = vmatprep.subr.mxu0 0.0
        %3963 = vmatpush1.msra.mxu0 0.0
        %3964 = vmatprep.subr.mxu0 0.0
        %3965 = vmatpush1.msra.mxu0 0.0
        %3966 = vmatprep.mubr.f32.mxu0 0.0
        %3967 = vmatmul.mubr.f32.gmra.mrb[0].mxu0 %v3880
        %v3968 = vpop.f32.mrb[0].mxu0
        %v3969 = vadd.f32 0.0, %v3968
        %v3970 = vpop.f32.mrb[0].mxu0
        %3971 = vmatprep.mubr.f32.mxu0 0.0
        %3972 = vmatmul.mubr.f32.gmra.mrb[0].mxu0 %v3881
        %v3973 = vpop.f32.mrb[0].mxu0
        %v3974 = vadd.f32 0.0, %v3973
        %v3975 = vpop.f32.mrb[0].mxu0
        %3976 = vmatprep.mubr.f32.mxu0 0.0
        %3977 = vmatmul.mubr.f32.gmra.mrb[0].mxu0 %v3882
        %v3978 = vpop.f32.mrb[0].mxu0
        %v3979 = vadd.f32 0.0, %v3978
        %v3980 = vpop.f32.mrb[0].mxu0
        %3981 = vmatprep.mubr.f32.mxu0 0.0
        %3982 = vmatmul.mubr.f32.gmra.mrb[0].mxu0 %v3883
        %v3983 = vpop.f32.mrb[0].mxu0
        %v3984 = vadd.f32 0.0, %v3983
        %v3985 = vpop.f32.mrb[0].mxu0
        %3986 = vmatprep.mubr.f32.mxu0 0.0
        %3987 = vmatmul.mubr.f32.gmra.mrb[0].mxu0 %v3884
        %v3988 = vpop.f32.mrb[0].mxu0
        %v3989 = vadd.f32 0.0, %v3988
        %v3990 = vpop.f32.mrb[0].mxu0
        %3991 = vmatprep.mubr.f32.mxu0 0.0
        %3992 = vmatmul.mubr.f32.gmra.mrb[0].mxu0 %v3885
        %v3993 = vpop.f32.mrb[0].mxu0
        %v3994 = vadd.f32 0.0, %v3993
        %v3995 = vpop.f32.mrb[0].mxu0
        %3996 = vdwg.mxu0
        %v3997 = vrot.slane %v3969, 1
        %v3998 = vrot.slane %v3974, 1
        %v3999 = vrot.slane %v3979, 1
        %v4000 = vrot.slane %v3984, 1
        %v4001 = vrot.slane %v3989, 1
        %v4002 = vrot.slane %v3994, 1
        %v4003 = vsel %vm1010, %v4001, %v4002
        %v4004 = vsel %vm1010, %v4000, %v4001
        %v4005 = vsel %vm1010, %v3999, %v4000
        %v4006 = vsel %vm1010, %v3998, %v3999
        %v4007 = vsel %vm1010, %v3997, %v3998
        %v4008 = vsel %vm1010, %v4002, %v3997
        %v4009 = vmax.f32 %v3969, %v4007
        %v4010 = vmax.f32 %v3974, %v4006
        %v4011 = vmax.f32 %v3979, %v4005
        %v4012 = vmax.f32 %v3984, %v4004
        %v4013 = vmax.f32 %v3989, %v4003
        %v4014 = vmax.f32 %v3994, %v4008
        %v4015 = vld [vmem:[%s16] sm:$0xff]
        %vm4016 = vcmask 392192
        %v4018 = vsel %vm4016, %v4015, 0
        %4020 = vmatprep.subr.mxu0 0.0
        %4021 = vmatpush1.msra.mxu0 %v4009
        %4022 = vmatprep.subr.mxu0 0.0
        %4023 = vmatpush1.msra.mxu0 %v4010
        %4024 = vmatprep.subr.mxu0 0.0
        %4025 = vmatpush1.msra.mxu0 %v4011
        %4026 = vmatprep.subr.mxu0 0.0
        %4027 = vmatpush1.msra.mxu0 %v4012
        %4028 = vmatprep.subr.mxu0 0.0
        %4029 = vmatpush1.msra.mxu0 %v4013
        %4030 = vmatprep.subr.mxu0 0.0
        %4031 = vmatpush1.msra.mxu0 %v4014
        %4032 = vmatprep.subr.mxu0 0.0
        %4033 = vmatpush1.msra.mxu0 0.0
        %4034 = vmatprep.subr.mxu0 0.0
        %4035 = vmatpush1.msra.mxu0 0.0
        %4036 = vmatprep.subr.mxu0 0.0
        %4037 = vmatpush1.msra.mxu0 0.0
        %4038 = vmatprep.subr.mxu0 0.0
        %4039 = vmatpush1.msra.mxu0 0.0
        %4040 = vmatprep.subr.mxu0 0.0
        %4041 = vmatpush1.msra.mxu0 0.0
        %4042 = vmatprep.subr.mxu0 0.0
        %4043 = vmatpush1.msra.mxu0 0.0
        %4044 = vmatprep.subr.mxu0 0.0
        %4045 = vmatpush1.msra.mxu0 0.0
        %4046 = vmatprep.subr.mxu0 0.0
        %4047 = vmatpush1.msra.mxu0 0.0
        %4048 = vmatprep.subr.mxu0 0.0
        %4049 = vmatpush1.msra.mxu0 0.0
        %4050 = vmatprep.subr.mxu0 0.0
        %4051 = vmatpush1.msra.mxu0 0.0
        %4052 = vmatprep.subr.mxu0 0.0
        %4053 = vmatpush1.msra.mxu0 0.0
        %4054 = vmatprep.subr.mxu0 0.0
        %4055 = vmatpush1.msra.mxu0 0.0
        %4056 = vmatprep.subr.mxu0 0.0
        %4057 = vmatpush1.msra.mxu0 0.0
        %4058 = vmatprep.subr.mxu0 0.0
        %4059 = vmatpush1.msra.mxu0 0.0
        %4060 = vmatprep.subr.mxu0 0.0
        %4061 = vmatpush1.msra.mxu0 0.0
        %4062 = vmatprep.subr.mxu0 0.0
        %4063 = vmatpush1.msra.mxu0 0.0
        %4064 = vmatprep.subr.mxu0 0.0
        %4065 = vmatpush1.msra.mxu0 0.0
        %4066 = vmatprep.subr.mxu0 0.0
        %4067 = vmatpush1.msra.mxu0 0.0
        %4068 = vmatprep.subr.mxu0 0.0
        %4069 = vmatpush1.msra.mxu0 0.0
        %4070 = vmatprep.subr.mxu0 0.0
        %4071 = vmatpush1.msra.mxu0 0.0
        %4072 = vmatprep.subr.mxu0 0.0
        %4073 = vmatpush1.msra.mxu0 0.0
        %4074 = vmatprep.subr.mxu0 0.0
        %4075 = vmatpush1.msra.mxu0 0.0
        %4076 = vmatprep.subr.mxu0 0.0
        %4077 = vmatpush1.msra.mxu0 0.0
        %4078 = vmatprep.subr.mxu0 0.0
        %4079 = vmatpush1.msra.mxu0 0.0
        %4080 = vmatprep.subr.mxu0 0.0
        %4081 = vmatpush1.msra.mxu0 0.0
        %4082 = vmatprep.subr.mxu0 0.0
        %4083 = vmatpush1.msra.mxu0 0.0
        %4084 = vmatprep.mubr.f32.mxu0 0.0
        %4085 = vmatmul.mubr.f32.gmra.mrb[0].mxu0 %v4018
        %v4086 = vpop.f32.mrb[0].mxu0
        %v4087 = vadd.f32 0.0, %v4086
        %v4088 = vpop.f32.mrb[0].mxu0
        %4089 = vdwg.mxu0
        %v4090 = vld [vmem:[%s17] sm:$0xff]
        %v4091 = vld [vmem:[%s17 + $0x8] sm:$0xff]
        %v4092 = vld [vmem:[%s17 + $0x10] sm:$0xff]
        %v4093 = vld [vmem:[%s17 + $0x18] sm:$0xff]
        %v4094 = vld [vmem:[%s17 + $0x20] sm:$0xff]
        %v4095 = vld [vmem:[%s17 + $0x28] sm:$0xff]
        %v4096 = vld [vmem:[%s17 + $0x30] sm:$0xff]
        %v4097 = vld [vmem:[%s17 + $0x38] sm:$0xff]
        %s4098 = scalar_lea.vmem %s16, 8
        %v4099 = vld [vmem:[%s4098] sm:$0xff]
        %v4101 = vsel %vm4016, %v4099, 0
        %4103 = vmatprep.subr.mxu0 0.0
        %4104 = vmatpush1.msra.mxu0 %v4009
        %4105 = vmatprep.subr.mxu0 0.0
        %4106 = vmatpush1.msra.mxu0 %v4010
        %4107 = vmatprep.subr.mxu0 0.0
        %4108 = vmatpush1.msra.mxu0 %v4011
        %4109 = vmatprep.subr.mxu0 0.0
        %4110 = vmatpush1.msra.mxu0 %v4012
        %4111 = vmatprep.subr.mxu0 0.0
        %4112 = vmatpush1.msra.mxu0 %v4013
        %4113 = vmatprep.subr.mxu0 0.0
        %4114 = vmatpush1.msra.mxu0 %v4014
        %4115 = vmatprep.subr.mxu0 0.0
        %4116 = vmatpush1.msra.mxu0 0.0
        %4117 = vmatprep.subr.mxu0 0.0
        %4118 = vmatpush1.msra.mxu0 0.0
        %4119 = vmatprep.subr.mxu0 0.0
        %4120 = vmatpush1.msra.mxu0 0.0
        %4121 = vmatprep.subr.mxu0 0.0
        %4122 = vmatpush1.msra.mxu0 0.0
        %4123 = vmatprep.subr.mxu0 0.0
        %4124 = vmatpush1.msra.mxu0 0.0
        %4125 = vmatprep.subr.mxu0 0.0
        %4126 = vmatpush1.msra.mxu0 0.0
        %4127 = vmatprep.subr.mxu0 0.0
        %4128 = vmatpush1.msra.mxu0 0.0
        %4129 = vmatprep.subr.mxu0 0.0
        %4130 = vmatpush1.msra.mxu0 0.0
        %4131 = vmatprep.subr.mxu0 0.0
        %4132 = vmatpush1.msra.mxu0 0.0
        %4133 = vmatprep.subr.mxu0 0.0
        %4134 = vmatpush1.msra.mxu0 0.0
        %4135 = vmatprep.subr.mxu0 0.0
        %4136 = vmatpush1.msra.mxu0 0.0
        %4137 = vmatprep.subr.mxu0 0.0
        %4138 = vmatpush1.msra.mxu0 0.0
        %4139 = vmatprep.subr.mxu0 0.0
        %4140 = vmatpush1.msra.mxu0 0.0
        %4141 = vmatprep.subr.mxu0 0.0
        %4142 = vmatpush1.msra.mxu0 0.0
        %4143 = vmatprep.subr.mxu0 0.0
        %4144 = vmatpush1.msra.mxu0 0.0
        %4145 = vmatprep.subr.mxu0 0.0
        %4146 = vmatpush1.msra.mxu0 0.0
        %4147 = vmatprep.subr.mxu0 0.0
        %4148 = vmatpush1.msra.mxu0 0.0
        %4149 = vmatprep.subr.mxu0 0.0
        %4150 = vmatpush1.msra.mxu0 0.0
        %4151 = vmatprep.subr.mxu0 0.0
        %4152 = vmatpush1.msra.mxu0 0.0
        %4153 = vmatprep.subr.mxu0 0.0
        %4154 = vmatpush1.msra.mxu0 0.0
        %4155 = vmatprep.subr.mxu0 0.0
        %4156 = vmatpush1.msra.mxu0 0.0
        %4157 = vmatprep.subr.mxu0 0.0
        %4158 = vmatpush1.msra.mxu0 0.0
        %4159 = vmatprep.subr.mxu0 0.0
        %4160 = vmatpush1.msra.mxu0 0.0
        %4161 = vmatprep.subr.mxu0 0.0
        %4162 = vmatpush1.msra.mxu0 0.0
        %4163 = vmatprep.subr.mxu0 0.0
        %4164 = vmatpush1.msra.mxu0 0.0
        %4165 = vmatprep.subr.mxu0 0.0
        %4166 = vmatpush1.msra.mxu0 0.0
        %4167 = vmatprep.mubr.f32.mxu0 0.0
        %4168 = vmatmul.mubr.f32.gmra.mrb[0].mxu0 %v4101
        %v4169 = vpop.f32.mrb[0].mxu0
        %v4170 = vadd.f32 0.0, %v4169
        %v4171 = vpop.f32.mrb[0].mxu0
        %4172 = vdwg.mxu0
        %s4173 = scalar_lea.vmem %s17, 64
        %v4174 = vld [vmem:[%s4173] sm:$0xff]
        %v4175 = vld [vmem:[%s4173 + $0x8] sm:$0xff]
        %v4176 = vld [vmem:[%s4173 + $0x10] sm:$0xff]
        %v4177 = vld [vmem:[%s4173 + $0x18] sm:$0xff]
        %v4178 = vld [vmem:[%s4173 + $0x20] sm:$0xff]
        %v4179 = vld [vmem:[%s4173 + $0x28] sm:$0xff]
        %v4180 = vld [vmem:[%s4173 + $0x30] sm:$0xff]
        %v4181 = vld [vmem:[%s4173 + $0x38] sm:$0xff]
        %v4183 = vsel %vm2285, %v4170, 0
        %4185 = vmatprep.subr.mxu0 0.0
        %4186 = vmatpush1.msra.mxu0 %v4174
        %4187 = vmatprep.subr.mxu0 0.0
        %4188 = vmatpush1.msra.mxu0 %v4175
        %4189 = vmatprep.subr.mxu0 0.0
        %4190 = vmatpush1.msra.mxu0 %v4176
        %4191 = vmatprep.subr.mxu0 0.0
        %4192 = vmatpush1.msra.mxu0 %v4177
        %4193 = vmatprep.subr.mxu0 0.0
        %4194 = vmatpush1.msra.mxu0 %v4178
        %4195 = vmatprep.subr.mxu0 0.0
        %4196 = vmatpush1.msra.mxu0 %v4179
        %4197 = vmatprep.subr.mxu0 0.0
        %4198 = vmatpush1.msra.mxu0 %v4180
        %4199 = vmatprep.subr.mxu0 0.0
        %4200 = vmatpush1.msra.mxu0 %v4181
        %4201 = vmatprep.subr.mxu0 0.0
        %4202 = vmatpush1.msra.mxu0 0.0
        %4203 = vmatprep.subr.mxu0 0.0
        %4204 = vmatpush1.msra.mxu0 0.0
        %4205 = vmatprep.subr.mxu0 0.0
        %4206 = vmatpush1.msra.mxu0 0.0
        %4207 = vmatprep.subr.mxu0 0.0
        %4208 = vmatpush1.msra.mxu0 0.0
        %4209 = vmatprep.subr.mxu0 0.0
        %4210 = vmatpush1.msra.mxu0 0.0
        %4211 = vmatprep.subr.mxu0 0.0
        %4212 = vmatpush1.msra.mxu0 0.0
        %4213 = vmatprep.subr.mxu0 0.0
        %4214 = vmatpush1.msra.mxu0 0.0
        %4215 = vmatprep.subr.mxu0 0.0
        %4216 = vmatpush1.msra.mxu0 0.0
        %4217 = vmatprep.subr.mxu0 0.0
        %4218 = vmatpush1.msra.mxu0 0.0
        %4219 = vmatprep.subr.mxu0 0.0
        %4220 = vmatpush1.msra.mxu0 0.0
        %4221 = vmatprep.subr.mxu0 0.0
        %4222 = vmatpush1.msra.mxu0 0.0
        %4223 = vmatprep.subr.mxu0 0.0
        %4224 = vmatpush1.msra.mxu0 0.0
        %4225 = vmatprep.subr.mxu0 0.0
        %4226 = vmatpush1.msra.mxu0 0.0
        %4227 = vmatprep.subr.mxu0 0.0
        %4228 = vmatpush1.msra.mxu0 0.0
        %4229 = vmatprep.subr.mxu0 0.0
        %4230 = vmatpush1.msra.mxu0 0.0
        %4231 = vmatprep.subr.mxu0 0.0
        %4232 = vmatpush1.msra.mxu0 0.0
        %4233 = vmatprep.subr.mxu0 0.0
        %4234 = vmatpush1.msra.mxu0 0.0
        %4235 = vmatprep.subr.mxu0 0.0
        %4236 = vmatpush1.msra.mxu0 0.0
        %4237 = vmatprep.subr.mxu0 0.0
        %4238 = vmatpush1.msra.mxu0 0.0
        %4239 = vmatprep.subr.mxu0 0.0
        %4240 = vmatpush1.msra.mxu0 0.0
        %4241 = vmatprep.subr.mxu0 0.0
        %4242 = vmatpush1.msra.mxu0 0.0
        %4243 = vmatprep.subr.mxu0 0.0
        %4244 = vmatpush1.msra.mxu0 0.0
        %4245 = vmatprep.subr.mxu0 0.0
        %4246 = vmatpush1.msra.mxu0 0.0
        %4247 = vmatprep.subr.mxu0 0.0
        %4248 = vmatpush1.msra.mxu0 0.0
        %4249 = vmatprep.mubr.f32.mxu0 0.0
        %4250 = vmatmul.mubr.f32.gmra.mrb[0].mxu0 %v4183
        %v4251 = vpop.f32.mrb[0].mxu0
        %v4252 = vadd.f32 0.0, %v4251
        %v4253 = vpop.f32.mrb[0].mxu0
        %4254 = vdwg.mxu0
        %v4256 = vsel %vm2285, %v4087, 0
        %4258 = vmatprep.subr.mxu0 0.0
        %4259 = vmatpush1.msra.mxu0 %v4090
        %4260 = vmatprep.subr.mxu0 0.0
        %4261 = vmatpush1.msra.mxu0 %v4091
        %4262 = vmatprep.subr.mxu0 0.0
        %4263 = vmatpush1.msra.mxu0 %v4092
        %4264 = vmatprep.subr.mxu0 0.0
        %4265 = vmatpush1.msra.mxu0 %v4093
        %4266 = vmatprep.subr.mxu0 0.0
        %4267 = vmatpush1.msra.mxu0 %v4094
        %4268 = vmatprep.subr.mxu0 0.0
        %4269 = vmatpush1.msra.mxu0 %v4095
        %4270 = vmatprep.subr.mxu0 0.0
        %4271 = vmatpush1.msra.mxu0 %v4096
        %4272 = vmatprep.subr.mxu0 0.0
        %4273 = vmatpush1.msra.mxu0 %v4097
        %4274 = vmatprep.subr.mxu0 0.0
        %4275 = vmatpush1.msra.mxu0 0.0
        %4276 = vmatprep.subr.mxu0 0.0
        %4277 = vmatpush1.msra.mxu0 0.0
        %4278 = vmatprep.subr.mxu0 0.0
        %4279 = vmatpush1.msra.mxu0 0.0
        %4280 = vmatprep.subr.mxu0 0.0
        %4281 = vmatpush1.msra.mxu0 0.0
        %4282 = vmatprep.subr.mxu0 0.0
        %4283 = vmatpush1.msra.mxu0 0.0
        %4284 = vmatprep.subr.mxu0 0.0
        %4285 = vmatpush1.msra.mxu0 0.0
        %4286 = vmatprep.subr.mxu0 0.0
        %4287 = vmatpush1.msra.mxu0 0.0
        %4288 = vmatprep.subr.mxu0 0.0
        %4289 = vmatpush1.msra.mxu0 0.0
        %4290 = vmatprep.subr.mxu0 0.0
        %4291 = vmatpush1.msra.mxu0 0.0
        %4292 = vmatprep.subr.mxu0 0.0
        %4293 = vmatpush1.msra.mxu0 0.0
        %4294 = vmatprep.subr.mxu0 0.0
        %4295 = vmatpush1.msra.mxu0 0.0
        %4296 = vmatprep.subr.mxu0 0.0
        %4297 = vmatpush1.msra.mxu0 0.0
        %4298 = vmatprep.subr.mxu0 0.0
        %4299 = vmatpush1.msra.mxu0 0.0
        %4300 = vmatprep.subr.mxu0 0.0
        %4301 = vmatpush1.msra.mxu0 0.0
        %4302 = vmatprep.subr.mxu0 0.0
        %4303 = vmatpush1.msra.mxu0 0.0
        %4304 = vmatprep.subr.mxu0 0.0
        %4305 = vmatpush1.msra.mxu0 0.0
        %4306 = vmatprep.subr.mxu0 0.0
        %4307 = vmatpush1.msra.mxu0 0.0
        %4308 = vmatprep.subr.mxu0 0.0
        %4309 = vmatpush1.msra.mxu0 0.0
        %4310 = vmatprep.subr.mxu0 0.0
        %4311 = vmatpush1.msra.mxu0 0.0
        %4312 = vmatprep.subr.mxu0 0.0
        %4313 = vmatpush1.msra.mxu0 0.0
        %4314 = vmatprep.subr.mxu0 0.0
        %4315 = vmatpush1.msra.mxu0 0.0
        %4316 = vmatprep.subr.mxu0 0.0
        %4317 = vmatpush1.msra.mxu0 0.0
        %4318 = vmatprep.subr.mxu0 0.0
        %4319 = vmatpush1.msra.mxu0 0.0
        %4320 = vmatprep.subr.mxu0 0.0
        %4321 = vmatpush1.msra.mxu0 0.0
        %4322 = vmatprep.mubr.f32.mxu0 0.0
        %4323 = vmatmul.mubr.f32.gmra.mrb[0].mxu0 %v4256
        %v4324 = vpop.f32.mrb[0].mxu0
        %v4325 = vadd.f32 %v4252, %v4324
        %v4326 = vpop.f32.mrb[0].mxu0
        %4327 = vdwg.mxu0
        %s4328 = scalar_lea.vmem %s16, 16
        %v4329 = vld [vmem:[%s4328] sm:$0xff]
        %v4331 = vsel %vm4016, %v4329, 0
        %4333 = vmatprep.subr.mxu0 0.0
        %4334 = vmatpush1.msra.mxu0 %v4009
        %4335 = vmatprep.subr.mxu0 0.0
        %4336 = vmatpush1.msra.mxu0 %v4010
        %4337 = vmatprep.subr.mxu0 0.0
        %4338 = vmatpush1.msra.mxu0 %v4011
        %4339 = vmatprep.subr.mxu0 0.0
        %4340 = vmatpush1.msra.mxu0 %v4012
        %4341 = vmatprep.subr.mxu0 0.0
        %4342 = vmatpush1.msra.mxu0 %v4013
        %4343 = vmatprep.subr.mxu0 0.0
        %4344 = vmatpush1.msra.mxu0 %v4014
        %4345 = vmatprep.subr.mxu0 0.0
        %4346 = vmatpush1.msra.mxu0 0.0
        %4347 = vmatprep.subr.mxu0 0.0
        %4348 = vmatpush1.msra.mxu0 0.0
        %4349 = vmatprep.subr.mxu0 0.0
        %4350 = vmatpush1.msra.mxu0 0.0
        %4351 = vmatprep.subr.mxu0 0.0
        %4352 = vmatpush1.msra.mxu0 0.0
        %4353 = vmatprep.subr.mxu0 0.0
        %4354 = vmatpush1.msra.mxu0 0.0
        %4355 = vmatprep.subr.mxu0 0.0
        %4356 = vmatpush1.msra.mxu0 0.0
        %4357 = vmatprep.subr.mxu0 0.0
        %4358 = vmatpush1.msra.mxu0 0.0
        %4359 = vmatprep.subr.mxu0 0.0
        %4360 = vmatpush1.msra.mxu0 0.0
        %4361 = vmatprep.subr.mxu0 0.0
        %4362 = vmatpush1.msra.mxu0 0.0
        %4363 = vmatprep.subr.mxu0 0.0
        %4364 = vmatpush1.msra.mxu0 0.0
        %4365 = vmatprep.subr.mxu0 0.0
        %4366 = vmatpush1.msra.mxu0 0.0
        %4367 = vmatprep.subr.mxu0 0.0
        %4368 = vmatpush1.msra.mxu0 0.0
        %4369 = vmatprep.subr.mxu0 0.0
        %4370 = vmatpush1.msra.mxu0 0.0
        %4371 = vmatprep.subr.mxu0 0.0
        %4372 = vmatpush1.msra.mxu0 0.0
        %4373 = vmatprep.subr.mxu0 0.0
        %4374 = vmatpush1.msra.mxu0 0.0
        %4375 = vmatprep.subr.mxu0 0.0
        %4376 = vmatpush1.msra.mxu0 0.0
        %4377 = vmatprep.subr.mxu0 0.0
        %4378 = vmatpush1.msra.mxu0 0.0
        %4379 = vmatprep.subr.mxu0 0.0
        %4380 = vmatpush1.msra.mxu0 0.0
        %4381 = vmatprep.subr.mxu0 0.0
        %4382 = vmatpush1.msra.mxu0 0.0
        %4383 = vmatprep.subr.mxu0 0.0
        %4384 = vmatpush1.msra.mxu0 0.0
        %4385 = vmatprep.subr.mxu0 0.0
        %4386 = vmatpush1.msra.mxu0 0.0
        %4387 = vmatprep.subr.mxu0 0.0
        %4388 = vmatpush1.msra.mxu0 0.0
        %4389 = vmatprep.subr.mxu0 0.0
        %4390 = vmatpush1.msra.mxu0 0.0
        %4391 = vmatprep.subr.mxu0 0.0
        %4392 = vmatpush1.msra.mxu0 0.0
        %4393 = vmatprep.subr.mxu0 0.0
        %4394 = vmatpush1.msra.mxu0 0.0
        %4395 = vmatprep.subr.mxu0 0.0
        %4396 = vmatpush1.msra.mxu0 0.0
        %4397 = vmatprep.mubr.f32.mxu0 0.0
        %4398 = vmatmul.mubr.f32.gmra.mrb[0].mxu0 %v4331
        %v4399 = vpop.f32.mrb[0].mxu0
        %v4400 = vadd.f32 0.0, %v4399
        %v4401 = vpop.f32.mrb[0].mxu0
        %4402 = vdwg.mxu0
        %s4403 = scalar_lea.vmem %s17, 128
        %v4404 = vld [vmem:[%s4403] sm:$0xff]
        %v4405 = vld [vmem:[%s4403 + $0x8] sm:$0xff]
        %v4406 = vld [vmem:[%s4403 + $0x10] sm:$0xff]
        %v4407 = vld [vmem:[%s4403 + $0x18] sm:$0xff]
        %v4408 = vld [vmem:[%s4403 + $0x20] sm:$0xff]
        %v4409 = vld [vmem:[%s4403 + $0x28] sm:$0xff]
        %v4410 = vld [vmem:[%s4403 + $0x30] sm:$0xff]
        %v4411 = vld [vmem:[%s4403 + $0x38] sm:$0xff]
        %v4413 = vsel %vm2285, %v4400, 0
        %4415 = vmatprep.subr.mxu0 0.0
        %4416 = vmatpush1.msra.mxu0 %v4404
        %4417 = vmatprep.subr.mxu0 0.0
        %4418 = vmatpush1.msra.mxu0 %v4405
        %4419 = vmatprep.subr.mxu0 0.0
        %4420 = vmatpush1.msra.mxu0 %v4406
        %4421 = vmatprep.subr.mxu0 0.0
        %4422 = vmatpush1.msra.mxu0 %v4407
        %4423 = vmatprep.subr.mxu0 0.0
        %4424 = vmatpush1.msra.mxu0 %v4408
        %4425 = vmatprep.subr.mxu0 0.0
        %4426 = vmatpush1.msra.mxu0 %v4409
        %4427 = vmatprep.subr.mxu0 0.0
        %4428 = vmatpush1.msra.mxu0 %v4410
        %4429 = vmatprep.subr.mxu0 0.0
        %4430 = vmatpush1.msra.mxu0 %v4411
        %4431 = vmatprep.subr.mxu0 0.0
        %4432 = vmatpush1.msra.mxu0 0.0
        %4433 = vmatprep.subr.mxu0 0.0
        %4434 = vmatpush1.msra.mxu0 0.0
        %4435 = vmatprep.subr.mxu0 0.0
        %4436 = vmatpush1.msra.mxu0 0.0
        %4437 = vmatprep.subr.mxu0 0.0
        %4438 = vmatpush1.msra.mxu0 0.0
        %4439 = vmatprep.subr.mxu0 0.0
        %4440 = vmatpush1.msra.mxu0 0.0
        %4441 = vmatprep.subr.mxu0 0.0
        %4442 = vmatpush1.msra.mxu0 0.0
        %4443 = vmatprep.subr.mxu0 0.0
        %4444 = vmatpush1.msra.mxu0 0.0
        %4445 = vmatprep.subr.mxu0 0.0
        %4446 = vmatpush1.msra.mxu0 0.0
        %4447 = vmatprep.subr.mxu0 0.0
        %4448 = vmatpush1.msra.mxu0 0.0
        %4449 = vmatprep.subr.mxu0 0.0
        %4450 = vmatpush1.msra.mxu0 0.0
        %4451 = vmatprep.subr.mxu0 0.0
        %4452 = vmatpush1.msra.mxu0 0.0
        %4453 = vmatprep.subr.mxu0 0.0
        %4454 = vmatpush1.msra.mxu0 0.0
        %4455 = vmatprep.subr.mxu0 0.0
        %4456 = vmatpush1.msra.mxu0 0.0
        %4457 = vmatprep.subr.mxu0 0.0
        %4458 = vmatpush1.msra.mxu0 0.0
        %4459 = vmatprep.subr.mxu0 0.0
        %4460 = vmatpush1.msra.mxu0 0.0
        %4461 = vmatprep.subr.mxu0 0.0
        %4462 = vmatpush1.msra.mxu0 0.0
        %4463 = vmatprep.subr.mxu0 0.0
        %4464 = vmatpush1.msra.mxu0 0.0
        %4465 = vmatprep.subr.mxu0 0.0
        %4466 = vmatpush1.msra.mxu0 0.0
        %4467 = vmatprep.subr.mxu0 0.0
        %4468 = vmatpush1.msra.mxu0 0.0
        %4469 = vmatprep.subr.mxu0 0.0
        %4470 = vmatpush1.msra.mxu0 0.0
        %4471 = vmatprep.subr.mxu0 0.0
        %4472 = vmatpush1.msra.mxu0 0.0
        %4473 = vmatprep.subr.mxu0 0.0
        %4474 = vmatpush1.msra.mxu0 0.0
        %4475 = vmatprep.subr.mxu0 0.0
        %4476 = vmatpush1.msra.mxu0 0.0
        %4477 = vmatprep.subr.mxu0 0.0
        %4478 = vmatpush1.msra.mxu0 0.0
        %4479 = vmatprep.mubr.f32.mxu0 0.0
        %4480 = vmatmul.mubr.f32.gmra.mrb[0].mxu0 %v4413
        %v4481 = vpop.f32.mrb[0].mxu0
        %v4482 = vadd.f32 0.0, %v4481
        %v4483 = vpop.f32.mrb[0].mxu0
        %4484 = vdwg.mxu0
        %v4485 = vadd.f32 %v4325, %v4482
        %v4486 = vld [vmem:[%s18] sm:$0x1]
        %v4488 = vlaneseq
        %v4489 = vshrl.u32 %v4488, 7
        %v4490 = vsub.s32 0, %v4489
        %v4491 = vrot.slane %v4486, %v4490
        %v4493 = vadd.f32 %v4485, %v4491
        %v4494 = vmax.f32 %v4493, 0.0
        %v4495 = vld [vmem:[%s834] sm:$0xff]
        %v4496 = vld [vmem:[%s19] sm:$0x7]
        %v4497 = vld [vmem:[%s20] sm:$0x1]
        %v4499 = vlaneseq
        %v4500 = vshrl.u32 %v4499, 7
        %v4501 = vsub.s32 0, %v4500
        %v4502 = vrot.slane %v4497, %v4501
        %vm4504 = vcmask 23552
        %v4506 = vsel %vm4504, %v4495, 0
        %vm4508 = vcmask 1042432
        %v4510 = vsel %vm4508, %v4496, 0
        %4512 = vmatprep.subr.mxu0 0.0
        %4513 = vmatpush1.msra.mxu0 %v4510
        %4514 = vmatprep.subr.mxu0 0.0
        %4515 = vmatpush1.msra.mxu0 0.0
        %4516 = vmatprep.subr.mxu0 0.0
        %4517 = vmatpush1.msra.mxu0 0.0
        %4518 = vmatprep.subr.mxu0 0.0
        %4519 = vmatpush1.msra.mxu0 0.0
        %4520 = vmatprep.subr.mxu0 0.0
        %4521 = vmatpush1.msra.mxu0 0.0
        %4522 = vmatprep.subr.mxu0 0.0
        %4523 = vmatpush1.msra.mxu0 0.0
        %4524 = vmatprep.subr.mxu0 0.0
        %4525 = vmatpush1.msra.mxu0 0.0
        %4526 = vmatprep.subr.mxu0 0.0
        %4527 = vmatpush1.msra.mxu0 0.0
        %4528 = vmatprep.subr.mxu0 0.0
        %4529 = vmatpush1.msra.mxu0 0.0
        %4530 = vmatprep.subr.mxu0 0.0
        %4531 = vmatpush1.msra.mxu0 0.0
        %4532 = vmatprep.subr.mxu0 0.0
        %4533 = vmatpush1.msra.mxu0 0.0
        %4534 = vmatprep.subr.mxu0 0.0
        %4535 = vmatpush1.msra.mxu0 0.0
        %4536 = vmatprep.subr.mxu0 0.0
        %4537 = vmatpush1.msra.mxu0 0.0
        %4538 = vmatprep.subr.mxu0 0.0
        %4539 = vmatpush1.msra.mxu0 0.0
        %4540 = vmatprep.subr.mxu0 0.0
        %4541 = vmatpush1.msra.mxu0 0.0
        %4542 = vmatprep.subr.mxu0 0.0
        %4543 = vmatpush1.msra.mxu0 0.0
        %4544 = vmatprep.subr.mxu0 0.0
        %4545 = vmatpush1.msra.mxu0 0.0
        %4546 = vmatprep.subr.mxu0 0.0
        %4547 = vmatpush1.msra.mxu0 0.0
        %4548 = vmatprep.subr.mxu0 0.0
        %4549 = vmatpush1.msra.mxu0 0.0
        %4550 = vmatprep.subr.mxu0 0.0
        %4551 = vmatpush1.msra.mxu0 0.0
        %4552 = vmatprep.subr.mxu0 0.0
        %4553 = vmatpush1.msra.mxu0 0.0
        %4554 = vmatprep.subr.mxu0 0.0
        %4555 = vmatpush1.msra.mxu0 0.0
        %4556 = vmatprep.subr.mxu0 0.0
        %4557 = vmatpush1.msra.mxu0 0.0
        %4558 = vmatprep.subr.mxu0 0.0
        %4559 = vmatpush1.msra.mxu0 0.0
        %4560 = vmatprep.subr.mxu0 0.0
        %4561 = vmatpush1.msra.mxu0 0.0
        %4562 = vmatprep.subr.mxu0 0.0
        %4563 = vmatpush1.msra.mxu0 0.0
        %4564 = vmatprep.subr.mxu0 0.0
        %4565 = vmatpush1.msra.mxu0 0.0
        %4566 = vmatprep.subr.mxu0 0.0
        %4567 = vmatpush1.msra.mxu0 0.0
        %4568 = vmatprep.subr.mxu0 0.0
        %4569 = vmatpush1.msra.mxu0 0.0
        %4570 = vmatprep.subr.mxu0 0.0
        %4571 = vmatpush1.msra.mxu0 0.0
        %4572 = vmatprep.subr.mxu0 0.0
        %4573 = vmatpush1.msra.mxu0 0.0
        %4574 = vmatprep.subr.mxu0 0.0
        %4575 = vmatpush1.msra.mxu0 0.0
        %4576 = vmatprep.mubr.f32.mxu0 0.0
        %4577 = vmatmul.mubr.f32.gmra.mrb[0].mxu0 %v4506
        %v4578 = vpop.f32.mrb[0].mxu0
        %v4579 = vadd.f32 %v4502, %v4578
        %v4580 = vpop.f32.mrb[0].mxu0
        %4581 = vdwg.mxu0
        %v4582 = vmax.f32 %v4579, 0.0
        %v4583 = vld [vmem:[%s21] sm:$0xff]
        %v4584 = vld [vmem:[%s21 + $0x8] sm:$0xff]
        %v4585 = vld [vmem:[%s21 + $0x10] sm:$0xff]
        %v4586 = vld [vmem:[%s21 + $0x18] sm:$0xff]
        %v4587 = vld [vmem:[%s21 + $0x20] sm:$0xff]
        %v4588 = vld [vmem:[%s21 + $0x28] sm:$0xff]
        %v4589 = vld [vmem:[%s21 + $0x30] sm:$0xff]
        %v4590 = vld [vmem:[%s21 + $0x38] sm:$0xff]
        %v4591 = vld [vmem:[%s21 + $0x40] sm:$0xff]
        %v4592 = vld [vmem:[%s21 + $0x48] sm:$0xff]
        %v4593 = vld [vmem:[%s21 + $0x50] sm:$0xff]
        %v4594 = vld [vmem:[%s21 + $0x58] sm:$0xff]
        %v4595 = vld [vmem:[%s21 + $0x60] sm:$0xff]
        %v4596 = vld [vmem:[%s21 + $0x68] sm:$0xff]
        %v4597 = vld [vmem:[%s21 + $0x70] sm:$0xff]
        %v4598 = vld [vmem:[%s21 + $0x78] sm:$0xff]
        %v4599 = vld [vmem:[%s21 + $0x80] sm:$0xff]
        %v4600 = vld [vmem:[%s21 + $0x88] sm:$0xff]
        %v4601 = vld [vmem:[%s21 + $0x90] sm:$0xff]
        %v4602 = vld [vmem:[%s21 + $0x98] sm:$0xff]
        %v4603 = vld [vmem:[%s21 + $0xa0] sm:$0xff]
        %v4604 = vld [vmem:[%s21 + $0xa8] sm:$0xff]
        %v4605 = vld [vmem:[%s21 + $0xb0] sm:$0xff]
        %v4606 = vld [vmem:[%s21 + $0xb8] sm:$0xff]
        %v4607 = vld [vmem:[%s21 + $0xc0] sm:$0xff]
        %v4608 = vld [vmem:[%s21 + $0xc8] sm:$0xff]
        %v4609 = vld [vmem:[%s21 + $0xd0] sm:$0xff]
        %v4610 = vld [vmem:[%s21 + $0xd8] sm:$0xff]
        %v4611 = vld [vmem:[%s21 + $0xe0] sm:$0xff]
        %v4612 = vld [vmem:[%s21 + $0xe8] sm:$0xff]
        %v4613 = vld [vmem:[%s21 + $0xf0] sm:$0xff]
        %v4614 = vld [vmem:[%s21 + $0xf8] sm:$0xff]
        %v4615 = vld [vmem:[%s22] sm:$0xff]
        %v4616 = vld [vmem:[%s22 + $0x8] sm:$0xff]
        %v4617 = vld [vmem:[%s22 + $0x10] sm:$0xff]
        %v4618 = vld [vmem:[%s22 + $0x18] sm:$0xff]
        %v4619 = vld [vmem:[%s22 + $0x20] sm:$0xff]
        %v4620 = vld [vmem:[%s22 + $0x28] sm:$0xff]
        %v4621 = vld [vmem:[%s22 + $0x30] sm:$0xff]
        %v4622 = vld [vmem:[%s22 + $0x38] sm:$0xff]
        %vm4623 = vcmask 261120
        %v4625 = vsel %vm4623, %v4582, 0
        %4627 = vmatprep.subr.mxu0 %v4616
        %4628 = vmatpush1.msra.mxu0 %v4615
        %4629 = vmatprep.subr.mxu0 %v4618
        %4630 = vmatpush1.msra.mxu0 %v4617
        %4631 = vmatprep.subr.mxu0 %v4620
        %4632 = vmatpush1.msra.mxu0 %v4619
        %4633 = vmatprep.subr.mxu0 %v4622
        %4634 = vmatpush1.msra.mxu0 %v4621
        %4635 = vmatprep.subr.mxu0 0.0
        %4636 = vmatpush1.msra.mxu0 0.0
        %4637 = vmatprep.subr.mxu0 0.0
        %4638 = vmatpush1.msra.mxu0 0.0
        %4639 = vmatprep.subr.mxu0 0.0
        %4640 = vmatpush1.msra.mxu0 0.0
        %4641 = vmatprep.subr.mxu0 0.0
        %4642 = vmatpush1.msra.mxu0 0.0
        %4643 = vmatprep.subr.mxu0 0.0
        %4644 = vmatpush1.msra.mxu0 0.0
        %4645 = vmatprep.subr.mxu0 0.0
        %4646 = vmatpush1.msra.mxu0 0.0
        %4647 = vmatprep.subr.mxu0 0.0
        %4648 = vmatpush1.msra.mxu0 0.0
        %4649 = vmatprep.subr.mxu0 0.0
        %4650 = vmatpush1.msra.mxu0 0.0
        %4651 = vmatprep.subr.mxu0 0.0
        %4652 = vmatpush1.msra.mxu0 0.0
        %4653 = vmatprep.subr.mxu0 0.0
        %4654 = vmatpush1.msra.mxu0 0.0
        %4655 = vmatprep.subr.mxu0 0.0
        %4656 = vmatpush1.msra.mxu0 0.0
        %4657 = vmatprep.subr.mxu0 0.0
        %4658 = vmatpush1.msra.mxu0 0.0
        %4659 = vmatprep.subr.mxu0 0.0
        %4660 = vmatpush1.msra.mxu0 0.0
        %4661 = vmatprep.subr.mxu0 0.0
        %4662 = vmatpush1.msra.mxu0 0.0
        %4663 = vmatprep.subr.mxu0 0.0
        %4664 = vmatpush1.msra.mxu0 0.0
        %4665 = vmatprep.subr.mxu0 0.0
        %4666 = vmatpush1.msra.mxu0 0.0
        %4667 = vmatprep.subr.mxu0 0.0
        %4668 = vmatpush1.msra.mxu0 0.0
        %4669 = vmatprep.subr.mxu0 0.0
        %4670 = vmatpush1.msra.mxu0 0.0
        %4671 = vmatprep.subr.mxu0 0.0
        %4672 = vmatpush1.msra.mxu0 0.0
        %4673 = vmatprep.subr.mxu0 0.0
        %4674 = vmatpush1.msra.mxu0 0.0
        %4675 = vmatprep.subr.mxu0 0.0
        %4676 = vmatpush1.msra.mxu0 0.0
        %4677 = vmatprep.subr.mxu0 0.0
        %4678 = vmatpush1.msra.mxu0 0.0
        %4679 = vmatprep.subr.mxu0 0.0
        %4680 = vmatpush1.msra.mxu0 0.0
        %4681 = vmatprep.subr.mxu0 0.0
        %4682 = vmatpush1.msra.mxu0 0.0
        %4683 = vmatprep.subr.mxu0 0.0
        %4684 = vmatpush1.msra.mxu0 0.0
        %4685 = vmatprep.subr.mxu0 0.0
        %4686 = vmatpush1.msra.mxu0 0.0
        %4687 = vmatprep.subr.mxu0 0.0
        %4688 = vmatpush1.msra.mxu0 0.0
        %4689 = vmatprep.subr.mxu0 0.0
        %4690 = vmatpush1.msra.mxu0 0.0
        %4691 = vmatprep.mubr.f32.mxu0 0.0
        %4692 = vmatmul.mubr.f32.gmra.mrb[0].mxu0 %v4625
        %v4693 = vpop.f32.mrb[0].mxu0
        %v4694 = vadd.f32 0.0, %v4693
        %v4695 = vpop.f32.mrb[0].mxu0
        %v4696 = vadd.f32 0.0, %v4695
        %4697 = vdwg.mxu0
        %4698 = vmatprep.subr.mxu0 %v4584
        %4699 = vmatpush1.msra.mxu0 %v4583
        %4700 = vmatprep.subr.mxu0 %v4586
        %4701 = vmatpush1.msra.mxu0 %v4585
        %4702 = vmatprep.subr.mxu0 %v4588
        %4703 = vmatpush1.msra.mxu0 %v4587
        %4704 = vmatprep.subr.mxu0 %v4590
        %4705 = vmatpush1.msra.mxu0 %v4589
        %4706 = vmatprep.subr.mxu0 %v4592
        %4707 = vmatpush1.msra.mxu0 %v4591
        %4708 = vmatprep.subr.mxu0 %v4594
        %4709 = vmatpush1.msra.mxu0 %v4593
        %4710 = vmatprep.subr.mxu0 %v4596
        %4711 = vmatpush1.msra.mxu0 %v4595
        %4712 = vmatprep.subr.mxu0 %v4598
        %4713 = vmatpush1.msra.mxu0 %v4597
        %4714 = vmatprep.subr.mxu0 %v4600
        %4715 = vmatpush1.msra.mxu0 %v4599
        %4716 = vmatprep.subr.mxu0 %v4602
        %4717 = vmatpush1.msra.mxu0 %v4601
        %4718 = vmatprep.subr.mxu0 %v4604
        %4719 = vmatpush1.msra.mxu0 %v4603
        %4720 = vmatprep.subr.mxu0 %v4606
        %4721 = vmatpush1.msra.mxu0 %v4605
        %4722 = vmatprep.subr.mxu0 %v4608
        %4723 = vmatpush1.msra.mxu0 %v4607
        %4724 = vmatprep.subr.mxu0 %v4610
        %4725 = vmatpush1.msra.mxu0 %v4609
        %4726 = vmatprep.subr.mxu0 %v4612
        %4727 = vmatpush1.msra.mxu0 %v4611
        %4728 = vmatprep.subr.mxu0 %v4614
        %4729 = vmatpush1.msra.mxu0 %v4613
        %4730 = vmatprep.subr.mxu0 0.0
        %4731 = vmatpush1.msra.mxu0 0.0
        %4732 = vmatprep.subr.mxu0 0.0
        %4733 = vmatpush1.msra.mxu0 0.0
        %4734 = vmatprep.subr.mxu0 0.0
        %4735 = vmatpush1.msra.mxu0 0.0
        %4736 = vmatprep.subr.mxu0 0.0
        %4737 = vmatpush1.msra.mxu0 0.0
        %4738 = vmatprep.subr.mxu0 0.0
        %4739 = vmatpush1.msra.mxu0 0.0
        %4740 = vmatprep.subr.mxu0 0.0
        %4741 = vmatpush1.msra.mxu0 0.0
        %4742 = vmatprep.subr.mxu0 0.0
        %4743 = vmatpush1.msra.mxu0 0.0
        %4744 = vmatprep.subr.mxu0 0.0
        %4745 = vmatpush1.msra.mxu0 0.0
        %4746 = vmatprep.subr.mxu0 0.0
        %4747 = vmatpush1.msra.mxu0 0.0
        %4748 = vmatprep.subr.mxu0 0.0
        %4749 = vmatpush1.msra.mxu0 0.0
        %4750 = vmatprep.subr.mxu0 0.0
        %4751 = vmatpush1.msra.mxu0 0.0
        %4752 = vmatprep.subr.mxu0 0.0
        %4753 = vmatpush1.msra.mxu0 0.0
        %4754 = vmatprep.subr.mxu0 0.0
        %4755 = vmatpush1.msra.mxu0 0.0
        %4756 = vmatprep.subr.mxu0 0.0
        %4757 = vmatpush1.msra.mxu0 0.0
        %4758 = vmatprep.subr.mxu0 0.0
        %4759 = vmatpush1.msra.mxu0 0.0
        %4760 = vmatprep.subr.mxu0 0.0
        %4761 = vmatpush1.msra.mxu0 0.0
        %4762 = vmatprep.mubr.f32.mxu0 0.0
        %4763 = vmatmul.mubr.f32.gmra.mrb[0].mxu0 %v4494
        %v4764 = vpop.f32.mrb[0].mxu0
        %v4765 = vadd.f32 %v4694, %v4764
        %v4766 = vpop.f32.mrb[0].mxu0
        %v4767 = vadd.f32 %v4696, %v4766
        %4768 = vdwg.mxu0
        %v4769 = vld [vmem:[%s23] sm:$0x3]
        %v4771 = vlaneseq
        %v4772 = vshrl.u32 %v4771, 7
        %v4773 = vsub.s32 0, %v4772
        %v4774 = vrot.slane %v4769, %v4773
        %v4775 = vlaneseq
        %v4776 = vshrl.u32 %v4775, 7
        %v4777 = vsub.s32 1, %v4776
        %v4778 = vrot.slane %v4769, %v4777
        %v4781 = vadd.f32 %v4765, %v4774
        %v4782 = vadd.f32 %v4767, %v4778
        %v4783 = vmax.f32 %v4781, 0.0
        %v4784 = vmax.f32 %v4782, 0.0
        %v4785 = vld [vmem:[%s24] sm:$0xff]
        %v4786 = vld [vmem:[%s24 + $0x8] sm:$0xff]
        %v4787 = vld [vmem:[%s24 + $0x10] sm:$0xff]
        %v4788 = vld [vmem:[%s24 + $0x18] sm:$0xff]
        %v4789 = vld [vmem:[%s24 + $0x20] sm:$0xff]
        %v4790 = vld [vmem:[%s24 + $0x28] sm:$0xff]
        %v4791 = vld [vmem:[%s24 + $0x30] sm:$0xff]
        %v4792 = vld [vmem:[%s24 + $0x38] sm:$0xff]
        %v4793 = vld [vmem:[%s24 + $0x40] sm:$0xff]
        %v4794 = vld [vmem:[%s24 + $0x48] sm:$0xff]
        %v4795 = vld [vmem:[%s24 + $0x50] sm:$0xff]
        %v4796 = vld [vmem:[%s24 + $0x58] sm:$0xff]
        %v4797 = vld [vmem:[%s24 + $0x60] sm:$0xff]
        %v4798 = vld [vmem:[%s24 + $0x68] sm:$0xff]
        %v4799 = vld [vmem:[%s24 + $0x70] sm:$0xff]
        %v4800 = vld [vmem:[%s24 + $0x78] sm:$0xff]
        %v4801 = vld [vmem:[%s24 + $0x80] sm:$0xff]
        %v4802 = vld [vmem:[%s24 + $0x88] sm:$0xff]
        %v4803 = vld [vmem:[%s24 + $0x90] sm:$0xff]
        %v4804 = vld [vmem:[%s24 + $0x98] sm:$0xff]
        %v4805 = vld [vmem:[%s24 + $0xa0] sm:$0xff]
        %v4806 = vld [vmem:[%s24 + $0xa8] sm:$0xff]
        %v4807 = vld [vmem:[%s24 + $0xb0] sm:$0xff]
        %v4808 = vld [vmem:[%s24 + $0xb8] sm:$0xff]
        %v4809 = vld [vmem:[%s24 + $0xc0] sm:$0xff]
        %v4810 = vld [vmem:[%s24 + $0xc8] sm:$0xff]
        %v4811 = vld [vmem:[%s24 + $0xd0] sm:$0xff]
        %v4812 = vld [vmem:[%s24 + $0xd8] sm:$0xff]
        %v4813 = vld [vmem:[%s24 + $0xe0] sm:$0xff]
        %v4814 = vld [vmem:[%s24 + $0xe8] sm:$0xff]
        %v4815 = vld [vmem:[%s24 + $0xf0] sm:$0xff]
        %v4816 = vld [vmem:[%s24 + $0xf8] sm:$0xff]
        %v4817 = vld [vmem:[%s25] sm:$0x1]
        %v4819 = vlaneseq
        %v4820 = vshrl.u32 %v4819, 7
        %v4821 = vsub.s32 0, %v4820
        %v4822 = vrot.slane %v4817, %v4821
        %4824 = vmatprep.subr.mxu0 0.0
        %4825 = vmatpush1.msra.mxu0 %v4785
        %4826 = vmatprep.subr.mxu0 0.0
        %4827 = vmatpush1.msra.mxu0 %v4786
        %4828 = vmatprep.subr.mxu0 0.0
        %4829 = vmatpush1.msra.mxu0 %v4787
        %4830 = vmatprep.subr.mxu0 0.0
        %4831 = vmatpush1.msra.mxu0 %v4788
        %4832 = vmatprep.subr.mxu0 0.0
        %4833 = vmatpush1.msra.mxu0 %v4789
        %4834 = vmatprep.subr.mxu0 0.0
        %4835 = vmatpush1.msra.mxu0 %v4790
        %4836 = vmatprep.subr.mxu0 0.0
        %4837 = vmatpush1.msra.mxu0 %v4791
        %4838 = vmatprep.subr.mxu0 0.0
        %4839 = vmatpush1.msra.mxu0 %v4792
        %4840 = vmatprep.subr.mxu0 0.0
        %4841 = vmatpush1.msra.mxu0 %v4793
        %4842 = vmatprep.subr.mxu0 0.0
        %4843 = vmatpush1.msra.mxu0 %v4794
        %4844 = vmatprep.subr.mxu0 0.0
        %4845 = vmatpush1.msra.mxu0 %v4795
        %4846 = vmatprep.subr.mxu0 0.0
        %4847 = vmatpush1.msra.mxu0 %v4796
        %4848 = vmatprep.subr.mxu0 0.0
        %4849 = vmatpush1.msra.mxu0 %v4797
        %4850 = vmatprep.subr.mxu0 0.0
        %4851 = vmatpush1.msra.mxu0 %v4798
        %4852 = vmatprep.subr.mxu0 0.0
        %4853 = vmatpush1.msra.mxu0 %v4799
        %4854 = vmatprep.subr.mxu0 0.0
        %4855 = vmatpush1.msra.mxu0 %v4800
        %4856 = vmatprep.subr.mxu0 0.0
        %4857 = vmatpush1.msra.mxu0 %v4801
        %4858 = vmatprep.subr.mxu0 0.0
        %4859 = vmatpush1.msra.mxu0 %v4802
        %4860 = vmatprep.subr.mxu0 0.0
        %4861 = vmatpush1.msra.mxu0 %v4803
        %4862 = vmatprep.subr.mxu0 0.0
        %4863 = vmatpush1.msra.mxu0 %v4804
        %4864 = vmatprep.subr.mxu0 0.0
        %4865 = vmatpush1.msra.mxu0 %v4805
        %4866 = vmatprep.subr.mxu0 0.0
        %4867 = vmatpush1.msra.mxu0 %v4806
        %4868 = vmatprep.subr.mxu0 0.0
        %4869 = vmatpush1.msra.mxu0 %v4807
        %4870 = vmatprep.subr.mxu0 0.0
        %4871 = vmatpush1.msra.mxu0 %v4808
        %4872 = vmatprep.subr.mxu0 0.0
        %4873 = vmatpush1.msra.mxu0 %v4809
        %4874 = vmatprep.subr.mxu0 0.0
        %4875 = vmatpush1.msra.mxu0 %v4810
        %4876 = vmatprep.subr.mxu0 0.0
        %4877 = vmatpush1.msra.mxu0 %v4811
        %4878 = vmatprep.subr.mxu0 0.0
        %4879 = vmatpush1.msra.mxu0 %v4812
        %4880 = vmatprep.subr.mxu0 0.0
        %4881 = vmatpush1.msra.mxu0 %v4813
        %4882 = vmatprep.subr.mxu0 0.0
        %4883 = vmatpush1.msra.mxu0 %v4814
        %4884 = vmatprep.subr.mxu0 0.0
        %4885 = vmatpush1.msra.mxu0 %v4815
        %4886 = vmatprep.subr.mxu0 0.0
        %4887 = vmatpush1.msra.mxu0 %v4816
        %4888 = vmatprep.mubr.f32.mxu0 %v4784
        %4889 = vmatmul.mubr.f32.gmra.mrb[0].mxu0 %v4783
        %v4890 = vpop.f32.mrb[0].mxu0
        %v4891 = vadd.f32 %v4822, %v4890
        %v4892 = vpop.f32.mrb[0].mxu0
        %4893 = vdwg.mxu0
        %4894 = vst [vmem:[%s838] sm:$0xff] %v4891
        %p4895 = scmp.lt.s32.totalorder %s39, 1
        %s4896 = scalar_select %p4895, %s39, 1
        %s4897 = smul.addr %s4896, 8
        %s4898 = scalar_lea.vmem %s26, %s4897
        // Predicated region
        $region133: #{dqn_forward.1} parent=123 // pred_check
          %p4899 = pneg %p613
        $region134: #{dqn_forward.1} parent=123 // pred_check_branch
          %4901 = sbr.rel (%p4899) target = $region136
        $region135: #{dqn_forward.1} parent=123 // pred_region
          _
        $region136: #{dqn_forward.1} parent=123 // pred_fallthru
          _
      $region124: #{dqn_forward.1} parent=5 // pred_fallthru
        _
      %p4902 = scmp.le.s32.totalorder 2, %s34
      // Predicated region
      $region137: #{dqn_forward.1} parent=5 // pred_check
        %p4903 = pneg %p4902
      $region138: #{dqn_forward.1} parent=5 // pred_check_branch
        %4905 = sbr.rel (%p4903) target = $region140
      $region139: #{dqn_forward.1} parent=5 // pred_region
        %s4906 = ssub.s32 %s34, 2
        // Predicated region
        $region141: #{dqn_forward.1} parent=139 // pred_check
          %p4907 = pneg %p619
        $region142: #{dqn_forward.1} parent=139 // pred_check_branch
          %4909 = sbr.rel (%p4907) target = $region144
        $region143: #{dqn_forward.1} parent=139 // pred_region
          %p4910 = scmp.lt.s32.totalorder %s40, 1
          %s4911 = scalar_select %p4910, %s40, 1
          %s4912 = smul.addr %s4911, 8
          %s4913 = scalar_lea.vmem %s26, %s4912
        $region144: #{dqn_forward.1} parent=139 // pred_fallthru
          _
      $region140: #{dqn_forward.1} parent=5 // pred_fallthru
        _
    $region6: #{dqn_forward.1} parent=1 // loop_footer
      %s38 = sadd.s32 1, %s34
    $region7: #{dqn_forward.1} parent=1 // loop_footer_branch
      %33 = sbr.rel target = $region3
    $region8: #{dqn_forward.1} parent=1 // loop_exit
      _
    %4914 = vsyncpa [#allocation3], 1
    %s4915 = scalar_lea.sflag [#allocation3], 1
    %4916 = vsyncpa %s4915, 1
    %4917 = vsyncpa [#allocation5], 1

</llo_original>
